<compile_context>
chip_gen: v6e
topology: v6e:2x2x1
jax: 0.10.0
libtpu: 0.0.40
codegen_flags: <defaults>
</compile_context>

<pallas_src>
import jax
import jax.numpy as jnp
from jax.experimental import pallas as pl
from jax.experimental.pallas import tpu as pltpu


# --------------------------- fused GRU + head kernel --------------------------
def _fused_gru_head_kernel(x_ref, h0_ref, *args):
    """args = per-layer (w_r, w_z, w_n, u_r, u_z, u_n, b_r, b_z, b_in, b_hn)
    for every layer, then fc_w (H,O), fc_b (1,O), then outputs
    logits_ref (B,O), hT_ref (L,B,H)."""
    L = h0_ref.shape[0]
    T, B, _ = x_ref.shape
    H = h0_ref.shape[-1]

    layer_refs = args[: 10 * L]
    fc_w_ref, fc_b_ref, logits_ref, hT_ref = args[10 * L:]

    # Current layer input, flattened to (T*B, D_l); starts as x.
    seq2d = x_ref[...].astype(jnp.float32).reshape(T * B, x_ref.shape[-1])

    h = None
    for l in range(L):
        (w_r, w_z, w_n, u_r, u_z, u_n,
         b_r, b_z, b_in, b_hn) = layer_refs[10 * l: 10 * (l + 1)]

        # Time-parallel input projections: one matmul per gate over all T*B rows.
        gi_r = jnp.dot(seq2d, w_r[...], preferred_element_type=jnp.float32) + b_r[...]
        gi_z = jnp.dot(seq2d, w_z[...], preferred_element_type=jnp.float32) + b_z[...]
        gi_n = jnp.dot(seq2d, w_n[...], preferred_element_type=jnp.float32) + b_in[...]

        # Hoist recurrent weights / bias out of the time loop.
        u_r_v, u_z_v, u_n_v = u_r[...], u_z[...], u_n[...]
        b_hn_v = b_hn[...]

        h = h0_ref[l].astype(jnp.float32)          # (B, H)
        last_layer = (l == L - 1)
        outs = []
        for t in range(T):                          # fully unrolled (T static, small)
            gr = gi_r[t * B:(t + 1) * B]            # sublane-aligned static slices
            gz = gi_z[t * B:(t + 1) * B]
            gn = gi_n[t * B:(t + 1) * B]
            h_r = jnp.dot(h, u_r_v, preferred_element_type=jnp.float32)
            h_z = jnp.dot(h, u_z_v, preferred_element_type=jnp.float32)
            h_n = jnp.dot(h, u_n_v, preferred_element_type=jnp.float32) + b_hn_v
            r = jax.nn.sigmoid(gr + h_r)
            z = jax.nn.sigmoid(gz + h_z)
            n = jnp.tanh(gn + r * h_n)
            h = (1.0 - z) * n + z * h
            if not last_layer:
                outs.append(h)

        hT_ref[l] = h.astype(hT_ref.dtype)          # written once per layer
        if not last_layer:
            # Output sequence stays in registers/VMEM; never touches HBM.
            seq2d = jnp.concatenate(outs, axis=0)   # (T*B, H)

    # Head: ReLU -> Linear -> LogSoftmax(dim=1) on out[-1] (== final h of last layer).
    x_last = jnp.maximum(h, 0.0)
    y = jnp.dot(x_last, fc_w_ref[...], preferred_element_type=jnp.float32) + fc_b_ref[...]
    m = jnp.max(y, axis=1, keepdims=True)
    s = y - m
    lse = jnp.log(jnp.sum(jnp.exp(s), axis=1, keepdims=True))
    logits_ref[...] = (s - lse).astype(logits_ref.dtype)


# ----------------------------- full module forward ---------------------------
def gru_net_forward(x, h, params):
    """GRUnetWithEmbeddings.forward: returns (logprobs (B,O), h (L,B,H))."""
    T, B, D = x.shape
    L = len(params["w_ih"])
    H = params["w_hh"][0].shape[1]
    O = params["fc_w"].shape[0]

    # Pad batch to the sublane count so vector ops / MXU passes are unmasked.
    B_pad = max(8, ((B + 7) // 8) * 8)
    x_p = jnp.pad(x.astype(jnp.float32), ((0, 0), (0, B_pad - B), (0, 0)))
    h_p = jnp.pad(h.astype(jnp.float32), ((0, 0), (0, B_pad - B), (0, 0)))

    # Pre-split / pre-transpose weights per gate (PyTorch gate order r, z, n),
    # pre-merge biases for the r and z gates.
    flat_w = []
    for l in range(L):
        w_ih = jnp.asarray(params["w_ih"][l], jnp.float32)   # (3H, D_l)
        w_hh = jnp.asarray(params["w_hh"][l], jnp.float32)   # (3H, H)
        b_ih = jnp.asarray(params["b_ih"][l], jnp.float32)   # (3H,)
        b_hh = jnp.asarray(params["b_hh"][l], jnp.float32)   # (3H,)
        w_r, w_z, w_n = w_ih[:H].T, w_ih[H:2 * H].T, w_ih[2 * H:].T    # (D_l, H)
        u_r, u_z, u_n = w_hh[:H].T, w_hh[H:2 * H].T, w_hh[2 * H:].T    # (H, H)
        b_r = (b_ih[:H] + b_hh[:H]).reshape(1, H)
        b_z = (b_ih[H:2 * H] + b_hh[H:2 * H]).reshape(1, H)
        b_in = b_ih[2 * H:].reshape(1, H)
        b_hn = b_hh[2 * H:].reshape(1, H)
        flat_w += [w_r, w_z, w_n, u_r, u_z, u_n, b_r, b_z, b_in, b_hn]

    fc_w_t = jnp.asarray(params["fc_w"], jnp.float32).T      # (H, O)
    fc_b = jnp.asarray(params["fc_b"], jnp.float32).reshape(1, O)

    n_in = 2 + 10 * L + 2
    vmem_spec = pl.BlockSpec(memory_space=pltpu.MemorySpace.VMEM)

    logits_p, hT_p = pl.pallas_call(
        _fused_gru_head_kernel,
        out_shape=(jax.ShapeDtypeStruct((B_pad, O), jnp.float32),
                   jax.ShapeDtypeStruct((L, B_pad, H), jnp.float32)),
        in_specs=[vmem_spec] * n_in,
        out_specs=(vmem_spec, vmem_spec),
    )(x_p, h_p, *flat_w, fc_w_t, fc_b)

    return logits_p[:B], hT_p[:, :B]


# ------------------------------ pure-JAX reference ---------------------------
def _ref_forward(x, h, params):
    num_layers = len(params["w_ih"])
    layer_in = x
    h_finals = []
    for l in range(num_layers):
        w_ih, w_hh = params["w_ih"][l], params["w_hh"][l]
        b_ih, b_hh = params["b_ih"][l], params["b_hh"][l]
        H = w_hh.shape[1]

        def step(h_prev, x_t):
            gi = x_t @ w_ih.T + b_ih
            gh = h_prev @ w_hh.T + b_hh
            r = jax.nn.sigmoid(gi[:, :H] + gh[:, :H])
            z = jax.nn.sigmoid(gi[:, H:2 * H] + gh[:, H:2 * H])
            n = jnp.tanh(gi[:, 2 * H:] + r * gh[:, 2 * H:])
            h_new = (1.0 - z) * n + z * h_prev
            return h_new, h_new

        h_T, outs = jax.lax.scan(step, h[l], layer_in)
        h_finals.append(h_T)
        layer_in = outs
    y = jnp.maximum(layer_in[-1], 0.0) @ params["fc_w"].T + params["fc_b"]
    return jax.nn.log_softmax(y, axis=1), jnp.stack(h_finals, axis=0)


# ------------------------------------ main ------------------------------------
if __name__ == "__main__":
    # Small shapes consistent with the module's forward contract.
    T, B = 8, 2
    input_size, hidden_size, output_size, num_layers = 16, 32, 2, 2

    key = jax.random.PRNGKey(0)
    keys = jax.random.split(key, 4 * num_layers + 4)
    k = 1.0 / jnp.sqrt(hidden_size)

    params = {"w_ih": [], "w_hh": [], "b_ih": [], "b_hh": []}
    ki = 0
    for l in range(num_layers):
        in_dim = input_size if l == 0 else hidden_size
        params["w_ih"].append(jax.random.uniform(keys[ki], (3 * hidden_size, in_dim),
                                                 jnp.float32, -k, k)); ki += 1
        params["w_hh"].append(jax.random.uniform(keys[ki], (3 * hidden_size, hidden_size),
                                                 jnp.float32, -k, k)); ki += 1
        params["b_ih"].append(jax.random.uniform(keys[ki], (3 * hidden_size,),
                                                 jnp.float32, -k, k)); ki += 1
        params["b_hh"].append(jax.random.uniform(keys[ki], (3 * hidden_size,),
                                                 jnp.float32, -k, k)); ki += 1
    params["fc_w"] = jax.random.uniform(keys[ki], (output_size, hidden_size),
                                        jnp.float32, -k, k); ki += 1
    params["fc_b"] = jax.random.uniform(keys[ki], (output_size,),
                                        jnp.float32, -k, k); ki += 1

    x = jax.random.normal(keys[ki], (T, B, input_size), jnp.float32); ki += 1
    h0 = jnp.zeros((num_layers, B, hidden_size), jnp.float32)   # init_hidden()-style

    logits, h_out = gru_net_forward(x, h0, params)
    logits = jax.block_until_ready(logits)
    h_out = jax.block_until_ready(h_out)

    ref_logits, ref_h = _ref_forward(x, h0, params)
    assert jnp.allclose(logits, ref_logits, atol=1e-4, rtol=1e-4)
    assert jnp.allclose(h_out, ref_h, atol=1e-4, rtol=1e-4)
    assert logits.shape == (B, output_size)
    assert h_out.shape == (num_layers, B, hidden_size)

    print("KERNEL_OK")
</pallas_src>

<mosaic_0001>
module attributes {stable_mosaic.version = 11 : i64} {
  func.func @_fused_gru_head_kernel(%arg0: memref<8x8x16xf32, #tpu.memory_space<vmem>>, %arg1: memref<2x8x32xf32, #tpu.memory_space<vmem>>, %arg2: memref<16x32xf32, #tpu.memory_space<vmem>>, %arg3: memref<16x32xf32, #tpu.memory_space<vmem>>, %arg4: memref<16x32xf32, #tpu.memory_space<vmem>>, %arg5: memref<32x32xf32, #tpu.memory_space<vmem>>, %arg6: memref<32x32xf32, #tpu.memory_space<vmem>>, %arg7: memref<32x32xf32, #tpu.memory_space<vmem>>, %arg8: memref<1x32xf32, #tpu.memory_space<vmem>>, %arg9: memref<1x32xf32, #tpu.memory_space<vmem>>, %arg10: memref<1x32xf32, #tpu.memory_space<vmem>>, %arg11: memref<1x32xf32, #tpu.memory_space<vmem>>, %arg12: memref<32x32xf32, #tpu.memory_space<vmem>>, %arg13: memref<32x32xf32, #tpu.memory_space<vmem>>, %arg14: memref<32x32xf32, #tpu.memory_space<vmem>>, %arg15: memref<32x32xf32, #tpu.memory_space<vmem>>, %arg16: memref<32x32xf32, #tpu.memory_space<vmem>>, %arg17: memref<32x32xf32, #tpu.memory_space<vmem>>, %arg18: memref<1x32xf32, #tpu.memory_space<vmem>>, %arg19: memref<1x32xf32, #tpu.memory_space<vmem>>, %arg20: memref<1x32xf32, #tpu.memory_space<vmem>>, %arg21: memref<1x32xf32, #tpu.memory_space<vmem>>, %arg22: memref<32x2xf32, #tpu.memory_space<vmem>>, %arg23: memref<1x2xf32, #tpu.memory_space<vmem>>, %arg24: memref<8x2xf32, #tpu.memory_space<vmem>>, %arg25: memref<2x8x32xf32, #tpu.memory_space<vmem>>) attributes {dimension_semantics = [], scalar_prefetch = 0 : i64, scratch_operands = 0 : i64, tpu.core_type = #tpu.core_type<tc>} {
    %c0 = arith.constant 0 : index
    %c0_0 = arith.constant 0 : index
    %c0_1 = arith.constant 0 : index
    %0 = vector.load %arg0[%c0, %c0_0, %c0_1] : memref<8x8x16xf32, #tpu.memory_space<vmem>>, vector<8x8x16xf32>
    %1 = vector.shape_cast %0 : vector<8x8x16xf32> to vector<64x16xf32>
    %c0_2 = arith.constant 0 : index
    %c0_3 = arith.constant 0 : index
    %2 = vector.load %arg2[%c0_2, %c0_3] : memref<16x32xf32, #tpu.memory_space<vmem>>, vector<16x32xf32>
    %cst = arith.constant dense<0.000000e+00> : vector<64x32xf32>
    %3 = tpu.matmul %1, %2, %cst {dimension_numbers = #tpu.dot_dimension_numbers<[1], [0], [0], [1], [0, 0, 1, 1], [], []>} : vector<64x16xf32>, vector<16x32xf32>, vector<64x32xf32> -> vector<64x32xf32>
    %c0_4 = arith.constant 0 : index
    %c0_5 = arith.constant 0 : index
    %4 = vector.load %arg8[%c0_4, %c0_5] : memref<1x32xf32, #tpu.memory_space<vmem>>, vector<1x32xf32>
    %5 = vector.broadcast %4 : vector<1x32xf32> to vector<64x32xf32>
    %6 = arith.addf %3, %5 : vector<64x32xf32>
    %c0_6 = arith.constant 0 : index
    %c0_7 = arith.constant 0 : index
    %7 = vector.load %arg3[%c0_6, %c0_7] : memref<16x32xf32, #tpu.memory_space<vmem>>, vector<16x32xf32>
    %cst_8 = arith.constant dense<0.000000e+00> : vector<64x32xf32>
    %8 = tpu.matmul %1, %7, %cst_8 {dimension_numbers = #tpu.dot_dimension_numbers<[1], [0], [0], [1], [0, 0, 1, 1], [], []>} : vector<64x16xf32>, vector<16x32xf32>, vector<64x32xf32> -> vector<64x32xf32>
    %c0_9 = arith.constant 0 : index
    %c0_10 = arith.constant 0 : index
    %9 = vector.load %arg9[%c0_9, %c0_10] : memref<1x32xf32, #tpu.memory_space<vmem>>, vector<1x32xf32>
    %10 = vector.broadcast %9 : vector<1x32xf32> to vector<64x32xf32>
    %11 = arith.addf %8, %10 : vector<64x32xf32>
    %c0_11 = arith.constant 0 : index
    %c0_12 = arith.constant 0 : index
    %12 = vector.load %arg4[%c0_11, %c0_12] : memref<16x32xf32, #tpu.memory_space<vmem>>, vector<16x32xf32>
    %cst_13 = arith.constant dense<0.000000e+00> : vector<64x32xf32>
    %13 = tpu.matmul %1, %12, %cst_13 {dimension_numbers = #tpu.dot_dimension_numbers<[1], [0], [0], [1], [0, 0, 1, 1], [], []>} : vector<64x16xf32>, vector<16x32xf32>, vector<64x32xf32> -> vector<64x32xf32>
    %c0_14 = arith.constant 0 : index
    %c0_15 = arith.constant 0 : index
    %14 = vector.load %arg10[%c0_14, %c0_15] : memref<1x32xf32, #tpu.memory_space<vmem>>, vector<1x32xf32>
    %15 = vector.broadcast %14 : vector<1x32xf32> to vector<64x32xf32>
    %16 = arith.addf %13, %15 : vector<64x32xf32>
    %c0_16 = arith.constant 0 : index
    %c0_17 = arith.constant 0 : index
    %17 = vector.load %arg5[%c0_16, %c0_17] : memref<32x32xf32, #tpu.memory_space<vmem>>, vector<32x32xf32>
    %c0_18 = arith.constant 0 : index
    %c0_19 = arith.constant 0 : index
    %18 = vector.load %arg6[%c0_18, %c0_19] : memref<32x32xf32, #tpu.memory_space<vmem>>, vector<32x32xf32>
    %c0_20 = arith.constant 0 : index
    %c0_21 = arith.constant 0 : index
    %19 = vector.load %arg7[%c0_20, %c0_21] : memref<32x32xf32, #tpu.memory_space<vmem>>, vector<32x32xf32>
    %c0_22 = arith.constant 0 : index
    %c0_23 = arith.constant 0 : index
    %20 = vector.load %arg11[%c0_22, %c0_23] : memref<1x32xf32, #tpu.memory_space<vmem>>, vector<1x32xf32>
    %c0_24 = arith.constant 0 : index
    %c0_25 = arith.constant 0 : index
    %c0_26 = arith.constant 0 : index
    %21 = vector.load %arg1[%c0_24, %c0_25, %c0_26] : memref<2x8x32xf32, #tpu.memory_space<vmem>>, vector<1x8x32xf32>
    %22 = vector.shape_cast %21 : vector<1x8x32xf32> to vector<8x32xf32>
    %23 = vector.extract_strided_slice %6 {offsets = [0, 0], sizes = [8, 32], strides = [1, 1]} : vector<64x32xf32> to vector<8x32xf32>
    %24 = vector.extract_strided_slice %11 {offsets = [0, 0], sizes = [8, 32], strides = [1, 1]} : vector<64x32xf32> to vector<8x32xf32>
    %25 = vector.extract_strided_slice %16 {offsets = [0, 0], sizes = [8, 32], strides = [1, 1]} : vector<64x32xf32> to vector<8x32xf32>
    %cst_27 = arith.constant dense<0.000000e+00> : vector<8x32xf32>
    %26 = tpu.matmul %22, %17, %cst_27 {dimension_numbers = #tpu.dot_dimension_numbers<[1], [0], [0], [1], [0, 0, 1, 1], [], []>} : vector<8x32xf32>, vector<32x32xf32>, vector<8x32xf32> -> vector<8x32xf32>
    %cst_28 = arith.constant dense<0.000000e+00> : vector<8x32xf32>
    %27 = tpu.matmul %22, %18, %cst_28 {dimension_numbers = #tpu.dot_dimension_numbers<[1], [0], [0], [1], [0, 0, 1, 1], [], []>} : vector<8x32xf32>, vector<32x32xf32>, vector<8x32xf32> -> vector<8x32xf32>
    %cst_29 = arith.constant dense<0.000000e+00> : vector<8x32xf32>
    %28 = tpu.matmul %22, %19, %cst_29 {dimension_numbers = #tpu.dot_dimension_numbers<[1], [0], [0], [1], [0, 0, 1, 1], [], []>} : vector<8x32xf32>, vector<32x32xf32>, vector<8x32xf32> -> vector<8x32xf32>
    %29 = vector.broadcast %20 : vector<1x32xf32> to vector<8x32xf32>
    %30 = arith.addf %28, %29 : vector<8x32xf32>
    %31 = arith.addf %23, %26 : vector<8x32xf32>
    %32 = arith.negf %31 : vector<8x32xf32>
    %33 = math.exp %32 : vector<8x32xf32>
    %cst_30 = arith.constant 1.000000e+00 : f32
    %34 = vector.broadcast %cst_30 : f32 to vector<8x32xf32>
    %35 = arith.addf %34, %33 : vector<8x32xf32>
    %36 = arith.divf %34, %35 : vector<8x32xf32>
    %37 = arith.addf %24, %27 : vector<8x32xf32>
    %38 = arith.negf %37 : vector<8x32xf32>
    %39 = math.exp %38 : vector<8x32xf32>
    %cst_31 = arith.constant 1.000000e+00 : f32
    %40 = vector.broadcast %cst_31 : f32 to vector<8x32xf32>
    %41 = arith.addf %40, %39 : vector<8x32xf32>
    %42 = arith.divf %40, %41 : vector<8x32xf32>
    %43 = arith.mulf %36, %30 : vector<8x32xf32>
    %44 = arith.addf %25, %43 : vector<8x32xf32>
    %45 = math.tanh %44 : vector<8x32xf32>
    %cst_32 = arith.constant 1.000000e+00 : f32
    %46 = vector.broadcast %cst_32 : f32 to vector<8x32xf32>
    %47 = arith.subf %46, %42 : vector<8x32xf32>
    %48 = arith.mulf %47, %45 : vector<8x32xf32>
    %49 = arith.mulf %42, %22 : vector<8x32xf32>
    %50 = arith.addf %48, %49 : vector<8x32xf32>
    %51 = vector.extract_strided_slice %6 {offsets = [8, 0], sizes = [8, 32], strides = [1, 1]} : vector<64x32xf32> to vector<8x32xf32>
    %52 = vector.extract_strided_slice %11 {offsets = [8, 0], sizes = [8, 32], strides = [1, 1]} : vector<64x32xf32> to vector<8x32xf32>
    %53 = vector.extract_strided_slice %16 {offsets = [8, 0], sizes = [8, 32], strides = [1, 1]} : vector<64x32xf32> to vector<8x32xf32>
    %cst_33 = arith.constant dense<0.000000e+00> : vector<8x32xf32>
    %54 = tpu.matmul %50, %17, %cst_33 {dimension_numbers = #tpu.dot_dimension_numbers<[1], [0], [0], [1], [0, 0, 1, 1], [], []>} : vector<8x32xf32>, vector<32x32xf32>, vector<8x32xf32> -> vector<8x32xf32>
    %cst_34 = arith.constant dense<0.000000e+00> : vector<8x32xf32>
    %55 = tpu.matmul %50, %18, %cst_34 {dimension_numbers = #tpu.dot_dimension_numbers<[1], [0], [0], [1], [0, 0, 1, 1], [], []>} : vector<8x32xf32>, vector<32x32xf32>, vector<8x32xf32> -> vector<8x32xf32>
    %cst_35 = arith.constant dense<0.000000e+00> : vector<8x32xf32>
    %56 = tpu.matmul %50, %19, %cst_35 {dimension_numbers = #tpu.dot_dimension_numbers<[1], [0], [0], [1], [0, 0, 1, 1], [], []>} : vector<8x32xf32>, vector<32x32xf32>, vector<8x32xf32> -> vector<8x32xf32>
    %57 = vector.broadcast %20 : vector<1x32xf32> to vector<8x32xf32>
    %58 = arith.addf %56, %57 : vector<8x32xf32>
    %59 = arith.addf %51, %54 : vector<8x32xf32>
    %60 = arith.negf %59 : vector<8x32xf32>
    %61 = math.exp %60 : vector<8x32xf32>
    %cst_36 = arith.constant 1.000000e+00 : f32
    %62 = vector.broadcast %cst_36 : f32 to vector<8x32xf32>
    %63 = arith.addf %62, %61 : vector<8x32xf32>
    %64 = arith.divf %62, %63 : vector<8x32xf32>
    %65 = arith.addf %52, %55 : vector<8x32xf32>
    %66 = arith.negf %65 : vector<8x32xf32>
    %67 = math.exp %66 : vector<8x32xf32>
    %cst_37 = arith.constant 1.000000e+00 : f32
    %68 = vector.broadcast %cst_37 : f32 to vector<8x32xf32>
    %69 = arith.addf %68, %67 : vector<8x32xf32>
    %70 = arith.divf %68, %69 : vector<8x32xf32>
    %71 = arith.mulf %64, %58 : vector<8x32xf32>
    %72 = arith.addf %53, %71 : vector<8x32xf32>
    %73 = math.tanh %72 : vector<8x32xf32>
    %cst_38 = arith.constant 1.000000e+00 : f32
    %74 = vector.broadcast %cst_38 : f32 to vector<8x32xf32>
    %75 = arith.subf %74, %70 : vector<8x32xf32>
    %76 = arith.mulf %75, %73 : vector<8x32xf32>
    %77 = arith.mulf %70, %50 : vector<8x32xf32>
    %78 = arith.addf %76, %77 : vector<8x32xf32>
    %79 = vector.extract_strided_slice %6 {offsets = [16, 0], sizes = [8, 32], strides = [1, 1]} : vector<64x32xf32> to vector<8x32xf32>
    %80 = vector.extract_strided_slice %11 {offsets = [16, 0], sizes = [8, 32], strides = [1, 1]} : vector<64x32xf32> to vector<8x32xf32>
    %81 = vector.extract_strided_slice %16 {offsets = [16, 0], sizes = [8, 32], strides = [1, 1]} : vector<64x32xf32> to vector<8x32xf32>
    %cst_39 = arith.constant dense<0.000000e+00> : vector<8x32xf32>
    %82 = tpu.matmul %78, %17, %cst_39 {dimension_numbers = #tpu.dot_dimension_numbers<[1], [0], [0], [1], [0, 0, 1, 1], [], []>} : vector<8x32xf32>, vector<32x32xf32>, vector<8x32xf32> -> vector<8x32xf32>
    %cst_40 = arith.constant dense<0.000000e+00> : vector<8x32xf32>
    %83 = tpu.matmul %78, %18, %cst_40 {dimension_numbers = #tpu.dot_dimension_numbers<[1], [0], [0], [1], [0, 0, 1, 1], [], []>} : vector<8x32xf32>, vector<32x32xf32>, vector<8x32xf32> -> vector<8x32xf32>
    %cst_41 = arith.constant dense<0.000000e+00> : vector<8x32xf32>
    %84 = tpu.matmul %78, %19, %cst_41 {dimension_numbers = #tpu.dot_dimension_numbers<[1], [0], [0], [1], [0, 0, 1, 1], [], []>} : vector<8x32xf32>, vector<32x32xf32>, vector<8x32xf32> -> vector<8x32xf32>
    %85 = vector.broadcast %20 : vector<1x32xf32> to vector<8x32xf32>
    %86 = arith.addf %84, %85 : vector<8x32xf32>
    %87 = arith.addf %79, %82 : vector<8x32xf32>
    %88 = arith.negf %87 : vector<8x32xf32>
    %89 = math.exp %88 : vector<8x32xf32>
    %cst_42 = arith.constant 1.000000e+00 : f32
    %90 = vector.broadcast %cst_42 : f32 to vector<8x32xf32>
    %91 = arith.addf %90, %89 : vector<8x32xf32>
    %92 = arith.divf %90, %91 : vector<8x32xf32>
    %93 = arith.addf %80, %83 : vector<8x32xf32>
    %94 = arith.negf %93 : vector<8x32xf32>
    %95 = math.exp %94 : vector<8x32xf32>
    %cst_43 = arith.constant 1.000000e+00 : f32
    %96 = vector.broadcast %cst_43 : f32 to vector<8x32xf32>
    %97 = arith.addf %96, %95 : vector<8x32xf32>
    %98 = arith.divf %96, %97 : vector<8x32xf32>
    %99 = arith.mulf %92, %86 : vector<8x32xf32>
    %100 = arith.addf %81, %99 : vector<8x32xf32>
    %101 = math.tanh %100 : vector<8x32xf32>
    %cst_44 = arith.constant 1.000000e+00 : f32
    %102 = vector.broadcast %cst_44 : f32 to vector<8x32xf32>
    %103 = arith.subf %102, %98 : vector<8x32xf32>
    %104 = arith.mulf %103, %101 : vector<8x32xf32>
    %105 = arith.mulf %98, %78 : vector<8x32xf32>
    %106 = arith.addf %104, %105 : vector<8x32xf32>
    %107 = vector.extract_strided_slice %6 {offsets = [24, 0], sizes = [8, 32], strides = [1, 1]} : vector<64x32xf32> to vector<8x32xf32>
    %108 = vector.extract_strided_slice %11 {offsets = [24, 0], sizes = [8, 32], strides = [1, 1]} : vector<64x32xf32> to vector<8x32xf32>
    %109 = vector.extract_strided_slice %16 {offsets = [24, 0], sizes = [8, 32], strides = [1, 1]} : vector<64x32xf32> to vector<8x32xf32>
    %cst_45 = arith.constant dense<0.000000e+00> : vector<8x32xf32>
    %110 = tpu.matmul %106, %17, %cst_45 {dimension_numbers = #tpu.dot_dimension_numbers<[1], [0], [0], [1], [0, 0, 1, 1], [], []>} : vector<8x32xf32>, vector<32x32xf32>, vector<8x32xf32> -> vector<8x32xf32>
    %cst_46 = arith.constant dense<0.000000e+00> : vector<8x32xf32>
    %111 = tpu.matmul %106, %18, %cst_46 {dimension_numbers = #tpu.dot_dimension_numbers<[1], [0], [0], [1], [0, 0, 1, 1], [], []>} : vector<8x32xf32>, vector<32x32xf32>, vector<8x32xf32> -> vector<8x32xf32>
    %cst_47 = arith.constant dense<0.000000e+00> : vector<8x32xf32>
    %112 = tpu.matmul %106, %19, %cst_47 {dimension_numbers = #tpu.dot_dimension_numbers<[1], [0], [0], [1], [0, 0, 1, 1], [], []>} : vector<8x32xf32>, vector<32x32xf32>, vector<8x32xf32> -> vector<8x32xf32>
    %113 = vector.broadcast %20 : vector<1x32xf32> to vector<8x32xf32>
    %114 = arith.addf %112, %113 : vector<8x32xf32>
    %115 = arith.addf %107, %110 : vector<8x32xf32>
    %116 = arith.negf %115 : vector<8x32xf32>
    %117 = math.exp %116 : vector<8x32xf32>
    %cst_48 = arith.constant 1.000000e+00 : f32
    %118 = vector.broadcast %cst_48 : f32 to vector<8x32xf32>
    %119 = arith.addf %118, %117 : vector<8x32xf32>
    %120 = arith.divf %118, %119 : vector<8x32xf32>
    %121 = arith.addf %108, %111 : vector<8x32xf32>
    %122 = arith.negf %121 : vector<8x32xf32>
    %123 = math.exp %122 : vector<8x32xf32>
    %cst_49 = arith.constant 1.000000e+00 : f32
    %124 = vector.broadcast %cst_49 : f32 to vector<8x32xf32>
    %125 = arith.addf %124, %123 : vector<8x32xf32>
    %126 = arith.divf %124, %125 : vector<8x32xf32>
    %127 = arith.mulf %120, %114 : vector<8x32xf32>
    %128 = arith.addf %109, %127 : vector<8x32xf32>
    %129 = math.tanh %128 : vector<8x32xf32>
    %cst_50 = arith.constant 1.000000e+00 : f32
    %130 = vector.broadcast %cst_50 : f32 to vector<8x32xf32>
    %131 = arith.subf %130, %126 : vector<8x32xf32>
    %132 = arith.mulf %131, %129 : vector<8x32xf32>
    %133 = arith.mulf %126, %106 : vector<8x32xf32>
    %134 = arith.addf %132, %133 : vector<8x32xf32>
    %135 = vector.extract_strided_slice %6 {offsets = [32, 0], sizes = [8, 32], strides = [1, 1]} : vector<64x32xf32> to vector<8x32xf32>
    %136 = vector.extract_strided_slice %11 {offsets = [32, 0], sizes = [8, 32], strides = [1, 1]} : vector<64x32xf32> to vector<8x32xf32>
    %137 = vector.extract_strided_slice %16 {offsets = [32, 0], sizes = [8, 32], strides = [1, 1]} : vector<64x32xf32> to vector<8x32xf32>
    %cst_51 = arith.constant dense<0.000000e+00> : vector<8x32xf32>
    %138 = tpu.matmul %134, %17, %cst_51 {dimension_numbers = #tpu.dot_dimension_numbers<[1], [0], [0], [1], [0, 0, 1, 1], [], []>} : vector<8x32xf32>, vector<32x32xf32>, vector<8x32xf32> -> vector<8x32xf32>
    %cst_52 = arith.constant dense<0.000000e+00> : vector<8x32xf32>
    %139 = tpu.matmul %134, %18, %cst_52 {dimension_numbers = #tpu.dot_dimension_numbers<[1], [0], [0], [1], [0, 0, 1, 1], [], []>} : vector<8x32xf32>, vector<32x32xf32>, vector<8x32xf32> -> vector<8x32xf32>
    %cst_53 = arith.constant dense<0.000000e+00> : vector<8x32xf32>
    %140 = tpu.matmul %134, %19, %cst_53 {dimension_numbers = #tpu.dot_dimension_numbers<[1], [0], [0], [1], [0, 0, 1, 1], [], []>} : vector<8x32xf32>, vector<32x32xf32>, vector<8x32xf32> -> vector<8x32xf32>
    %141 = vector.broadcast %20 : vector<1x32xf32> to vector<8x32xf32>
    %142 = arith.addf %140, %141 : vector<8x32xf32>
    %143 = arith.addf %135, %138 : vector<8x32xf32>
    %144 = arith.negf %143 : vector<8x32xf32>
    %145 = math.exp %144 : vector<8x32xf32>
    %cst_54 = arith.constant 1.000000e+00 : f32
    %146 = vector.broadcast %cst_54 : f32 to vector<8x32xf32>
    %147 = arith.addf %146, %145 : vector<8x32xf32>
    %148 = arith.divf %146, %147 : vector<8x32xf32>
    %149 = arith.addf %136, %139 : vector<8x32xf32>
    %150 = arith.negf %149 : vector<8x32xf32>
    %151 = math.exp %150 : vector<8x32xf32>
    %cst_55 = arith.constant 1.000000e+00 : f32
    %152 = vector.broadcast %cst_55 : f32 to vector<8x32xf32>
    %153 = arith.addf %152, %151 : vector<8x32xf32>
    %154 = arith.divf %152, %153 : vector<8x32xf32>
    %155 = arith.mulf %148, %142 : vector<8x32xf32>
    %156 = arith.addf %137, %155 : vector<8x32xf32>
    %157 = math.tanh %156 : vector<8x32xf32>
    %cst_56 = arith.constant 1.000000e+00 : f32
    %158 = vector.broadcast %cst_56 : f32 to vector<8x32xf32>
    %159 = arith.subf %158, %154 : vector<8x32xf32>
    %160 = arith.mulf %159, %157 : vector<8x32xf32>
    %161 = arith.mulf %154, %134 : vector<8x32xf32>
    %162 = arith.addf %160, %161 : vector<8x32xf32>
    %163 = vector.extract_strided_slice %6 {offsets = [40, 0], sizes = [8, 32], strides = [1, 1]} : vector<64x32xf32> to vector<8x32xf32>
    %164 = vector.extract_strided_slice %11 {offsets = [40, 0], sizes = [8, 32], strides = [1, 1]} : vector<64x32xf32> to vector<8x32xf32>
    %165 = vector.extract_strided_slice %16 {offsets = [40, 0], sizes = [8, 32], strides = [1, 1]} : vector<64x32xf32> to vector<8x32xf32>
    %cst_57 = arith.constant dense<0.000000e+00> : vector<8x32xf32>
    %166 = tpu.matmul %162, %17, %cst_57 {dimension_numbers = #tpu.dot_dimension_numbers<[1], [0], [0], [1], [0, 0, 1, 1], [], []>} : vector<8x32xf32>, vector<32x32xf32>, vector<8x32xf32> -> vector<8x32xf32>
    %cst_58 = arith.constant dense<0.000000e+00> : vector<8x32xf32>
    %167 = tpu.matmul %162, %18, %cst_58 {dimension_numbers = #tpu.dot_dimension_numbers<[1], [0], [0], [1], [0, 0, 1, 1], [], []>} : vector<8x32xf32>, vector<32x32xf32>, vector<8x32xf32> -> vector<8x32xf32>
    %cst_59 = arith.constant dense<0.000000e+00> : vector<8x32xf32>
    %168 = tpu.matmul %162, %19, %cst_59 {dimension_numbers = #tpu.dot_dimension_numbers<[1], [0], [0], [1], [0, 0, 1, 1], [], []>} : vector<8x32xf32>, vector<32x32xf32>, vector<8x32xf32> -> vector<8x32xf32>
    %169 = vector.broadcast %20 : vector<1x32xf32> to vector<8x32xf32>
    %170 = arith.addf %168, %169 : vector<8x32xf32>
    %171 = arith.addf %163, %166 : vector<8x32xf32>
    %172 = arith.negf %171 : vector<8x32xf32>
    %173 = math.exp %172 : vector<8x32xf32>
    %cst_60 = arith.constant 1.000000e+00 : f32
    %174 = vector.broadcast %cst_60 : f32 to vector<8x32xf32>
    %175 = arith.addf %174, %173 : vector<8x32xf32>
    %176 = arith.divf %174, %175 : vector<8x32xf32>
    %177 = arith.addf %164, %167 : vector<8x32xf32>
    %178 = arith.negf %177 : vector<8x32xf32>
    %179 = math.exp %178 : vector<8x32xf32>
    %cst_61 = arith.constant 1.000000e+00 : f32
    %180 = vector.broadcast %cst_61 : f32 to vector<8x32xf32>
    %181 = arith.addf %180, %179 : vector<8x32xf32>
    %182 = arith.divf %180, %181 : vector<8x32xf32>
    %183 = arith.mulf %176, %170 : vector<8x32xf32>
    %184 = arith.addf %165, %183 : vector<8x32xf32>
    %185 = math.tanh %184 : vector<8x32xf32>
    %cst_62 = arith.constant 1.000000e+00 : f32
    %186 = vector.broadcast %cst_62 : f32 to vector<8x32xf32>
    %187 = arith.subf %186, %182 : vector<8x32xf32>
    %188 = arith.mulf %187, %185 : vector<8x32xf32>
    %189 = arith.mulf %182, %162 : vector<8x32xf32>
    %190 = arith.addf %188, %189 : vector<8x32xf32>
    %191 = vector.extract_strided_slice %6 {offsets = [48, 0], sizes = [8, 32], strides = [1, 1]} : vector<64x32xf32> to vector<8x32xf32>
    %192 = vector.extract_strided_slice %11 {offsets = [48, 0], sizes = [8, 32], strides = [1, 1]} : vector<64x32xf32> to vector<8x32xf32>
    %193 = vector.extract_strided_slice %16 {offsets = [48, 0], sizes = [8, 32], strides = [1, 1]} : vector<64x32xf32> to vector<8x32xf32>
    %cst_63 = arith.constant dense<0.000000e+00> : vector<8x32xf32>
    %194 = tpu.matmul %190, %17, %cst_63 {dimension_numbers = #tpu.dot_dimension_numbers<[1], [0], [0], [1], [0, 0, 1, 1], [], []>} : vector<8x32xf32>, vector<32x32xf32>, vector<8x32xf32> -> vector<8x32xf32>
    %cst_64 = arith.constant dense<0.000000e+00> : vector<8x32xf32>
    %195 = tpu.matmul %190, %18, %cst_64 {dimension_numbers = #tpu.dot_dimension_numbers<[1], [0], [0], [1], [0, 0, 1, 1], [], []>} : vector<8x32xf32>, vector<32x32xf32>, vector<8x32xf32> -> vector<8x32xf32>
    %cst_65 = arith.constant dense<0.000000e+00> : vector<8x32xf32>
    %196 = tpu.matmul %190, %19, %cst_65 {dimension_numbers = #tpu.dot_dimension_numbers<[1], [0], [0], [1], [0, 0, 1, 1], [], []>} : vector<8x32xf32>, vector<32x32xf32>, vector<8x32xf32> -> vector<8x32xf32>
    %197 = vector.broadcast %20 : vector<1x32xf32> to vector<8x32xf32>
    %198 = arith.addf %196, %197 : vector<8x32xf32>
    %199 = arith.addf %191, %194 : vector<8x32xf32>
    %200 = arith.negf %199 : vector<8x32xf32>
    %201 = math.exp %200 : vector<8x32xf32>
    %cst_66 = arith.constant 1.000000e+00 : f32
    %202 = vector.broadcast %cst_66 : f32 to vector<8x32xf32>
    %203 = arith.addf %202, %201 : vector<8x32xf32>
    %204 = arith.divf %202, %203 : vector<8x32xf32>
    %205 = arith.addf %192, %195 : vector<8x32xf32>
    %206 = arith.negf %205 : vector<8x32xf32>
    %207 = math.exp %206 : vector<8x32xf32>
    %cst_67 = arith.constant 1.000000e+00 : f32
    %208 = vector.broadcast %cst_67 : f32 to vector<8x32xf32>
    %209 = arith.addf %208, %207 : vector<8x32xf32>
    %210 = arith.divf %208, %209 : vector<8x32xf32>
    %211 = arith.mulf %204, %198 : vector<8x32xf32>
    %212 = arith.addf %193, %211 : vector<8x32xf32>
    %213 = math.tanh %212 : vector<8x32xf32>
    %cst_68 = arith.constant 1.000000e+00 : f32
    %214 = vector.broadcast %cst_68 : f32 to vector<8x32xf32>
    %215 = arith.subf %214, %210 : vector<8x32xf32>
    %216 = arith.mulf %215, %213 : vector<8x32xf32>
    %217 = arith.mulf %210, %190 : vector<8x32xf32>
    %218 = arith.addf %216, %217 : vector<8x32xf32>
    %219 = vector.extract_strided_slice %6 {offsets = [56, 0], sizes = [8, 32], strides = [1, 1]} : vector<64x32xf32> to vector<8x32xf32>
    %220 = vector.extract_strided_slice %11 {offsets = [56, 0], sizes = [8, 32], strides = [1, 1]} : vector<64x32xf32> to vector<8x32xf32>
    %221 = vector.extract_strided_slice %16 {offsets = [56, 0], sizes = [8, 32], strides = [1, 1]} : vector<64x32xf32> to vector<8x32xf32>
    %cst_69 = arith.constant dense<0.000000e+00> : vector<8x32xf32>
    %222 = tpu.matmul %218, %17, %cst_69 {dimension_numbers = #tpu.dot_dimension_numbers<[1], [0], [0], [1], [0, 0, 1, 1], [], []>} : vector<8x32xf32>, vector<32x32xf32>, vector<8x32xf32> -> vector<8x32xf32>
    %cst_70 = arith.constant dense<0.000000e+00> : vector<8x32xf32>
    %223 = tpu.matmul %218, %18, %cst_70 {dimension_numbers = #tpu.dot_dimension_numbers<[1], [0], [0], [1], [0, 0, 1, 1], [], []>} : vector<8x32xf32>, vector<32x32xf32>, vector<8x32xf32> -> vector<8x32xf32>
    %cst_71 = arith.constant dense<0.000000e+00> : vector<8x32xf32>
    %224 = tpu.matmul %218, %19, %cst_71 {dimension_numbers = #tpu.dot_dimension_numbers<[1], [0], [0], [1], [0, 0, 1, 1], [], []>} : vector<8x32xf32>, vector<32x32xf32>, vector<8x32xf32> -> vector<8x32xf32>
    %225 = vector.broadcast %20 : vector<1x32xf32> to vector<8x32xf32>
    %226 = arith.addf %224, %225 : vector<8x32xf32>
    %227 = arith.addf %219, %222 : vector<8x32xf32>
    %228 = arith.negf %227 : vector<8x32xf32>
    %229 = math.exp %228 : vector<8x32xf32>
    %cst_72 = arith.constant 1.000000e+00 : f32
    %230 = vector.broadcast %cst_72 : f32 to vector<8x32xf32>
    %231 = arith.addf %230, %229 : vector<8x32xf32>
    %232 = arith.divf %230, %231 : vector<8x32xf32>
    %233 = arith.addf %220, %223 : vector<8x32xf32>
    %234 = arith.negf %233 : vector<8x32xf32>
    %235 = math.exp %234 : vector<8x32xf32>
    %cst_73 = arith.constant 1.000000e+00 : f32
    %236 = vector.broadcast %cst_73 : f32 to vector<8x32xf32>
    %237 = arith.addf %236, %235 : vector<8x32xf32>
    %238 = arith.divf %236, %237 : vector<8x32xf32>
    %239 = arith.mulf %232, %226 : vector<8x32xf32>
    %240 = arith.addf %221, %239 : vector<8x32xf32>
    %241 = math.tanh %240 : vector<8x32xf32>
    %cst_74 = arith.constant 1.000000e+00 : f32
    %242 = vector.broadcast %cst_74 : f32 to vector<8x32xf32>
    %243 = arith.subf %242, %238 : vector<8x32xf32>
    %244 = arith.mulf %243, %241 : vector<8x32xf32>
    %245 = arith.mulf %238, %218 : vector<8x32xf32>
    %246 = arith.addf %244, %245 : vector<8x32xf32>
    %c0_75 = arith.constant 0 : index
    %c0_76 = arith.constant 0 : index
    %c0_77 = arith.constant 0 : index
    %247 = vector.load %arg25[%c0_75, %c0_76, %c0_77] : memref<2x8x32xf32, #tpu.memory_space<vmem>>, vector<1x8x32xf32>
    %248 = vector.shape_cast %247 : vector<1x8x32xf32> to vector<8x32xf32>
    %249 = vector.shape_cast %246 : vector<8x32xf32> to vector<1x8x32xf32>
    tpu.vector_store %arg25[%c0_75, %c0_76, %c0_77], %249 {strides = array<i32>} : memref<2x8x32xf32, #tpu.memory_space<vmem>>, vector<1x8x32xf32>,
    %250 = tpu.concatenate %50, %78, %106, %134, %162, %190, %218, %246 in 0 : vector<8x32xf32>, vector<8x32xf32>, vector<8x32xf32>, vector<8x32xf32>, vector<8x32xf32>, vector<8x32xf32>, vector<8x32xf32>, vector<8x32xf32> -> vector<64x32xf32>
    %c0_78 = arith.constant 0 : index
    %c0_79 = arith.constant 0 : index
    %251 = vector.load %arg12[%c0_78, %c0_79] : memref<32x32xf32, #tpu.memory_space<vmem>>, vector<32x32xf32>
    %cst_80 = arith.constant dense<0.000000e+00> : vector<64x32xf32>
    %252 = tpu.matmul %250, %251, %cst_80 {dimension_numbers = #tpu.dot_dimension_numbers<[1], [0], [0], [1], [0, 0, 1, 1], [], []>} : vector<64x32xf32>, vector<32x32xf32>, vector<64x32xf32> -> vector<64x32xf32>
    %c0_81 = arith.constant 0 : index
    %c0_82 = arith.constant 0 : index
    %253 = vector.load %arg18[%c0_81, %c0_82] : memref<1x32xf32, #tpu.memory_space<vmem>>, vector<1x32xf32>
    %254 = vector.broadcast %253 : vector<1x32xf32> to vector<64x32xf32>
    %255 = arith.addf %252, %254 : vector<64x32xf32>
    %c0_83 = arith.constant 0 : index
    %c0_84 = arith.constant 0 : index
    %256 = vector.load %arg13[%c0_83, %c0_84] : memref<32x32xf32, #tpu.memory_space<vmem>>, vector<32x32xf32>
    %cst_85 = arith.constant dense<0.000000e+00> : vector<64x32xf32>
    %257 = tpu.matmul %250, %256, %cst_85 {dimension_numbers = #tpu.dot_dimension_numbers<[1], [0], [0], [1], [0, 0, 1, 1], [], []>} : vector<64x32xf32>, vector<32x32xf32>, vector<64x32xf32> -> vector<64x32xf32>
    %c0_86 = arith.constant 0 : index
    %c0_87 = arith.constant 0 : index
    %258 = vector.load %arg19[%c0_86, %c0_87] : memref<1x32xf32, #tpu.memory_space<vmem>>, vector<1x32xf32>
    %259 = vector.broadcast %258 : vector<1x32xf32> to vector<64x32xf32>
    %260 = arith.addf %257, %259 : vector<64x32xf32>
    %c0_88 = arith.constant 0 : index
    %c0_89 = arith.constant 0 : index
    %261 = vector.load %arg14[%c0_88, %c0_89] : memref<32x32xf32, #tpu.memory_space<vmem>>, vector<32x32xf32>
    %cst_90 = arith.constant dense<0.000000e+00> : vector<64x32xf32>
    %262 = tpu.matmul %250, %261, %cst_90 {dimension_numbers = #tpu.dot_dimension_numbers<[1], [0], [0], [1], [0, 0, 1, 1], [], []>} : vector<64x32xf32>, vector<32x32xf32>, vector<64x32xf32> -> vector<64x32xf32>
    %c0_91 = arith.constant 0 : index
    %c0_92 = arith.constant 0 : index
    %263 = vector.load %arg20[%c0_91, %c0_92] : memref<1x32xf32, #tpu.memory_space<vmem>>, vector<1x32xf32>
    %264 = vector.broadcast %263 : vector<1x32xf32> to vector<64x32xf32>
    %265 = arith.addf %262, %264 : vector<64x32xf32>
    %c0_93 = arith.constant 0 : index
    %c0_94 = arith.constant 0 : index
    %266 = vector.load %arg15[%c0_93, %c0_94] : memref<32x32xf32, #tpu.memory_space<vmem>>, vector<32x32xf32>
    %c0_95 = arith.constant 0 : index
    %c0_96 = arith.constant 0 : index
    %267 = vector.load %arg16[%c0_95, %c0_96] : memref<32x32xf32, #tpu.memory_space<vmem>>, vector<32x32xf32>
    %c0_97 = arith.constant 0 : index
    %c0_98 = arith.constant 0 : index
    %268 = vector.load %arg17[%c0_97, %c0_98] : memref<32x32xf32, #tpu.memory_space<vmem>>, vector<32x32xf32>
    %c0_99 = arith.constant 0 : index
    %c0_100 = arith.constant 0 : index
    %269 = vector.load %arg21[%c0_99, %c0_100] : memref<1x32xf32, #tpu.memory_space<vmem>>, vector<1x32xf32>
    %c1 = arith.constant 1 : index
    %c0_101 = arith.constant 0 : index
    %c0_102 = arith.constant 0 : index
    %270 = vector.load %arg1[%c1, %c0_101, %c0_102] : memref<2x8x32xf32, #tpu.memory_space<vmem>>, vector<1x8x32xf32>
    %271 = vector.shape_cast %270 : vector<1x8x32xf32> to vector<8x32xf32>
    %272 = vector.extract_strided_slice %255 {offsets = [0, 0], sizes = [8, 32], strides = [1, 1]} : vector<64x32xf32> to vector<8x32xf32>
    %273 = vector.extract_strided_slice %260 {offsets = [0, 0], sizes = [8, 32], strides = [1, 1]} : vector<64x32xf32> to vector<8x32xf32>
    %274 = vector.extract_strided_slice %265 {offsets = [0, 0], sizes = [8, 32], strides = [1, 1]} : vector<64x32xf32> to vector<8x32xf32>
    %cst_103 = arith.constant dense<0.000000e+00> : vector<8x32xf32>
    %275 = tpu.matmul %271, %266, %cst_103 {dimension_numbers = #tpu.dot_dimension_numbers<[1], [0], [0], [1], [0, 0, 1, 1], [], []>} : vector<8x32xf32>, vector<32x32xf32>, vector<8x32xf32> -> vector<8x32xf32>
    %cst_104 = arith.constant dense<0.000000e+00> : vector<8x32xf32>
    %276 = tpu.matmul %271, %267, %cst_104 {dimension_numbers = #tpu.dot_dimension_numbers<[1], [0], [0], [1], [0, 0, 1, 1], [], []>} : vector<8x32xf32>, vector<32x32xf32>, vector<8x32xf32> -> vector<8x32xf32>
    %cst_105 = arith.constant dense<0.000000e+00> : vector<8x32xf32>
    %277 = tpu.matmul %271, %268, %cst_105 {dimension_numbers = #tpu.dot_dimension_numbers<[1], [0], [0], [1], [0, 0, 1, 1], [], []>} : vector<8x32xf32>, vector<32x32xf32>, vector<8x32xf32> -> vector<8x32xf32>
    %278 = vector.broadcast %269 : vector<1x32xf32> to vector<8x32xf32>
    %279 = arith.addf %277, %278 : vector<8x32xf32>
    %280 = arith.addf %272, %275 : vector<8x32xf32>
    %281 = arith.negf %280 : vector<8x32xf32>
    %282 = math.exp %281 : vector<8x32xf32>
    %cst_106 = arith.constant 1.000000e+00 : f32
    %283 = vector.broadcast %cst_106 : f32 to vector<8x32xf32>
    %284 = arith.addf %283, %282 : vector<8x32xf32>
    %285 = arith.divf %283, %284 : vector<8x32xf32>
    %286 = arith.addf %273, %276 : vector<8x32xf32>
    %287 = arith.negf %286 : vector<8x32xf32>
    %288 = math.exp %287 : vector<8x32xf32>
    %cst_107 = arith.constant 1.000000e+00 : f32
    %289 = vector.broadcast %cst_107 : f32 to vector<8x32xf32>
    %290 = arith.addf %289, %288 : vector<8x32xf32>
    %291 = arith.divf %289, %290 : vector<8x32xf32>
    %292 = arith.mulf %285, %279 : vector<8x32xf32>
    %293 = arith.addf %274, %292 : vector<8x32xf32>
    %294 = math.tanh %293 : vector<8x32xf32>
    %cst_108 = arith.constant 1.000000e+00 : f32
    %295 = vector.broadcast %cst_108 : f32 to vector<8x32xf32>
    %296 = arith.subf %295, %291 : vector<8x32xf32>
    %297 = arith.mulf %296, %294 : vector<8x32xf32>
    %298 = arith.mulf %291, %271 : vector<8x32xf32>
    %299 = arith.addf %297, %298 : vector<8x32xf32>
    %300 = vector.extract_strided_slice %255 {offsets = [8, 0], sizes = [8, 32], strides = [1, 1]} : vector<64x32xf32> to vector<8x32xf32>
    %301 = vector.extract_strided_slice %260 {offsets = [8, 0], sizes = [8, 32], strides = [1, 1]} : vector<64x32xf32> to vector<8x32xf32>
    %302 = vector.extract_strided_slice %265 {offsets = [8, 0], sizes = [8, 32], strides = [1, 1]} : vector<64x32xf32> to vector<8x32xf32>
    %cst_109 = arith.constant dense<0.000000e+00> : vector<8x32xf32>
    %303 = tpu.matmul %299, %266, %cst_109 {dimension_numbers = #tpu.dot_dimension_numbers<[1], [0], [0], [1], [0, 0, 1, 1], [], []>} : vector<8x32xf32>, vector<32x32xf32>, vector<8x32xf32> -> vector<8x32xf32>
    %cst_110 = arith.constant dense<0.000000e+00> : vector<8x32xf32>
    %304 = tpu.matmul %299, %267, %cst_110 {dimension_numbers = #tpu.dot_dimension_numbers<[1], [0], [0], [1], [0, 0, 1, 1], [], []>} : vector<8x32xf32>, vector<32x32xf32>, vector<8x32xf32> -> vector<8x32xf32>
    %cst_111 = arith.constant dense<0.000000e+00> : vector<8x32xf32>
    %305 = tpu.matmul %299, %268, %cst_111 {dimension_numbers = #tpu.dot_dimension_numbers<[1], [0], [0], [1], [0, 0, 1, 1], [], []>} : vector<8x32xf32>, vector<32x32xf32>, vector<8x32xf32> -> vector<8x32xf32>
    %306 = vector.broadcast %269 : vector<1x32xf32> to vector<8x32xf32>
    %307 = arith.addf %305, %306 : vector<8x32xf32>
    %308 = arith.addf %300, %303 : vector<8x32xf32>
    %309 = arith.negf %308 : vector<8x32xf32>
    %310 = math.exp %309 : vector<8x32xf32>
    %cst_112 = arith.constant 1.000000e+00 : f32
    %311 = vector.broadcast %cst_112 : f32 to vector<8x32xf32>
    %312 = arith.addf %311, %310 : vector<8x32xf32>
    %313 = arith.divf %311, %312 : vector<8x32xf32>
    %314 = arith.addf %301, %304 : vector<8x32xf32>
    %315 = arith.negf %314 : vector<8x32xf32>
    %316 = math.exp %315 : vector<8x32xf32>
    %cst_113 = arith.constant 1.000000e+00 : f32
    %317 = vector.broadcast %cst_113 : f32 to vector<8x32xf32>
    %318 = arith.addf %317, %316 : vector<8x32xf32>
    %319 = arith.divf %317, %318 : vector<8x32xf32>
    %320 = arith.mulf %313, %307 : vector<8x32xf32>
    %321 = arith.addf %302, %320 : vector<8x32xf32>
    %322 = math.tanh %321 : vector<8x32xf32>
    %cst_114 = arith.constant 1.000000e+00 : f32
    %323 = vector.broadcast %cst_114 : f32 to vector<8x32xf32>
    %324 = arith.subf %323, %319 : vector<8x32xf32>
    %325 = arith.mulf %324, %322 : vector<8x32xf32>
    %326 = arith.mulf %319, %299 : vector<8x32xf32>
    %327 = arith.addf %325, %326 : vector<8x32xf32>
    %328 = vector.extract_strided_slice %255 {offsets = [16, 0], sizes = [8, 32], strides = [1, 1]} : vector<64x32xf32> to vector<8x32xf32>
    %329 = vector.extract_strided_slice %260 {offsets = [16, 0], sizes = [8, 32], strides = [1, 1]} : vector<64x32xf32> to vector<8x32xf32>
    %330 = vector.extract_strided_slice %265 {offsets = [16, 0], sizes = [8, 32], strides = [1, 1]} : vector<64x32xf32> to vector<8x32xf32>
    %cst_115 = arith.constant dense<0.000000e+00> : vector<8x32xf32>
    %331 = tpu.matmul %327, %266, %cst_115 {dimension_numbers = #tpu.dot_dimension_numbers<[1], [0], [0], [1], [0, 0, 1, 1], [], []>} : vector<8x32xf32>, vector<32x32xf32>, vector<8x32xf32> -> vector<8x32xf32>
    %cst_116 = arith.constant dense<0.000000e+00> : vector<8x32xf32>
    %332 = tpu.matmul %327, %267, %cst_116 {dimension_numbers = #tpu.dot_dimension_numbers<[1], [0], [0], [1], [0, 0, 1, 1], [], []>} : vector<8x32xf32>, vector<32x32xf32>, vector<8x32xf32> -> vector<8x32xf32>
    %cst_117 = arith.constant dense<0.000000e+00> : vector<8x32xf32>
    %333 = tpu.matmul %327, %268, %cst_117 {dimension_numbers = #tpu.dot_dimension_numbers<[1], [0], [0], [1], [0, 0, 1, 1], [], []>} : vector<8x32xf32>, vector<32x32xf32>, vector<8x32xf32> -> vector<8x32xf32>
    %334 = vector.broadcast %269 : vector<1x32xf32> to vector<8x32xf32>
    %335 = arith.addf %333, %334 : vector<8x32xf32>
    %336 = arith.addf %328, %331 : vector<8x32xf32>
    %337 = arith.negf %336 : vector<8x32xf32>
    %338 = math.exp %337 : vector<8x32xf32>
    %cst_118 = arith.constant 1.000000e+00 : f32
    %339 = vector.broadcast %cst_118 : f32 to vector<8x32xf32>
    %340 = arith.addf %339, %338 : vector<8x32xf32>
    %341 = arith.divf %339, %340 : vector<8x32xf32>
    %342 = arith.addf %329, %332 : vector<8x32xf32>
    %343 = arith.negf %342 : vector<8x32xf32>
    %344 = math.exp %343 : vector<8x32xf32>
    %cst_119 = arith.constant 1.000000e+00 : f32
    %345 = vector.broadcast %cst_119 : f32 to vector<8x32xf32>
    %346 = arith.addf %345, %344 : vector<8x32xf32>
    %347 = arith.divf %345, %346 : vector<8x32xf32>
    %348 = arith.mulf %341, %335 : vector<8x32xf32>
    %349 = arith.addf %330, %348 : vector<8x32xf32>
    %350 = math.tanh %349 : vector<8x32xf32>
    %cst_120 = arith.constant 1.000000e+00 : f32
    %351 = vector.broadcast %cst_120 : f32 to vector<8x32xf32>
    %352 = arith.subf %351, %347 : vector<8x32xf32>
    %353 = arith.mulf %352, %350 : vector<8x32xf32>
    %354 = arith.mulf %347, %327 : vector<8x32xf32>
    %355 = arith.addf %353, %354 : vector<8x32xf32>
    %356 = vector.extract_strided_slice %255 {offsets = [24, 0], sizes = [8, 32], strides = [1, 1]} : vector<64x32xf32> to vector<8x32xf32>
    %357 = vector.extract_strided_slice %260 {offsets = [24, 0], sizes = [8, 32], strides = [1, 1]} : vector<64x32xf32> to vector<8x32xf32>
    %358 = vector.extract_strided_slice %265 {offsets = [24, 0], sizes = [8, 32], strides = [1, 1]} : vector<64x32xf32> to vector<8x32xf32>
    %cst_121 = arith.constant dense<0.000000e+00> : vector<8x32xf32>
    %359 = tpu.matmul %355, %266, %cst_121 {dimension_numbers = #tpu.dot_dimension_numbers<[1], [0], [0], [1], [0, 0, 1, 1], [], []>} : vector<8x32xf32>, vector<32x32xf32>, vector<8x32xf32> -> vector<8x32xf32>
    %cst_122 = arith.constant dense<0.000000e+00> : vector<8x32xf32>
    %360 = tpu.matmul %355, %267, %cst_122 {dimension_numbers = #tpu.dot_dimension_numbers<[1], [0], [0], [1], [0, 0, 1, 1], [], []>} : vector<8x32xf32>, vector<32x32xf32>, vector<8x32xf32> -> vector<8x32xf32>
    %cst_123 = arith.constant dense<0.000000e+00> : vector<8x32xf32>
    %361 = tpu.matmul %355, %268, %cst_123 {dimension_numbers = #tpu.dot_dimension_numbers<[1], [0], [0], [1], [0, 0, 1, 1], [], []>} : vector<8x32xf32>, vector<32x32xf32>, vector<8x32xf32> -> vector<8x32xf32>
    %362 = vector.broadcast %269 : vector<1x32xf32> to vector<8x32xf32>
    %363 = arith.addf %361, %362 : vector<8x32xf32>
    %364 = arith.addf %356, %359 : vector<8x32xf32>
    %365 = arith.negf %364 : vector<8x32xf32>
    %366 = math.exp %365 : vector<8x32xf32>
    %cst_124 = arith.constant 1.000000e+00 : f32
    %367 = vector.broadcast %cst_124 : f32 to vector<8x32xf32>
    %368 = arith.addf %367, %366 : vector<8x32xf32>
    %369 = arith.divf %367, %368 : vector<8x32xf32>
    %370 = arith.addf %357, %360 : vector<8x32xf32>
    %371 = arith.negf %370 : vector<8x32xf32>
    %372 = math.exp %371 : vector<8x32xf32>
    %cst_125 = arith.constant 1.000000e+00 : f32
    %373 = vector.broadcast %cst_125 : f32 to vector<8x32xf32>
    %374 = arith.addf %373, %372 : vector<8x32xf32>
    %375 = arith.divf %373, %374 : vector<8x32xf32>
    %376 = arith.mulf %369, %363 : vector<8x32xf32>
    %377 = arith.addf %358, %376 : vector<8x32xf32>
    %378 = math.tanh %377 : vector<8x32xf32>
    %cst_126 = arith.constant 1.000000e+00 : f32
    %379 = vector.broadcast %cst_126 : f32 to vector<8x32xf32>
    %380 = arith.subf %379, %375 : vector<8x32xf32>
    %381 = arith.mulf %380, %378 : vector<8x32xf32>
    %382 = arith.mulf %375, %355 : vector<8x32xf32>
    %383 = arith.addf %381, %382 : vector<8x32xf32>
    %384 = vector.extract_strided_slice %255 {offsets = [32, 0], sizes = [8, 32], strides = [1, 1]} : vector<64x32xf32> to vector<8x32xf32>
    %385 = vector.extract_strided_slice %260 {offsets = [32, 0], sizes = [8, 32], strides = [1, 1]} : vector<64x32xf32> to vector<8x32xf32>
    %386 = vector.extract_strided_slice %265 {offsets = [32, 0], sizes = [8, 32], strides = [1, 1]} : vector<64x32xf32> to vector<8x32xf32>
    %cst_127 = arith.constant dense<0.000000e+00> : vector<8x32xf32>
    %387 = tpu.matmul %383, %266, %cst_127 {dimension_numbers = #tpu.dot_dimension_numbers<[1], [0], [0], [1], [0, 0, 1, 1], [], []>} : vector<8x32xf32>, vector<32x32xf32>, vector<8x32xf32> -> vector<8x32xf32>
    %cst_128 = arith.constant dense<0.000000e+00> : vector<8x32xf32>
    %388 = tpu.matmul %383, %267, %cst_128 {dimension_numbers = #tpu.dot_dimension_numbers<[1], [0], [0], [1], [0, 0, 1, 1], [], []>} : vector<8x32xf32>, vector<32x32xf32>, vector<8x32xf32> -> vector<8x32xf32>
    %cst_129 = arith.constant dense<0.000000e+00> : vector<8x32xf32>
    %389 = tpu.matmul %383, %268, %cst_129 {dimension_numbers = #tpu.dot_dimension_numbers<[1], [0], [0], [1], [0, 0, 1, 1], [], []>} : vector<8x32xf32>, vector<32x32xf32>, vector<8x32xf32> -> vector<8x32xf32>
    %390 = vector.broadcast %269 : vector<1x32xf32> to vector<8x32xf32>
    %391 = arith.addf %389, %390 : vector<8x32xf32>
    %392 = arith.addf %384, %387 : vector<8x32xf32>
    %393 = arith.negf %392 : vector<8x32xf32>
    %394 = math.exp %393 : vector<8x32xf32>
    %cst_130 = arith.constant 1.000000e+00 : f32
    %395 = vector.broadcast %cst_130 : f32 to vector<8x32xf32>
    %396 = arith.addf %395, %394 : vector<8x32xf32>
    %397 = arith.divf %395, %396 : vector<8x32xf32>
    %398 = arith.addf %385, %388 : vector<8x32xf32>
    %399 = arith.negf %398 : vector<8x32xf32>
    %400 = math.exp %399 : vector<8x32xf32>
    %cst_131 = arith.constant 1.000000e+00 : f32
    %401 = vector.broadcast %cst_131 : f32 to vector<8x32xf32>
    %402 = arith.addf %401, %400 : vector<8x32xf32>
    %403 = arith.divf %401, %402 : vector<8x32xf32>
    %404 = arith.mulf %397, %391 : vector<8x32xf32>
    %405 = arith.addf %386, %404 : vector<8x32xf32>
    %406 = math.tanh %405 : vector<8x32xf32>
    %cst_132 = arith.constant 1.000000e+00 : f32
    %407 = vector.broadcast %cst_132 : f32 to vector<8x32xf32>
    %408 = arith.subf %407, %403 : vector<8x32xf32>
    %409 = arith.mulf %408, %406 : vector<8x32xf32>
    %410 = arith.mulf %403, %383 : vector<8x32xf32>
    %411 = arith.addf %409, %410 : vector<8x32xf32>
    %412 = vector.extract_strided_slice %255 {offsets = [40, 0], sizes = [8, 32], strides = [1, 1]} : vector<64x32xf32> to vector<8x32xf32>
    %413 = vector.extract_strided_slice %260 {offsets = [40, 0], sizes = [8, 32], strides = [1, 1]} : vector<64x32xf32> to vector<8x32xf32>
    %414 = vector.extract_strided_slice %265 {offsets = [40, 0], sizes = [8, 32], strides = [1, 1]} : vector<64x32xf32> to vector<8x32xf32>
    %cst_133 = arith.constant dense<0.000000e+00> : vector<8x32xf32>
    %415 = tpu.matmul %411, %266, %cst_133 {dimension_numbers = #tpu.dot_dimension_numbers<[1], [0], [0], [1], [0, 0, 1, 1], [], []>} : vector<8x32xf32>, vector<32x32xf32>, vector<8x32xf32> -> vector<8x32xf32>
    %cst_134 = arith.constant dense<0.000000e+00> : vector<8x32xf32>
    %416 = tpu.matmul %411, %267, %cst_134 {dimension_numbers = #tpu.dot_dimension_numbers<[1], [0], [0], [1], [0, 0, 1, 1], [], []>} : vector<8x32xf32>, vector<32x32xf32>, vector<8x32xf32> -> vector<8x32xf32>
    %cst_135 = arith.constant dense<0.000000e+00> : vector<8x32xf32>
    %417 = tpu.matmul %411, %268, %cst_135 {dimension_numbers = #tpu.dot_dimension_numbers<[1], [0], [0], [1], [0, 0, 1, 1], [], []>} : vector<8x32xf32>, vector<32x32xf32>, vector<8x32xf32> -> vector<8x32xf32>
    %418 = vector.broadcast %269 : vector<1x32xf32> to vector<8x32xf32>
    %419 = arith.addf %417, %418 : vector<8x32xf32>
    %420 = arith.addf %412, %415 : vector<8x32xf32>
    %421 = arith.negf %420 : vector<8x32xf32>
    %422 = math.exp %421 : vector<8x32xf32>
    %cst_136 = arith.constant 1.000000e+00 : f32
    %423 = vector.broadcast %cst_136 : f32 to vector<8x32xf32>
    %424 = arith.addf %423, %422 : vector<8x32xf32>
    %425 = arith.divf %423, %424 : vector<8x32xf32>
    %426 = arith.addf %413, %416 : vector<8x32xf32>
    %427 = arith.negf %426 : vector<8x32xf32>
    %428 = math.exp %427 : vector<8x32xf32>
    %cst_137 = arith.constant 1.000000e+00 : f32
    %429 = vector.broadcast %cst_137 : f32 to vector<8x32xf32>
    %430 = arith.addf %429, %428 : vector<8x32xf32>
    %431 = arith.divf %429, %430 : vector<8x32xf32>
    %432 = arith.mulf %425, %419 : vector<8x32xf32>
    %433 = arith.addf %414, %432 : vector<8x32xf32>
    %434 = math.tanh %433 : vector<8x32xf32>
    %cst_138 = arith.constant 1.000000e+00 : f32
    %435 = vector.broadcast %cst_138 : f32 to vector<8x32xf32>
    %436 = arith.subf %435, %431 : vector<8x32xf32>
    %437 = arith.mulf %436, %434 : vector<8x32xf32>
    %438 = arith.mulf %431, %411 : vector<8x32xf32>
    %439 = arith.addf %437, %438 : vector<8x32xf32>
    %440 = vector.extract_strided_slice %255 {offsets = [48, 0], sizes = [8, 32], strides = [1, 1]} : vector<64x32xf32> to vector<8x32xf32>
    %441 = vector.extract_strided_slice %260 {offsets = [48, 0], sizes = [8, 32], strides = [1, 1]} : vector<64x32xf32> to vector<8x32xf32>
    %442 = vector.extract_strided_slice %265 {offsets = [48, 0], sizes = [8, 32], strides = [1, 1]} : vector<64x32xf32> to vector<8x32xf32>
    %cst_139 = arith.constant dense<0.000000e+00> : vector<8x32xf32>
    %443 = tpu.matmul %439, %266, %cst_139 {dimension_numbers = #tpu.dot_dimension_numbers<[1], [0], [0], [1], [0, 0, 1, 1], [], []>} : vector<8x32xf32>, vector<32x32xf32>, vector<8x32xf32> -> vector<8x32xf32>
    %cst_140 = arith.constant dense<0.000000e+00> : vector<8x32xf32>
    %444 = tpu.matmul %439, %267, %cst_140 {dimension_numbers = #tpu.dot_dimension_numbers<[1], [0], [0], [1], [0, 0, 1, 1], [], []>} : vector<8x32xf32>, vector<32x32xf32>, vector<8x32xf32> -> vector<8x32xf32>
    %cst_141 = arith.constant dense<0.000000e+00> : vector<8x32xf32>
    %445 = tpu.matmul %439, %268, %cst_141 {dimension_numbers = #tpu.dot_dimension_numbers<[1], [0], [0], [1], [0, 0, 1, 1], [], []>} : vector<8x32xf32>, vector<32x32xf32>, vector<8x32xf32> -> vector<8x32xf32>
    %446 = vector.broadcast %269 : vector<1x32xf32> to vector<8x32xf32>
    %447 = arith.addf %445, %446 : vector<8x32xf32>
    %448 = arith.addf %440, %443 : vector<8x32xf32>
    %449 = arith.negf %448 : vector<8x32xf32>
    %450 = math.exp %449 : vector<8x32xf32>
    %cst_142 = arith.constant 1.000000e+00 : f32
    %451 = vector.broadcast %cst_142 : f32 to vector<8x32xf32>
    %452 = arith.addf %451, %450 : vector<8x32xf32>
    %453 = arith.divf %451, %452 : vector<8x32xf32>
    %454 = arith.addf %441, %444 : vector<8x32xf32>
    %455 = arith.negf %454 : vector<8x32xf32>
    %456 = math.exp %455 : vector<8x32xf32>
    %cst_143 = arith.constant 1.000000e+00 : f32
    %457 = vector.broadcast %cst_143 : f32 to vector<8x32xf32>
    %458 = arith.addf %457, %456 : vector<8x32xf32>
    %459 = arith.divf %457, %458 : vector<8x32xf32>
    %460 = arith.mulf %453, %447 : vector<8x32xf32>
    %461 = arith.addf %442, %460 : vector<8x32xf32>
    %462 = math.tanh %461 : vector<8x32xf32>
    %cst_144 = arith.constant 1.000000e+00 : f32
    %463 = vector.broadcast %cst_144 : f32 to vector<8x32xf32>
    %464 = arith.subf %463, %459 : vector<8x32xf32>
    %465 = arith.mulf %464, %462 : vector<8x32xf32>
    %466 = arith.mulf %459, %439 : vector<8x32xf32>
    %467 = arith.addf %465, %466 : vector<8x32xf32>
    %468 = vector.extract_strided_slice %255 {offsets = [56, 0], sizes = [8, 32], strides = [1, 1]} : vector<64x32xf32> to vector<8x32xf32>
    %469 = vector.extract_strided_slice %260 {offsets = [56, 0], sizes = [8, 32], strides = [1, 1]} : vector<64x32xf32> to vector<8x32xf32>
    %470 = vector.extract_strided_slice %265 {offsets = [56, 0], sizes = [8, 32], strides = [1, 1]} : vector<64x32xf32> to vector<8x32xf32>
    %cst_145 = arith.constant dense<0.000000e+00> : vector<8x32xf32>
    %471 = tpu.matmul %467, %266, %cst_145 {dimension_numbers = #tpu.dot_dimension_numbers<[1], [0], [0], [1], [0, 0, 1, 1], [], []>} : vector<8x32xf32>, vector<32x32xf32>, vector<8x32xf32> -> vector<8x32xf32>
    %cst_146 = arith.constant dense<0.000000e+00> : vector<8x32xf32>
    %472 = tpu.matmul %467, %267, %cst_146 {dimension_numbers = #tpu.dot_dimension_numbers<[1], [0], [0], [1], [0, 0, 1, 1], [], []>} : vector<8x32xf32>, vector<32x32xf32>, vector<8x32xf32> -> vector<8x32xf32>
    %cst_147 = arith.constant dense<0.000000e+00> : vector<8x32xf32>
    %473 = tpu.matmul %467, %268, %cst_147 {dimension_numbers = #tpu.dot_dimension_numbers<[1], [0], [0], [1], [0, 0, 1, 1], [], []>} : vector<8x32xf32>, vector<32x32xf32>, vector<8x32xf32> -> vector<8x32xf32>
    %474 = vector.broadcast %269 : vector<1x32xf32> to vector<8x32xf32>
    %475 = arith.addf %473, %474 : vector<8x32xf32>
    %476 = arith.addf %468, %471 : vector<8x32xf32>
    %477 = arith.negf %476 : vector<8x32xf32>
    %478 = math.exp %477 : vector<8x32xf32>
    %cst_148 = arith.constant 1.000000e+00 : f32
    %479 = vector.broadcast %cst_148 : f32 to vector<8x32xf32>
    %480 = arith.addf %479, %478 : vector<8x32xf32>
    %481 = arith.divf %479, %480 : vector<8x32xf32>
    %482 = arith.addf %469, %472 : vector<8x32xf32>
    %483 = arith.negf %482 : vector<8x32xf32>
    %484 = math.exp %483 : vector<8x32xf32>
    %cst_149 = arith.constant 1.000000e+00 : f32
    %485 = vector.broadcast %cst_149 : f32 to vector<8x32xf32>
    %486 = arith.addf %485, %484 : vector<8x32xf32>
    %487 = arith.divf %485, %486 : vector<8x32xf32>
    %488 = arith.mulf %481, %475 : vector<8x32xf32>
    %489 = arith.addf %470, %488 : vector<8x32xf32>
    %490 = math.tanh %489 : vector<8x32xf32>
    %cst_150 = arith.constant 1.000000e+00 : f32
    %491 = vector.broadcast %cst_150 : f32 to vector<8x32xf32>
    %492 = arith.subf %491, %487 : vector<8x32xf32>
    %493 = arith.mulf %492, %490 : vector<8x32xf32>
    %494 = arith.mulf %487, %467 : vector<8x32xf32>
    %495 = arith.addf %493, %494 : vector<8x32xf32>
    %c1_151 = arith.constant 1 : index
    %c0_152 = arith.constant 0 : index
    %c0_153 = arith.constant 0 : index
    %496 = vector.load %arg25[%c1_151, %c0_152, %c0_153] : memref<2x8x32xf32, #tpu.memory_space<vmem>>, vector<1x8x32xf32>
    %497 = vector.shape_cast %496 : vector<1x8x32xf32> to vector<8x32xf32>
    %498 = vector.shape_cast %495 : vector<8x32xf32> to vector<1x8x32xf32>
    tpu.vector_store %arg25[%c1_151, %c0_152, %c0_153], %498 {strides = array<i32>} : memref<2x8x32xf32, #tpu.memory_space<vmem>>, vector<1x8x32xf32>,
    %cst_154 = arith.constant 0.000000e+00 : f32
    %499 = vector.broadcast %cst_154 : f32 to vector<8x32xf32>
    %500 = arith.maximumf %495, %499 : vector<8x32xf32>
    %c0_155 = arith.constant 0 : index
    %c0_156 = arith.constant 0 : index
    %501 = vector.load %arg22[%c0_155, %c0_156] : memref<32x2xf32, #tpu.memory_space<vmem>>, vector<32x2xf32>
    %cst_157 = arith.constant dense<0.000000e+00> : vector<8x2xf32>
    %502 = tpu.matmul %500, %501, %cst_157 {dimension_numbers = #tpu.dot_dimension_numbers<[1], [0], [0], [1], [0, 0, 1, 1], [], []>} : vector<8x32xf32>, vector<32x2xf32>, vector<8x2xf32> -> vector<8x2xf32>
    %c0_158 = arith.constant 0 : index
    %c0_159 = arith.constant 0 : index
    %503 = vector.load %arg23[%c0_158, %c0_159] : memref<1x2xf32, #tpu.memory_space<vmem>>, vector<1x2xf32>
    %504 = vector.broadcast %503 : vector<1x2xf32> to vector<8x2xf32>
    %505 = arith.addf %502, %504 : vector<8x2xf32>
    %cst_160 = arith.constant dense<0xFF800000> : vector<8xf32>
    %506 = vector.multi_reduction <maximumf>, %505, %cst_160 [1] : vector<8x2xf32> to vector<8xf32>
    %507 = vector.shape_cast %506 : vector<8xf32> to vector<8x1xf32>
    %508 = vector.broadcast %507 : vector<8x1xf32> to vector<8x2xf32>
    %509 = arith.subf %505, %508 : vector<8x2xf32>
    %510 = math.exp %509 : vector<8x2xf32>
    %cst_161 = arith.constant dense<0.000000e+00> : vector<8xf32>
    %511 = vector.multi_reduction <add>, %510, %cst_161 [1] : vector<8x2xf32> to vector<8xf32>
    %512 = vector.shape_cast %511 : vector<8xf32> to vector<8x1xf32>
    %513 = math.log %512 : vector<8x1xf32>
    %514 = vector.broadcast %513 : vector<8x1xf32> to vector<8x2xf32>
    %515 = arith.subf %509, %514 : vector<8x2xf32>
    %c0_162 = arith.constant 0 : index
    %c0_163 = arith.constant 0 : index
    %516 = vector.load %arg24[%c0_162, %c0_163] : memref<8x2xf32, #tpu.memory_space<vmem>>, vector<8x2xf32>
    tpu.vector_store %arg24[%c0_162, %c0_163], %515 {strides = array<i32>} : memref<8x2xf32, #tpu.memory_space<vmem>>, vector<8x2xf32>,
    return
  }
}

</mosaic_0001>

<llo_original>
// kernel: tpu_custom_call.1
$region0: #{tpu_custom_call.1}
  #allocation0 [shape = 'u32[]', space=smem, size = 0x4, offset = 0x4, fixed_abs, tag = 'smem constant byte address 0x4 - core index']
  #allocation1 [shape = 'u32[144,128]{1,0:T(1,128)}', space=vmem, size = 0x12000, scoped, tag = 'internal scratch']
  %s0 = inlined_call_operand.hbm [shape: f32[8,8,16], index: 0, kind: input, shape index: {}]
  %s1 = inlined_call_operand.hbm [shape: f32[2,8,32], index: 1, kind: input, shape index: {}]
  %s2 = inlined_call_operand.hbm [shape: f32[16,32], index: 2, kind: input, shape index: {}]
  %s3 = inlined_call_operand.hbm [shape: f32[16,32], index: 3, kind: input, shape index: {}]
  %s4 = inlined_call_operand.hbm [shape: f32[16,32], index: 4, kind: input, shape index: {}]
  %s5 = inlined_call_operand.vmem [shape: f32[32,32], index: 5, kind: input, shape index: {}]
  %s6 = inlined_call_operand.hbm [shape: f32[32,32], index: 6, kind: input, shape index: {}]
  %s7 = inlined_call_operand.hbm [shape: f32[32,32], index: 7, kind: input, shape index: {}]
  %s8 = inlined_call_operand.hbm [shape: f32[1,32], index: 8, kind: input, shape index: {}]
  %s9 = inlined_call_operand.hbm [shape: f32[1,32], index: 9, kind: input, shape index: {}]
  %s10 = inlined_call_operand.hbm [shape: f32[1,32], index: 10, kind: input, shape index: {}]
  %s11 = inlined_call_operand.hbm [shape: f32[1,32], index: 11, kind: input, shape index: {}]
  %s12 = inlined_call_operand.hbm [shape: f32[32,32], index: 12, kind: input, shape index: {}]
  %s13 = inlined_call_operand.hbm [shape: f32[32,32], index: 13, kind: input, shape index: {}]
  %s14 = inlined_call_operand.hbm [shape: f32[32,32], index: 14, kind: input, shape index: {}]
  %s15 = inlined_call_operand.hbm [shape: f32[32,32], index: 15, kind: input, shape index: {}]
  %s16 = inlined_call_operand.hbm [shape: f32[32,32], index: 16, kind: input, shape index: {}]
  %s17 = inlined_call_operand.vmem [shape: f32[32,32], index: 17, kind: input, shape index: {}]
  %s18 = inlined_call_operand.hbm [shape: f32[1,32], index: 18, kind: input, shape index: {}]
  %s19 = inlined_call_operand.vmem [shape: f32[1,32], index: 19, kind: input, shape index: {}]
  %s20 = inlined_call_operand.vmem [shape: f32[1,32], index: 20, kind: input, shape index: {}]
  %s21 = inlined_call_operand.vmem [shape: f32[1,32], index: 21, kind: input, shape index: {}]
  %s22 = inlined_call_operand.vmem [shape: f32[32,2], index: 22, kind: input, shape index: {}]
  %s23 = inlined_call_operand.vmem [shape: f32[1,2], index: 23, kind: input, shape index: {}]
  %s24 = inlined_call_operand.vmem [shape: f32[8,2], index: 24, kind: output, shape index: {0}]
  %s25 = inlined_call_operand.hbm [shape: f32[2,8,32], index: 25, kind: output, shape index: {1}]
  %26 = xla_tuple %s24, %s25
  %s27 = sld [smem:[#allocation0]]
  $region182: #{tpu_custom_call.1} parent=0
    _
  %s29 = ssub.s32 1, %s27
  %s30 = scalar_select 0, %s29, %s27
  $region1: #{tpu_custom_call.1} parent=0
    #allocation2 [shape = 'u8[32768]{0}', space=vmem, size = 0x8000, scoped, tag = 'input window, operand 0, single buffered']
    #allocation3 [shape = 's32[1]{0}', space=sflag, size = 0x4, scoped, tag = 'scoped memory for tpu_custom_call.1']
    #allocation4 [shape = 's32[1]{0}', space=sflag, size = 0x4, scoped, tag = 'scoped memory for tpu_custom_call.1']
    #allocation5 [shape = 'u8[8192]{0}', space=vmem, size = 0x2000, scoped, tag = 'input window, operand 1, single buffered']
    #allocation6 [shape = 's32[1]{0}', space=sflag, size = 0x4, scoped, tag = 'scoped memory for tpu_custom_call.1']
    #allocation7 [shape = 'u8[8192]{0}', space=vmem, size = 0x2000, scoped, tag = 'input window, operand 2, single buffered']
    #allocation8 [shape = 'u8[8192]{0}', space=vmem, size = 0x2000, scoped, tag = 'input window, operand 3, single buffered']
    #allocation9 [shape = 's32[1]{0}', space=sflag, size = 0x4, scoped, tag = 'scoped memory for tpu_custom_call.1']
    #allocation10 [shape = 'u8[8192]{0}', space=vmem, size = 0x2000, scoped, tag = 'input window, operand 4, single buffered']
    #allocation11 [shape = 'u8[16384]{0}', space=vmem, size = 0x4000, scoped, tag = 'input window, operand 6, single buffered']
    #allocation12 [shape = 's32[1]{0}', space=sflag, size = 0x4, scoped, tag = 'scoped memory for tpu_custom_call.1']
    #allocation13 [shape = 'u8[16384]{0}', space=vmem, size = 0x4000, scoped, tag = 'input window, operand 7, single buffered']
    #allocation14 [shape = 'u8[512]{0}', space=vmem, size = 0x400, scoped, tag = 'input window, operand 8, single buffered']
    #allocation15 [shape = 's32[1]{0}', space=sflag, size = 0x4, scoped, tag = 'scoped memory for tpu_custom_call.1']
    #allocation16 [shape = 'u8[512]{0}', space=vmem, size = 0x400, scoped, tag = 'input window, operand 9, single buffered']
    #allocation17 [shape = 'u8[512]{0}', space=vmem, size = 0x400, scoped, tag = 'input window, operand 10, single buffered']
    #allocation18 [shape = 's32[1]{0}', space=sflag, size = 0x4, scoped, tag = 'scoped memory for tpu_custom_call.1']
    #allocation19 [shape = 'u8[512]{0}', space=vmem, size = 0x400, scoped, tag = 'input window, operand 11, single buffered']
    #allocation20 [shape = 'u8[16384]{0}', space=vmem, size = 0x4000, scoped, tag = 'input window, operand 12, single buffered']
    #allocation21 [shape = 's32[1]{0}', space=sflag, size = 0x4, scoped, tag = 'scoped memory for tpu_custom_call.1']
    #allocation22 [shape = 'u8[16384]{0}', space=vmem, size = 0x4000, scoped, tag = 'input window, operand 13, single buffered']
    #allocation23 [shape = 'u8[16384]{0}', space=vmem, size = 0x4000, scoped, tag = 'input window, operand 14, single buffered']
    #allocation24 [shape = 's32[1]{0}', space=sflag, size = 0x4, scoped, tag = 'scoped memory for tpu_custom_call.1']
    #allocation25 [shape = 'u8[16384]{0}', space=vmem, size = 0x4000, scoped, tag = 'input window, operand 15, single buffered']
    #allocation26 [shape = 'u8[16384]{0}', space=vmem, size = 0x4000, scoped, tag = 'input window, operand 16, single buffered']
    #allocation27 [shape = 's32[1]{0}', space=sflag, size = 0x4, scoped, tag = 'scoped memory for tpu_custom_call.1']
    #allocation28 [shape = 'u8[512]{0}', space=vmem, size = 0x400, scoped, tag = 'input window, operand 18, single buffered']
    #allocation29 [shape = 'u8[8192]{0}', space=vmem, size = 0x2000, scoped, tag = 'output window, operand 1, single buffered']
    %31 = vsyncpa [#allocation3], 0
    %32 = vsyncpa [#allocation6], 0
    %33 = vsyncpa [#allocation9], 0
    %34 = vsyncpa [#allocation12], 0
    %35 = vsyncpa [#allocation15], 0
    %36 = vsyncpa [#allocation18], 0
    %37 = vsyncpa [#allocation21], 0
    %38 = vsyncpa [#allocation24], 0
    %39 = vsyncpa [#allocation27], 0
    %40 = vsyncpa [#allocation4], 0
    // Predicated region
    $region2: #{tpu_custom_call.1} parent=1 // pred_check
      _
    $region3: #{tpu_custom_call.1} parent=1 // pred_check_branch
      %42 = sbr.rel (0) target = $region5
    $region4: #{tpu_custom_call.1} parent=1 // pred_region
      %s44 = ssub.s32 1024, 1024
      %45 = vsyncadd [#allocation3], %s44
      %s46 = sshll.u32 [#allocation2], 4
      %s47 = int_to_ptr.vmem [resolvable:$true] %s46
      %52 = dma.hbm_to_vmem [thread:$0]  %s0, 1024, %s47, [#allocation3], 128, 128, 8
    $region5: #{tpu_custom_call.1} parent=1 // pred_fallthru
      _
    // Predicated region
    $region6: #{tpu_custom_call.1} parent=1 // pred_check
      _
    $region7: #{tpu_custom_call.1} parent=1 // pred_check_branch
      %54 = sbr.rel (0) target = $region9
    $region8: #{tpu_custom_call.1} parent=1 // pred_region
      %s56 = ssub.s32 256, 256
      %57 = vsyncadd [#allocation6], %s56
      %s58 = sshll.u32 [#allocation5], 4
      %s59 = int_to_ptr.vmem [resolvable:$true] %s58
      %64 = dma.hbm_to_vmem [thread:$0]  %s1, 256, %s59, [#allocation6], 128, 128, 8
    $region9: #{tpu_custom_call.1} parent=1 // pred_fallthru
      _
    // Predicated region
    $region10: #{tpu_custom_call.1} parent=1 // pred_check
      _
    $region11: #{tpu_custom_call.1} parent=1 // pred_check_branch
      %66 = sbr.rel (0) target = $region13
    $region12: #{tpu_custom_call.1} parent=1 // pred_region
      %s68 = ssub.s32 256, 256
      %69 = vsyncadd [#allocation6], %s68
      %s70 = sshll.u32 [#allocation7], 4
      %s71 = int_to_ptr.vmem [resolvable:$true] %s70
      %76 = dma.hbm_to_vmem [thread:$0]  %s2, 256, %s71, [#allocation6], 128, 128, 8
    $region13: #{tpu_custom_call.1} parent=1 // pred_fallthru
      _
    // Predicated region
    $region14: #{tpu_custom_call.1} parent=1 // pred_check
      _
    $region15: #{tpu_custom_call.1} parent=1 // pred_check_branch
      %78 = sbr.rel (0) target = $region17
    $region16: #{tpu_custom_call.1} parent=1 // pred_region
      %s80 = ssub.s32 256, 256
      %81 = vsyncadd [#allocation9], %s80
      %s82 = sshll.u32 [#allocation8], 4
      %s83 = int_to_ptr.vmem [resolvable:$true] %s82
      %88 = dma.hbm_to_vmem [thread:$0]  %s3, 256, %s83, [#allocation9], 128, 128, 8
    $region17: #{tpu_custom_call.1} parent=1 // pred_fallthru
      _
    // Predicated region
    $region18: #{tpu_custom_call.1} parent=1 // pred_check
      _
    $region19: #{tpu_custom_call.1} parent=1 // pred_check_branch
      %90 = sbr.rel (0) target = $region21
    $region20: #{tpu_custom_call.1} parent=1 // pred_region
      %s92 = ssub.s32 256, 256
      %93 = vsyncadd [#allocation9], %s92
      %s94 = sshll.u32 [#allocation10], 4
      %s95 = int_to_ptr.vmem [resolvable:$true] %s94
      %100 = dma.hbm_to_vmem [thread:$0]  %s4, 256, %s95, [#allocation9], 128, 128, 8
    $region21: #{tpu_custom_call.1} parent=1 // pred_fallthru
      _
    // Predicated region
    $region22: #{tpu_custom_call.1} parent=1 // pred_check
      _
    $region23: #{tpu_custom_call.1} parent=1 // pred_check_branch
      %102 = sbr.rel (0) target = $region25
    $region24: #{tpu_custom_call.1} parent=1 // pred_region
      _
    $region25: #{tpu_custom_call.1} parent=1 // pred_fallthru
      _
    // Predicated region
    $region26: #{tpu_custom_call.1} parent=1 // pred_check
      _
    $region27: #{tpu_custom_call.1} parent=1 // pred_check_branch
      %104 = sbr.rel (0) target = $region29
    $region28: #{tpu_custom_call.1} parent=1 // pred_region
      %s106 = ssub.s32 512, 512
      %107 = vsyncadd [#allocation12], %s106
      %s108 = sshll.u32 [#allocation11], 4
      %s109 = int_to_ptr.vmem [resolvable:$true] %s108
      %114 = dma.hbm_to_vmem [thread:$0]  %s6, 512, %s109, [#allocation12], 128, 128, 8
    $region29: #{tpu_custom_call.1} parent=1 // pred_fallthru
      _
    // Predicated region
    $region30: #{tpu_custom_call.1} parent=1 // pred_check
      _
    $region31: #{tpu_custom_call.1} parent=1 // pred_check_branch
      %116 = sbr.rel (0) target = $region33
    $region32: #{tpu_custom_call.1} parent=1 // pred_region
      %s118 = ssub.s32 512, 512
      %119 = vsyncadd [#allocation12], %s118
      %s120 = sshll.u32 [#allocation13], 4
      %s121 = int_to_ptr.vmem [resolvable:$true] %s120
      %126 = dma.hbm_to_vmem [thread:$0]  %s7, 512, %s121, [#allocation12], 128, 128, 8
    $region33: #{tpu_custom_call.1} parent=1 // pred_fallthru
      _
    // Predicated region
    $region34: #{tpu_custom_call.1} parent=1 // pred_check
      _
    $region35: #{tpu_custom_call.1} parent=1 // pred_check_branch
      %128 = sbr.rel (0) target = $region37
    $region36: #{tpu_custom_call.1} parent=1 // pred_region
      %s130 = ssub.s32 16, 16
      %131 = vsyncadd [#allocation15], %s130
      %s133 = sshll.u32 [#allocation14], 4
      %s134 = int_to_ptr.vmem [resolvable:$true] %s133
      %136 = dma.hbm_to_vmem [thread:$0]  %s8, 16, %s134, [#allocation15]
    $region37: #{tpu_custom_call.1} parent=1 // pred_fallthru
      _
    // Predicated region
    $region38: #{tpu_custom_call.1} parent=1 // pred_check
      _
    $region39: #{tpu_custom_call.1} parent=1 // pred_check_branch
      %138 = sbr.rel (0) target = $region41
    $region40: #{tpu_custom_call.1} parent=1 // pred_region
      %s140 = ssub.s32 16, 16
      %141 = vsyncadd [#allocation15], %s140
      %s143 = sshll.u32 [#allocation16], 4
      %s144 = int_to_ptr.vmem [resolvable:$true] %s143
      %146 = dma.hbm_to_vmem [thread:$0]  %s9, 16, %s144, [#allocation15]
    $region41: #{tpu_custom_call.1} parent=1 // pred_fallthru
      _
    // Predicated region
    $region42: #{tpu_custom_call.1} parent=1 // pred_check
      _
    $region43: #{tpu_custom_call.1} parent=1 // pred_check_branch
      %148 = sbr.rel (0) target = $region45
    $region44: #{tpu_custom_call.1} parent=1 // pred_region
      %s150 = ssub.s32 16, 16
      %151 = vsyncadd [#allocation18], %s150
      %s153 = sshll.u32 [#allocation17], 4
      %s154 = int_to_ptr.vmem [resolvable:$true] %s153
      %156 = dma.hbm_to_vmem [thread:$0]  %s10, 16, %s154, [#allocation18]
    $region45: #{tpu_custom_call.1} parent=1 // pred_fallthru
      _
    // Predicated region
    $region46: #{tpu_custom_call.1} parent=1 // pred_check
      _
    $region47: #{tpu_custom_call.1} parent=1 // pred_check_branch
      %158 = sbr.rel (0) target = $region49
    $region48: #{tpu_custom_call.1} parent=1 // pred_region
      %s160 = ssub.s32 16, 16
      %161 = vsyncadd [#allocation18], %s160
      %s163 = sshll.u32 [#allocation19], 4
      %s164 = int_to_ptr.vmem [resolvable:$true] %s163
      %166 = dma.hbm_to_vmem [thread:$0]  %s11, 16, %s164, [#allocation18]
    $region49: #{tpu_custom_call.1} parent=1 // pred_fallthru
      _
    // Predicated region
    $region50: #{tpu_custom_call.1} parent=1 // pred_check
      _
    $region51: #{tpu_custom_call.1} parent=1 // pred_check_branch
      %168 = sbr.rel (0) target = $region53
    $region52: #{tpu_custom_call.1} parent=1 // pred_region
      %s170 = ssub.s32 512, 512
      %171 = vsyncadd [#allocation21], %s170
      %s172 = sshll.u32 [#allocation20], 4
      %s173 = int_to_ptr.vmem [resolvable:$true] %s172
      %178 = dma.hbm_to_vmem [thread:$0]  %s12, 512, %s173, [#allocation21], 128, 128, 8
    $region53: #{tpu_custom_call.1} parent=1 // pred_fallthru
      _
    // Predicated region
    $region54: #{tpu_custom_call.1} parent=1 // pred_check
      _
    $region55: #{tpu_custom_call.1} parent=1 // pred_check_branch
      %180 = sbr.rel (0) target = $region57
    $region56: #{tpu_custom_call.1} parent=1 // pred_region
      %s182 = ssub.s32 512, 512
      %183 = vsyncadd [#allocation21], %s182
      %s184 = sshll.u32 [#allocation22], 4
      %s185 = int_to_ptr.vmem [resolvable:$true] %s184
      %190 = dma.hbm_to_vmem [thread:$0]  %s13, 512, %s185, [#allocation21], 128, 128, 8
    $region57: #{tpu_custom_call.1} parent=1 // pred_fallthru
      _
    // Predicated region
    $region58: #{tpu_custom_call.1} parent=1 // pred_check
      _
    $region59: #{tpu_custom_call.1} parent=1 // pred_check_branch
      %192 = sbr.rel (0) target = $region61
    $region60: #{tpu_custom_call.1} parent=1 // pred_region
      %s194 = ssub.s32 512, 512
      %195 = vsyncadd [#allocation24], %s194
      %s196 = sshll.u32 [#allocation23], 4
      %s197 = int_to_ptr.vmem [resolvable:$true] %s196
      %202 = dma.hbm_to_vmem [thread:$0]  %s14, 512, %s197, [#allocation24], 128, 128, 8
    $region61: #{tpu_custom_call.1} parent=1 // pred_fallthru
      _
    // Predicated region
    $region62: #{tpu_custom_call.1} parent=1 // pred_check
      _
    $region63: #{tpu_custom_call.1} parent=1 // pred_check_branch
      %204 = sbr.rel (0) target = $region65
    $region64: #{tpu_custom_call.1} parent=1 // pred_region
      %s206 = ssub.s32 512, 512
      %207 = vsyncadd [#allocation24], %s206
      %s208 = sshll.u32 [#allocation25], 4
      %s209 = int_to_ptr.vmem [resolvable:$true] %s208
      %214 = dma.hbm_to_vmem [thread:$0]  %s15, 512, %s209, [#allocation24], 128, 128, 8
    $region65: #{tpu_custom_call.1} parent=1 // pred_fallthru
      _
    // Predicated region
    $region66: #{tpu_custom_call.1} parent=1 // pred_check
      _
    $region67: #{tpu_custom_call.1} parent=1 // pred_check_branch
      %216 = sbr.rel (0) target = $region69
    $region68: #{tpu_custom_call.1} parent=1 // pred_region
      %s218 = ssub.s32 512, 512
      %219 = vsyncadd [#allocation27], %s218
      %s220 = sshll.u32 [#allocation26], 4
      %s221 = int_to_ptr.vmem [resolvable:$true] %s220
      %226 = dma.hbm_to_vmem [thread:$0]  %s16, 512, %s221, [#allocation27], 128, 128, 8
    $region69: #{tpu_custom_call.1} parent=1 // pred_fallthru
      _
    // Predicated region
    $region70: #{tpu_custom_call.1} parent=1 // pred_check
      _
    $region71: #{tpu_custom_call.1} parent=1 // pred_check_branch
      %228 = sbr.rel (0) target = $region73
    $region72: #{tpu_custom_call.1} parent=1 // pred_region
      _
    $region73: #{tpu_custom_call.1} parent=1 // pred_fallthru
      _
    // Predicated region
    $region74: #{tpu_custom_call.1} parent=1 // pred_check
      _
    $region75: #{tpu_custom_call.1} parent=1 // pred_check_branch
      %230 = sbr.rel (0) target = $region77
    $region76: #{tpu_custom_call.1} parent=1 // pred_region
      %s232 = ssub.s32 16, 16
      %233 = vsyncadd [#allocation27], %s232
      %s235 = sshll.u32 [#allocation28], 4
      %s236 = int_to_ptr.vmem [resolvable:$true] %s235
      %238 = dma.hbm_to_vmem [thread:$0]  %s18, 16, %s236, [#allocation27]
    $region77: #{tpu_custom_call.1} parent=1 // pred_fallthru
      _
    // Predicated region
    $region78: #{tpu_custom_call.1} parent=1 // pred_check
      _
    $region79: #{tpu_custom_call.1} parent=1 // pred_check_branch
      %240 = sbr.rel (0) target = $region81
    $region80: #{tpu_custom_call.1} parent=1 // pred_region
      _
    $region81: #{tpu_custom_call.1} parent=1 // pred_fallthru
      _
    // Predicated region
    $region82: #{tpu_custom_call.1} parent=1 // pred_check
      _
    $region83: #{tpu_custom_call.1} parent=1 // pred_check_branch
      %242 = sbr.rel (0) target = $region85
    $region84: #{tpu_custom_call.1} parent=1 // pred_region
      _
    $region85: #{tpu_custom_call.1} parent=1 // pred_fallthru
      _
    // Predicated region
    $region86: #{tpu_custom_call.1} parent=1 // pred_check
      _
    $region87: #{tpu_custom_call.1} parent=1 // pred_check_branch
      %244 = sbr.rel (0) target = $region89
    $region88: #{tpu_custom_call.1} parent=1 // pred_region
      _
    $region89: #{tpu_custom_call.1} parent=1 // pred_fallthru
      _
    // Predicated region
    $region90: #{tpu_custom_call.1} parent=1 // pred_check
      _
    $region91: #{tpu_custom_call.1} parent=1 // pred_check_branch
      %246 = sbr.rel (0) target = $region93
    $region92: #{tpu_custom_call.1} parent=1 // pred_region
      _
    $region93: #{tpu_custom_call.1} parent=1 // pred_fallthru
      _
    // Predicated region
    $region94: #{tpu_custom_call.1} parent=1 // pred_check
      _
    $region95: #{tpu_custom_call.1} parent=1 // pred_check_branch
      %248 = sbr.rel (0) target = $region97
    $region96: #{tpu_custom_call.1} parent=1 // pred_region
      _
    $region97: #{tpu_custom_call.1} parent=1 // pred_fallthru
      _
    // Predicated region
    $region98: #{tpu_custom_call.1} parent=1 // pred_check
      _
    $region99: #{tpu_custom_call.1} parent=1 // pred_check_branch
      %250 = sbr.rel (0) target = $region101
    $region100: #{tpu_custom_call.1} parent=1 // pred_region
      %251 = dma.done [#allocation3], 1024
    $region101: #{tpu_custom_call.1} parent=1 // pred_fallthru
      _
    // Predicated region
    $region102: #{tpu_custom_call.1} parent=1 // pred_check
      _
    $region103: #{tpu_custom_call.1} parent=1 // pred_check_branch
      %253 = sbr.rel (0) target = $region105
    $region104: #{tpu_custom_call.1} parent=1 // pred_region
      %254 = dma.done [#allocation6], 256
    $region105: #{tpu_custom_call.1} parent=1 // pred_fallthru
      _
    // Predicated region
    $region106: #{tpu_custom_call.1} parent=1 // pred_check
      _
    $region107: #{tpu_custom_call.1} parent=1 // pred_check_branch
      %256 = sbr.rel (0) target = $region109
    $region108: #{tpu_custom_call.1} parent=1 // pred_region
      %257 = dma.done [#allocation6], 256
    $region109: #{tpu_custom_call.1} parent=1 // pred_fallthru
      _
    // Predicated region
    $region110: #{tpu_custom_call.1} parent=1 // pred_check
      _
    $region111: #{tpu_custom_call.1} parent=1 // pred_check_branch
      %259 = sbr.rel (0) target = $region113
    $region112: #{tpu_custom_call.1} parent=1 // pred_region
      %260 = dma.done [#allocation9], 256
    $region113: #{tpu_custom_call.1} parent=1 // pred_fallthru
      _
    // Predicated region
    $region114: #{tpu_custom_call.1} parent=1 // pred_check
      _
    $region115: #{tpu_custom_call.1} parent=1 // pred_check_branch
      %262 = sbr.rel (0) target = $region117
    $region116: #{tpu_custom_call.1} parent=1 // pred_region
      %263 = dma.done [#allocation9], 256
    $region117: #{tpu_custom_call.1} parent=1 // pred_fallthru
      _
    // Predicated region
    $region118: #{tpu_custom_call.1} parent=1 // pred_check
      _
    $region119: #{tpu_custom_call.1} parent=1 // pred_check_branch
      %265 = sbr.rel (0) target = $region121
    $region120: #{tpu_custom_call.1} parent=1 // pred_region
      %266 = dma.done [#allocation12], 512
    $region121: #{tpu_custom_call.1} parent=1 // pred_fallthru
      _
    // Predicated region
    $region122: #{tpu_custom_call.1} parent=1 // pred_check
      _
    $region123: #{tpu_custom_call.1} parent=1 // pred_check_branch
      %268 = sbr.rel (0) target = $region125
    $region124: #{tpu_custom_call.1} parent=1 // pred_region
      %269 = dma.done [#allocation12], 512
    $region125: #{tpu_custom_call.1} parent=1 // pred_fallthru
      _
    // Predicated region
    $region126: #{tpu_custom_call.1} parent=1 // pred_check
      _
    $region127: #{tpu_custom_call.1} parent=1 // pred_check_branch
      %271 = sbr.rel (0) target = $region129
    $region128: #{tpu_custom_call.1} parent=1 // pred_region
      %272 = dma.done [#allocation15], 16
    $region129: #{tpu_custom_call.1} parent=1 // pred_fallthru
      _
    // Predicated region
    $region130: #{tpu_custom_call.1} parent=1 // pred_check
      _
    $region131: #{tpu_custom_call.1} parent=1 // pred_check_branch
      %274 = sbr.rel (0) target = $region133
    $region132: #{tpu_custom_call.1} parent=1 // pred_region
      %275 = dma.done [#allocation15], 16
    $region133: #{tpu_custom_call.1} parent=1 // pred_fallthru
      _
    // Predicated region
    $region134: #{tpu_custom_call.1} parent=1 // pred_check
      _
    $region135: #{tpu_custom_call.1} parent=1 // pred_check_branch
      %277 = sbr.rel (0) target = $region137
    $region136: #{tpu_custom_call.1} parent=1 // pred_region
      %278 = dma.done [#allocation18], 16
    $region137: #{tpu_custom_call.1} parent=1 // pred_fallthru
      _
    // Predicated region
    $region138: #{tpu_custom_call.1} parent=1 // pred_check
      _
    $region139: #{tpu_custom_call.1} parent=1 // pred_check_branch
      %280 = sbr.rel (0) target = $region141
    $region140: #{tpu_custom_call.1} parent=1 // pred_region
      %281 = dma.done [#allocation18], 16
    $region141: #{tpu_custom_call.1} parent=1 // pred_fallthru
      _
    // Predicated region
    $region142: #{tpu_custom_call.1} parent=1 // pred_check
      _
    $region143: #{tpu_custom_call.1} parent=1 // pred_check_branch
      %283 = sbr.rel (0) target = $region145
    $region144: #{tpu_custom_call.1} parent=1 // pred_region
      %284 = dma.done [#allocation21], 512
    $region145: #{tpu_custom_call.1} parent=1 // pred_fallthru
      _
    // Predicated region
    $region146: #{tpu_custom_call.1} parent=1 // pred_check
      _
    $region147: #{tpu_custom_call.1} parent=1 // pred_check_branch
      %286 = sbr.rel (0) target = $region149
    $region148: #{tpu_custom_call.1} parent=1 // pred_region
      %287 = dma.done [#allocation21], 512
    $region149: #{tpu_custom_call.1} parent=1 // pred_fallthru
      _
    // Predicated region
    $region150: #{tpu_custom_call.1} parent=1 // pred_check
      _
    $region151: #{tpu_custom_call.1} parent=1 // pred_check_branch
      %289 = sbr.rel (0) target = $region153
    $region152: #{tpu_custom_call.1} parent=1 // pred_region
      %290 = dma.done [#allocation24], 512
    $region153: #{tpu_custom_call.1} parent=1 // pred_fallthru
      _
    // Predicated region
    $region154: #{tpu_custom_call.1} parent=1 // pred_check
      _
    $region155: #{tpu_custom_call.1} parent=1 // pred_check_branch
      %292 = sbr.rel (0) target = $region157
    $region156: #{tpu_custom_call.1} parent=1 // pred_region
      %293 = dma.done [#allocation24], 512
    $region157: #{tpu_custom_call.1} parent=1 // pred_fallthru
      _
    // Predicated region
    $region158: #{tpu_custom_call.1} parent=1 // pred_check
      _
    $region159: #{tpu_custom_call.1} parent=1 // pred_check_branch
      %295 = sbr.rel (0) target = $region161
    $region160: #{tpu_custom_call.1} parent=1 // pred_region
      %296 = dma.done [#allocation27], 512
    $region161: #{tpu_custom_call.1} parent=1 // pred_fallthru
      _
    // Predicated region
    $region162: #{tpu_custom_call.1} parent=1 // pred_check
      _
    $region163: #{tpu_custom_call.1} parent=1 // pred_check_branch
      %298 = sbr.rel (0) target = $region165
    $region164: #{tpu_custom_call.1} parent=1 // pred_region
      %299 = dma.done [#allocation27], 16
    $region165: #{tpu_custom_call.1} parent=1 // pred_fallthru
      _
    %v300 = vld [vmem:[#allocation2] sm:$0xff]
    %v301 = vld [vmem:[#allocation2 + $0x8] sm:$0xff]
    %v302 = vld [vmem:[#allocation2 + $0x10] sm:$0xff]
    %v303 = vld [vmem:[#allocation2 + $0x18] sm:$0xff]
    %v304 = vld [vmem:[#allocation2 + $0x20] sm:$0xff]
    %v305 = vld [vmem:[#allocation2 + $0x28] sm:$0xff]
    %v306 = vld [vmem:[#allocation2 + $0x30] sm:$0xff]
    %v307 = vld [vmem:[#allocation2 + $0x38] sm:$0xff]
    %v308 = vld [vmem:[#allocation7] sm:$0xff]
    %v309 = vld [vmem:[#allocation7 + $0x8] sm:$0xff]
    %v310 = vld [vmem:[#allocation14] sm:$0x1]
    %v312 = vlaneseq
    %v313 = vshrl.u32 %v312, 7
    %v314 = vsub.s32 0, %v313
    %v315 = vrot.slane %v310, %v314
    %vm317 = vcmask 130048
    %v319 = vsel %vm317, %v300, 0
    %v322 = vsel %vm317, %v301, 0
    %v325 = vsel %vm317, %v302, 0
    %v328 = vsel %vm317, %v303, 0
    %v331 = vsel %vm317, %v304, 0
    %v334 = vsel %vm317, %v305, 0
    %v337 = vsel %vm317, %v306, 0
    %v340 = vsel %vm317, %v307, 0
    %342 = vmatprep.subr.mxu0 0.0
    %343 = vmatpush1.msra.mxu0 0.0
    %344 = vmatprep.subr.mxu0 0.0
    %345 = vmatpush1.msra.mxu0 0.0
    %346 = vmatprep.subr.mxu0 0.0
    %347 = vmatpush1.msra.mxu0 0.0
    %348 = vmatprep.subr.mxu0 0.0
    %349 = vmatpush1.msra.mxu0 0.0
    %350 = vmatprep.subr.mxu0 0.0
    %351 = vmatpush1.msra.mxu0 0.0
    %352 = vmatprep.subr.mxu0 0.0
    %353 = vmatpush1.msra.mxu0 0.0
    %354 = vmatprep.subr.mxu0 0.0
    %355 = vmatpush1.msra.mxu0 0.0
    %356 = vmatprep.subr.mxu0 0.0
    %357 = vmatpush1.msra.mxu0 0.0
    %358 = vmatprep.subr.mxu0 0.0
    %359 = vmatpush1.msra.mxu0 0.0
    %360 = vmatprep.subr.mxu0 0.0
    %361 = vmatpush1.msra.mxu0 0.0
    %362 = vmatprep.subr.mxu0 0.0
    %363 = vmatpush1.msra.mxu0 0.0
    %364 = vmatprep.subr.mxu0 0.0
    %365 = vmatpush1.msra.mxu0 0.0
    %366 = vmatprep.subr.mxu0 0.0
    %367 = vmatpush1.msra.mxu0 0.0
    %368 = vmatprep.subr.mxu0 0.0
    %369 = vmatpush1.msra.mxu0 0.0
    %370 = vmatprep.subr.mxu0 0.0
    %371 = vmatpush1.msra.mxu0 %v309
    %372 = vmatprep.subr.mxu0 0.0
    %373 = vmatpush1.msra.mxu0 %v308
    %374 = vmatprep.subr.mxu0 0.0
    %375 = vmatpush2.msra.mxu0 0.0
    %376 = vmatprep.subr.mxu0 0.0
    %377 = vmatpush2.msra.mxu0 0.0
    %378 = vmatprep.subr.mxu0 0.0
    %379 = vmatpush2.msra.mxu0 0.0
    %380 = vmatprep.subr.mxu0 0.0
    %381 = vmatpush2.msra.mxu0 0.0
    %382 = vmatprep.subr.mxu0 0.0
    %383 = vmatpush2.msra.mxu0 0.0
    %384 = vmatprep.subr.mxu0 0.0
    %385 = vmatpush2.msra.mxu0 0.0
    %386 = vmatprep.subr.mxu0 0.0
    %387 = vmatpush2.msra.mxu0 0.0
    %388 = vmatprep.subr.mxu0 0.0
    %389 = vmatpush2.msra.mxu0 0.0
    %390 = vmatprep.subr.mxu0 0.0
    %391 = vmatpush2.msra.mxu0 0.0
    %392 = vmatprep.subr.mxu0 0.0
    %393 = vmatpush2.msra.mxu0 0.0
    %394 = vmatprep.subr.mxu0 0.0
    %395 = vmatpush2.msra.mxu0 0.0
    %396 = vmatprep.subr.mxu0 0.0
    %397 = vmatpush2.msra.mxu0 0.0
    %398 = vmatprep.subr.mxu0 0.0
    %399 = vmatpush2.msra.mxu0 0.0
    %400 = vmatprep.subr.mxu0 0.0
    %401 = vmatpush2.msra.mxu0 0.0
    %402 = vmatprep.subr.mxu0 0.0
    %403 = vmatpush2.msra.mxu0 0.0
    %404 = vmatprep.subr.mxu0 0.0
    %405 = vmatpush2.msra.mxu0 0.0
    %406 = vmatprep.mubr.f32.mxu0 0.0
    %407 = vmatmul.mubr.f32.gmra.mxu0 %v319
    %v408 = vpop.f32.mrf.mxu0
    %v409 = vadd.f32 %v315, %v408
    %v410 = vpop.f32.mrf.mxu0
    %411 = vmatprep.mubr.f32.mxu0 0.0
    %412 = vmatmul.mubr.f32.gmra.mxu0 %v322
    %v413 = vpop.f32.mrf.mxu0
    %v414 = vadd.f32 %v315, %v413
    %v415 = vpop.f32.mrf.mxu0
    %416 = vmatprep.mubr.f32.mxu0 0.0
    %417 = vmatmul.mubr.f32.gmra.mxu0 %v325
    %v418 = vpop.f32.mrf.mxu0
    %v419 = vadd.f32 %v315, %v418
    %v420 = vpop.f32.mrf.mxu0
    %421 = vmatprep.mubr.f32.mxu0 0.0
    %422 = vmatmul.mubr.f32.gmra.mxu0 %v328
    %v423 = vpop.f32.mrf.mxu0
    %v424 = vadd.f32 %v315, %v423
    %v425 = vpop.f32.mrf.mxu0
    %426 = vmatprep.mubr.f32.mxu0 0.0
    %427 = vmatmul.mubr.f32.gmra.mxu0 %v331
    %v428 = vpop.f32.mrf.mxu0
    %v429 = vadd.f32 %v315, %v428
    %v430 = vpop.f32.mrf.mxu0
    %431 = vmatprep.mubr.f32.mxu0 0.0
    %432 = vmatmul.mubr.f32.gmra.mxu0 %v334
    %v433 = vpop.f32.mrf.mxu0
    %v434 = vadd.f32 %v315, %v433
    %v435 = vpop.f32.mrf.mxu0
    %436 = vmatprep.mubr.f32.mxu0 0.0
    %437 = vmatmul.mubr.f32.gmra.mxu0 %v337
    %v438 = vpop.f32.mrf.mxu0
    %v439 = vadd.f32 %v315, %v438
    %v440 = vpop.f32.mrf.mxu0
    %441 = vmatprep.mubr.f32.mxu0 0.0
    %442 = vmatmul.mubr.f32.gmra.mxu0 %v340
    %v443 = vpop.f32.mrf.mxu0
    %v444 = vadd.f32 %v315, %v443
    %v445 = vpop.f32.mrf.mxu0
    %446 = vdwg.mxu0
    %v447 = vld [vmem:[#allocation8] sm:$0xff]
    %v448 = vld [vmem:[#allocation8 + $0x8] sm:$0xff]
    %v449 = vld [vmem:[#allocation16] sm:$0x1]
    %v451 = vlaneseq
    %v452 = vshrl.u32 %v451, 7
    %v453 = vsub.s32 0, %v452
    %v454 = vrot.slane %v449, %v453
    %456 = vmatprep.subr.mxu0 0.0
    %457 = vmatpush1.msra.mxu0 0.0
    %458 = vmatprep.subr.mxu0 0.0
    %459 = vmatpush1.msra.mxu0 0.0
    %460 = vmatprep.subr.mxu0 0.0
    %461 = vmatpush1.msra.mxu0 0.0
    %462 = vmatprep.subr.mxu0 0.0
    %463 = vmatpush1.msra.mxu0 0.0
    %464 = vmatprep.subr.mxu0 0.0
    %465 = vmatpush1.msra.mxu0 0.0
    %466 = vmatprep.subr.mxu0 0.0
    %467 = vmatpush1.msra.mxu0 0.0
    %468 = vmatprep.subr.mxu0 0.0
    %469 = vmatpush1.msra.mxu0 0.0
    %470 = vmatprep.subr.mxu0 0.0
    %471 = vmatpush1.msra.mxu0 0.0
    %472 = vmatprep.subr.mxu0 0.0
    %473 = vmatpush1.msra.mxu0 0.0
    %474 = vmatprep.subr.mxu0 0.0
    %475 = vmatpush1.msra.mxu0 0.0
    %476 = vmatprep.subr.mxu0 0.0
    %477 = vmatpush1.msra.mxu0 0.0
    %478 = vmatprep.subr.mxu0 0.0
    %479 = vmatpush1.msra.mxu0 0.0
    %480 = vmatprep.subr.mxu0 0.0
    %481 = vmatpush1.msra.mxu0 0.0
    %482 = vmatprep.subr.mxu0 0.0
    %483 = vmatpush1.msra.mxu0 0.0
    %484 = vmatprep.subr.mxu0 0.0
    %485 = vmatpush1.msra.mxu0 %v448
    %486 = vmatprep.subr.mxu0 0.0
    %487 = vmatpush1.msra.mxu0 %v447
    %488 = vmatprep.subr.mxu0 0.0
    %489 = vmatpush2.msra.mxu0 0.0
    %490 = vmatprep.subr.mxu0 0.0
    %491 = vmatpush2.msra.mxu0 0.0
    %492 = vmatprep.subr.mxu0 0.0
    %493 = vmatpush2.msra.mxu0 0.0
    %494 = vmatprep.subr.mxu0 0.0
    %495 = vmatpush2.msra.mxu0 0.0
    %496 = vmatprep.subr.mxu0 0.0
    %497 = vmatpush2.msra.mxu0 0.0
    %498 = vmatprep.subr.mxu0 0.0
    %499 = vmatpush2.msra.mxu0 0.0
    %500 = vmatprep.subr.mxu0 0.0
    %501 = vmatpush2.msra.mxu0 0.0
    %502 = vmatprep.subr.mxu0 0.0
    %503 = vmatpush2.msra.mxu0 0.0
    %504 = vmatprep.subr.mxu0 0.0
    %505 = vmatpush2.msra.mxu0 0.0
    %506 = vmatprep.subr.mxu0 0.0
    %507 = vmatpush2.msra.mxu0 0.0
    %508 = vmatprep.subr.mxu0 0.0
    %509 = vmatpush2.msra.mxu0 0.0
    %510 = vmatprep.subr.mxu0 0.0
    %511 = vmatpush2.msra.mxu0 0.0
    %512 = vmatprep.subr.mxu0 0.0
    %513 = vmatpush2.msra.mxu0 0.0
    %514 = vmatprep.subr.mxu0 0.0
    %515 = vmatpush2.msra.mxu0 0.0
    %516 = vmatprep.subr.mxu0 0.0
    %517 = vmatpush2.msra.mxu0 0.0
    %518 = vmatprep.subr.mxu0 0.0
    %519 = vmatpush2.msra.mxu0 0.0
    %520 = vmatprep.mubr.f32.mxu0 0.0
    %521 = vmatmul.mubr.f32.gmra.mxu0 %v319
    %v522 = vpop.f32.mrf.mxu0
    %v523 = vadd.f32 %v454, %v522
    %v524 = vpop.f32.mrf.mxu0
    %525 = vmatprep.mubr.f32.mxu0 0.0
    %526 = vmatmul.mubr.f32.gmra.mxu0 %v322
    %v527 = vpop.f32.mrf.mxu0
    %v528 = vadd.f32 %v454, %v527
    %v529 = vpop.f32.mrf.mxu0
    %530 = vmatprep.mubr.f32.mxu0 0.0
    %531 = vmatmul.mubr.f32.gmra.mxu0 %v325
    %v532 = vpop.f32.mrf.mxu0
    %v533 = vadd.f32 %v454, %v532
    %v534 = vpop.f32.mrf.mxu0
    %535 = vmatprep.mubr.f32.mxu0 0.0
    %536 = vmatmul.mubr.f32.gmra.mxu0 %v328
    %v537 = vpop.f32.mrf.mxu0
    %v538 = vadd.f32 %v454, %v537
    %v539 = vpop.f32.mrf.mxu0
    %540 = vmatprep.mubr.f32.mxu0 0.0
    %541 = vmatmul.mubr.f32.gmra.mxu0 %v331
    %v542 = vpop.f32.mrf.mxu0
    %v543 = vadd.f32 %v454, %v542
    %v544 = vpop.f32.mrf.mxu0
    %545 = vmatprep.mubr.f32.mxu0 0.0
    %546 = vmatmul.mubr.f32.gmra.mxu0 %v334
    %v547 = vpop.f32.mrf.mxu0
    %v548 = vadd.f32 %v454, %v547
    %v549 = vpop.f32.mrf.mxu0
    %550 = vmatprep.mubr.f32.mxu0 0.0
    %551 = vmatmul.mubr.f32.gmra.mxu0 %v337
    %v552 = vpop.f32.mrf.mxu0
    %v553 = vadd.f32 %v454, %v552
    %v554 = vpop.f32.mrf.mxu0
    %555 = vmatprep.mubr.f32.mxu0 0.0
    %556 = vmatmul.mubr.f32.gmra.mxu0 %v340
    %v557 = vpop.f32.mrf.mxu0
    %v558 = vadd.f32 %v454, %v557
    %v559 = vpop.f32.mrf.mxu0
    %560 = vdwg.mxu0
    %v561 = vld [vmem:[#allocation10] sm:$0xff]
    %v562 = vld [vmem:[#allocation10 + $0x8] sm:$0xff]
    %v563 = vld [vmem:[#allocation17] sm:$0x1]
    %v565 = vlaneseq
    %v566 = vshrl.u32 %v565, 7
    %v567 = vsub.s32 0, %v566
    %v568 = vrot.slane %v563, %v567
    %570 = vmatprep.subr.mxu0 0.0
    %571 = vmatpush1.msra.mxu0 0.0
    %572 = vmatprep.subr.mxu0 0.0
    %573 = vmatpush1.msra.mxu0 0.0
    %574 = vmatprep.subr.mxu0 0.0
    %575 = vmatpush1.msra.mxu0 0.0
    %576 = vmatprep.subr.mxu0 0.0
    %577 = vmatpush1.msra.mxu0 0.0
    %578 = vmatprep.subr.mxu0 0.0
    %579 = vmatpush1.msra.mxu0 0.0
    %580 = vmatprep.subr.mxu0 0.0
    %581 = vmatpush1.msra.mxu0 0.0
    %582 = vmatprep.subr.mxu0 0.0
    %583 = vmatpush1.msra.mxu0 0.0
    %584 = vmatprep.subr.mxu0 0.0
    %585 = vmatpush1.msra.mxu0 0.0
    %586 = vmatprep.subr.mxu0 0.0
    %587 = vmatpush1.msra.mxu0 0.0
    %588 = vmatprep.subr.mxu0 0.0
    %589 = vmatpush1.msra.mxu0 0.0
    %590 = vmatprep.subr.mxu0 0.0
    %591 = vmatpush1.msra.mxu0 0.0
    %592 = vmatprep.subr.mxu0 0.0
    %593 = vmatpush1.msra.mxu0 0.0
    %594 = vmatprep.subr.mxu0 0.0
    %595 = vmatpush1.msra.mxu0 0.0
    %596 = vmatprep.subr.mxu0 0.0
    %597 = vmatpush1.msra.mxu0 0.0
    %598 = vmatprep.subr.mxu0 0.0
    %599 = vmatpush1.msra.mxu0 %v562
    %600 = vmatprep.subr.mxu0 0.0
    %601 = vmatpush1.msra.mxu0 %v561
    %602 = vmatprep.subr.mxu0 0.0
    %603 = vmatpush2.msra.mxu0 0.0
    %604 = vmatprep.subr.mxu0 0.0
    %605 = vmatpush2.msra.mxu0 0.0
    %606 = vmatprep.subr.mxu0 0.0
    %607 = vmatpush2.msra.mxu0 0.0
    %608 = vmatprep.subr.mxu0 0.0
    %609 = vmatpush2.msra.mxu0 0.0
    %610 = vmatprep.subr.mxu0 0.0
    %611 = vmatpush2.msra.mxu0 0.0
    %612 = vmatprep.subr.mxu0 0.0
    %613 = vmatpush2.msra.mxu0 0.0
    %614 = vmatprep.subr.mxu0 0.0
    %615 = vmatpush2.msra.mxu0 0.0
    %616 = vmatprep.subr.mxu0 0.0
    %617 = vmatpush2.msra.mxu0 0.0
    %618 = vmatprep.subr.mxu0 0.0
    %619 = vmatpush2.msra.mxu0 0.0
    %620 = vmatprep.subr.mxu0 0.0
    %621 = vmatpush2.msra.mxu0 0.0
    %622 = vmatprep.subr.mxu0 0.0
    %623 = vmatpush2.msra.mxu0 0.0
    %624 = vmatprep.subr.mxu0 0.0
    %625 = vmatpush2.msra.mxu0 0.0
    %626 = vmatprep.subr.mxu0 0.0
    %627 = vmatpush2.msra.mxu0 0.0
    %628 = vmatprep.subr.mxu0 0.0
    %629 = vmatpush2.msra.mxu0 0.0
    %630 = vmatprep.subr.mxu0 0.0
    %631 = vmatpush2.msra.mxu0 0.0
    %632 = vmatprep.subr.mxu0 0.0
    %633 = vmatpush2.msra.mxu0 0.0
    %634 = vmatprep.mubr.f32.mxu0 0.0
    %635 = vmatmul.mubr.f32.gmra.mxu0 %v319
    %v636 = vpop.f32.mrf.mxu0
    %v637 = vadd.f32 %v568, %v636
    %v638 = vpop.f32.mrf.mxu0
    %639 = vmatprep.mubr.f32.mxu0 0.0
    %640 = vmatmul.mubr.f32.gmra.mxu0 %v322
    %v641 = vpop.f32.mrf.mxu0
    %v642 = vadd.f32 %v568, %v641
    %v643 = vpop.f32.mrf.mxu0
    %644 = vmatprep.mubr.f32.mxu0 0.0
    %645 = vmatmul.mubr.f32.gmra.mxu0 %v325
    %v646 = vpop.f32.mrf.mxu0
    %v647 = vadd.f32 %v568, %v646
    %v648 = vpop.f32.mrf.mxu0
    %649 = vmatprep.mubr.f32.mxu0 0.0
    %650 = vmatmul.mubr.f32.gmra.mxu0 %v328
    %v651 = vpop.f32.mrf.mxu0
    %v652 = vadd.f32 %v568, %v651
    %v653 = vpop.f32.mrf.mxu0
    %654 = vmatprep.mubr.f32.mxu0 0.0
    %655 = vmatmul.mubr.f32.gmra.mxu0 %v331
    %v656 = vpop.f32.mrf.mxu0
    %v657 = vadd.f32 %v568, %v656
    %v658 = vpop.f32.mrf.mxu0
    %659 = vmatprep.mubr.f32.mxu0 0.0
    %660 = vmatmul.mubr.f32.gmra.mxu0 %v334
    %v661 = vpop.f32.mrf.mxu0
    %v662 = vadd.f32 %v568, %v661
    %v663 = vpop.f32.mrf.mxu0
    %664 = vmatprep.mubr.f32.mxu0 0.0
    %665 = vmatmul.mubr.f32.gmra.mxu0 %v337
    %v666 = vpop.f32.mrf.mxu0
    %v667 = vadd.f32 %v568, %v666
    %v668 = vpop.f32.mrf.mxu0
    %669 = vmatprep.mubr.f32.mxu0 0.0
    %670 = vmatmul.mubr.f32.gmra.mxu0 %v340
    %v671 = vpop.f32.mrf.mxu0
    %v672 = vadd.f32 %v568, %v671
    %v673 = vpop.f32.mrf.mxu0
    %674 = vdwg.mxu0
    %v675 = vld [vmem:[%s5] sm:$0xff]
    %v676 = vld [vmem:[%s5 + $0x8] sm:$0xff]
    %v677 = vld [vmem:[%s5 + $0x10] sm:$0xff]
    %v678 = vld [vmem:[%s5 + $0x18] sm:$0xff]
    %v679 = vld [vmem:[#allocation11] sm:$0xff]
    %v680 = vld [vmem:[#allocation11 + $0x8] sm:$0xff]
    %v681 = vld [vmem:[#allocation11 + $0x10] sm:$0xff]
    %v682 = vld [vmem:[#allocation11 + $0x18] sm:$0xff]
    %v683 = vld [vmem:[#allocation13] sm:$0xff]
    %v684 = vld [vmem:[#allocation13 + $0x8] sm:$0xff]
    %v685 = vld [vmem:[#allocation13 + $0x10] sm:$0xff]
    %v686 = vld [vmem:[#allocation13 + $0x18] sm:$0xff]
    %v687 = vld [vmem:[#allocation19] sm:$0x1]
    %v688 = vld [vmem:[#allocation5] sm:$0xff]
    %vm689 = vcmask 261120
    %v691 = vsel %vm689, %v688, 0
    %693 = vmatprep.subr.mxu0 0.0
    %694 = vmatpush1.msra.mxu0 0.0
    %695 = vmatprep.subr.mxu0 0.0
    %696 = vmatpush1.msra.mxu0 0.0
    %697 = vmatprep.subr.mxu0 0.0
    %698 = vmatpush1.msra.mxu0 0.0
    %699 = vmatprep.subr.mxu0 0.0
    %700 = vmatpush1.msra.mxu0 0.0
    %701 = vmatprep.subr.mxu0 0.0
    %702 = vmatpush1.msra.mxu0 0.0
    %703 = vmatprep.subr.mxu0 0.0
    %704 = vmatpush1.msra.mxu0 0.0
    %705 = vmatprep.subr.mxu0 0.0
    %706 = vmatpush1.msra.mxu0 0.0
    %707 = vmatprep.subr.mxu0 0.0
    %708 = vmatpush1.msra.mxu0 0.0
    %709 = vmatprep.subr.mxu0 0.0
    %710 = vmatpush1.msra.mxu0 0.0
    %711 = vmatprep.subr.mxu0 0.0
    %712 = vmatpush1.msra.mxu0 0.0
    %713 = vmatprep.subr.mxu0 0.0
    %714 = vmatpush1.msra.mxu0 0.0
    %715 = vmatprep.subr.mxu0 0.0
    %716 = vmatpush1.msra.mxu0 0.0
    %717 = vmatprep.subr.mxu0 0.0
    %718 = vmatpush1.msra.mxu0 %v678
    %719 = vmatprep.subr.mxu0 0.0
    %720 = vmatpush1.msra.mxu0 %v677
    %721 = vmatprep.subr.mxu0 0.0
    %722 = vmatpush1.msra.mxu0 %v676
    %723 = vmatprep.subr.mxu0 0.0
    %724 = vmatpush1.msra.mxu0 %v675
    %725 = vmatprep.subr.mxu0 0.0
    %726 = vmatpush2.msra.mxu0 0.0
    %727 = vmatprep.subr.mxu0 0.0
    %728 = vmatpush2.msra.mxu0 0.0
    %729 = vmatprep.subr.mxu0 0.0
    %730 = vmatpush2.msra.mxu0 0.0
    %731 = vmatprep.subr.mxu0 0.0
    %732 = vmatpush2.msra.mxu0 0.0
    %733 = vmatprep.subr.mxu0 0.0
    %734 = vmatpush2.msra.mxu0 0.0
    %735 = vmatprep.subr.mxu0 0.0
    %736 = vmatpush2.msra.mxu0 0.0
    %737 = vmatprep.subr.mxu0 0.0
    %738 = vmatpush2.msra.mxu0 0.0
    %739 = vmatprep.subr.mxu0 0.0
    %740 = vmatpush2.msra.mxu0 0.0
    %741 = vmatprep.subr.mxu0 0.0
    %742 = vmatpush2.msra.mxu0 0.0
    %743 = vmatprep.subr.mxu0 0.0
    %744 = vmatpush2.msra.mxu0 0.0
    %745 = vmatprep.subr.mxu0 0.0
    %746 = vmatpush2.msra.mxu0 0.0
    %747 = vmatprep.subr.mxu0 0.0
    %748 = vmatpush2.msra.mxu0 0.0
    %749 = vmatprep.subr.mxu0 0.0
    %750 = vmatpush2.msra.mxu0 0.0
    %751 = vmatprep.subr.mxu0 0.0
    %752 = vmatpush2.msra.mxu0 0.0
    %753 = vmatprep.subr.mxu0 0.0
    %754 = vmatpush2.msra.mxu0 0.0
    %755 = vmatprep.subr.mxu0 0.0
    %756 = vmatpush2.msra.mxu0 0.0
    %757 = vmatprep.mubr.f32.mxu0 0.0
    %758 = vmatmul.mubr.f32.gmra.mxu0 %v691
    %v759 = vpop.f32.mrf.mxu0
    %v760 = vadd.f32 0.0, %v759
    %v761 = vpop.f32.mrf.mxu0
    %762 = vdwg.mxu0
    %763 = vmatprep.subr.mxu0 0.0
    %764 = vmatpush1.msra.mxu0 0.0
    %765 = vmatprep.subr.mxu0 0.0
    %766 = vmatpush1.msra.mxu0 0.0
    %767 = vmatprep.subr.mxu0 0.0
    %768 = vmatpush1.msra.mxu0 0.0
    %769 = vmatprep.subr.mxu0 0.0
    %770 = vmatpush1.msra.mxu0 0.0
    %771 = vmatprep.subr.mxu0 0.0
    %772 = vmatpush1.msra.mxu0 0.0
    %773 = vmatprep.subr.mxu0 0.0
    %774 = vmatpush1.msra.mxu0 0.0
    %775 = vmatprep.subr.mxu0 0.0
    %776 = vmatpush1.msra.mxu0 0.0
    %777 = vmatprep.subr.mxu0 0.0
    %778 = vmatpush1.msra.mxu0 0.0
    %779 = vmatprep.subr.mxu0 0.0
    %780 = vmatpush1.msra.mxu0 0.0
    %781 = vmatprep.subr.mxu0 0.0
    %782 = vmatpush1.msra.mxu0 0.0
    %783 = vmatprep.subr.mxu0 0.0
    %784 = vmatpush1.msra.mxu0 0.0
    %785 = vmatprep.subr.mxu0 0.0
    %786 = vmatpush1.msra.mxu0 0.0
    %787 = vmatprep.subr.mxu0 0.0
    %788 = vmatpush1.msra.mxu0 %v682
    %789 = vmatprep.subr.mxu0 0.0
    %790 = vmatpush1.msra.mxu0 %v681
    %791 = vmatprep.subr.mxu0 0.0
    %792 = vmatpush1.msra.mxu0 %v680
    %793 = vmatprep.subr.mxu0 0.0
    %794 = vmatpush1.msra.mxu0 %v679
    %795 = vmatprep.subr.mxu0 0.0
    %796 = vmatpush2.msra.mxu0 0.0
    %797 = vmatprep.subr.mxu0 0.0
    %798 = vmatpush2.msra.mxu0 0.0
    %799 = vmatprep.subr.mxu0 0.0
    %800 = vmatpush2.msra.mxu0 0.0
    %801 = vmatprep.subr.mxu0 0.0
    %802 = vmatpush2.msra.mxu0 0.0
    %803 = vmatprep.subr.mxu0 0.0
    %804 = vmatpush2.msra.mxu0 0.0
    %805 = vmatprep.subr.mxu0 0.0
    %806 = vmatpush2.msra.mxu0 0.0
    %807 = vmatprep.subr.mxu0 0.0
    %808 = vmatpush2.msra.mxu0 0.0
    %809 = vmatprep.subr.mxu0 0.0
    %810 = vmatpush2.msra.mxu0 0.0
    %811 = vmatprep.subr.mxu0 0.0
    %812 = vmatpush2.msra.mxu0 0.0
    %813 = vmatprep.subr.mxu0 0.0
    %814 = vmatpush2.msra.mxu0 0.0
    %815 = vmatprep.subr.mxu0 0.0
    %816 = vmatpush2.msra.mxu0 0.0
    %817 = vmatprep.subr.mxu0 0.0
    %818 = vmatpush2.msra.mxu0 0.0
    %819 = vmatprep.subr.mxu0 0.0
    %820 = vmatpush2.msra.mxu0 0.0
    %821 = vmatprep.subr.mxu0 0.0
    %822 = vmatpush2.msra.mxu0 0.0
    %823 = vmatprep.subr.mxu0 0.0
    %824 = vmatpush2.msra.mxu0 0.0
    %825 = vmatprep.subr.mxu0 0.0
    %826 = vmatpush2.msra.mxu0 0.0
    %827 = vmatprep.mubr.f32.mxu0 0.0
    %828 = vmatmul.mubr.f32.gmra.mxu0 %v691
    %v829 = vpop.f32.mrf.mxu0
    %v830 = vadd.f32 0.0, %v829
    %v831 = vpop.f32.mrf.mxu0
    %832 = vdwg.mxu0
    %v834 = vlaneseq
    %v835 = vshrl.u32 %v834, 7
    %v836 = vsub.s32 0, %v835
    %v837 = vrot.slane %v687, %v836
    %839 = vmatprep.subr.mxu0 0.0
    %840 = vmatpush1.msra.mxu0 0.0
    %841 = vmatprep.subr.mxu0 0.0
    %842 = vmatpush1.msra.mxu0 0.0
    %843 = vmatprep.subr.mxu0 0.0
    %844 = vmatpush1.msra.mxu0 0.0
    %845 = vmatprep.subr.mxu0 0.0
    %846 = vmatpush1.msra.mxu0 0.0
    %847 = vmatprep.subr.mxu0 0.0
    %848 = vmatpush1.msra.mxu0 0.0
    %849 = vmatprep.subr.mxu0 0.0
    %850 = vmatpush1.msra.mxu0 0.0
    %851 = vmatprep.subr.mxu0 0.0
    %852 = vmatpush1.msra.mxu0 0.0
    %853 = vmatprep.subr.mxu0 0.0
    %854 = vmatpush1.msra.mxu0 0.0
    %855 = vmatprep.subr.mxu0 0.0
    %856 = vmatpush1.msra.mxu0 0.0
    %857 = vmatprep.subr.mxu0 0.0
    %858 = vmatpush1.msra.mxu0 0.0
    %859 = vmatprep.subr.mxu0 0.0
    %860 = vmatpush1.msra.mxu0 0.0
    %861 = vmatprep.subr.mxu0 0.0
    %862 = vmatpush1.msra.mxu0 0.0
    %863 = vmatprep.subr.mxu0 0.0
    %864 = vmatpush1.msra.mxu0 %v686
    %865 = vmatprep.subr.mxu0 0.0
    %866 = vmatpush1.msra.mxu0 %v685
    %867 = vmatprep.subr.mxu0 0.0
    %868 = vmatpush1.msra.mxu0 %v684
    %869 = vmatprep.subr.mxu0 0.0
    %870 = vmatpush1.msra.mxu0 %v683
    %871 = vmatprep.subr.mxu0 0.0
    %872 = vmatpush2.msra.mxu0 0.0
    %873 = vmatprep.subr.mxu0 0.0
    %874 = vmatpush2.msra.mxu0 0.0
    %875 = vmatprep.subr.mxu0 0.0
    %876 = vmatpush2.msra.mxu0 0.0
    %877 = vmatprep.subr.mxu0 0.0
    %878 = vmatpush2.msra.mxu0 0.0
    %879 = vmatprep.subr.mxu0 0.0
    %880 = vmatpush2.msra.mxu0 0.0
    %881 = vmatprep.subr.mxu0 0.0
    %882 = vmatpush2.msra.mxu0 0.0
    %883 = vmatprep.subr.mxu0 0.0
    %884 = vmatpush2.msra.mxu0 0.0
    %885 = vmatprep.subr.mxu0 0.0
    %886 = vmatpush2.msra.mxu0 0.0
    %887 = vmatprep.subr.mxu0 0.0
    %888 = vmatpush2.msra.mxu0 0.0
    %889 = vmatprep.subr.mxu0 0.0
    %890 = vmatpush2.msra.mxu0 0.0
    %891 = vmatprep.subr.mxu0 0.0
    %892 = vmatpush2.msra.mxu0 0.0
    %893 = vmatprep.subr.mxu0 0.0
    %894 = vmatpush2.msra.mxu0 0.0
    %895 = vmatprep.subr.mxu0 0.0
    %896 = vmatpush2.msra.mxu0 0.0
    %897 = vmatprep.subr.mxu0 0.0
    %898 = vmatpush2.msra.mxu0 0.0
    %899 = vmatprep.subr.mxu0 0.0
    %900 = vmatpush2.msra.mxu0 0.0
    %901 = vmatprep.subr.mxu0 0.0
    %902 = vmatpush2.msra.mxu0 0.0
    %903 = vmatprep.mubr.f32.mxu0 0.0
    %904 = vmatmul.mubr.f32.gmra.mxu0 %v691
    %v905 = vpop.f32.mrf.mxu0
    %v906 = vadd.f32 %v837, %v905
    %v907 = vpop.f32.mrf.mxu0
    %908 = vdwg.mxu0
    %v909 = vadd.f32 %v409, %v760
    %v910 = vxor.u32 %v909, 2147483648
    %v911 = vmul.f32 %v910, 1.442695
    %v912 = vpow.pop %v911
    %v913 = vadd.f32 %v912, 1.0
    %v914 = vrcp.pop %v913
    %v915 = vmul.f32 1.0, %v914
    %v916 = vadd.f32 %v523, %v830
    %v917 = vxor.u32 %v916, 2147483648
    %v918 = vmul.f32 %v917, 1.442695
    %v919 = vpow.pop %v918
    %v920 = vadd.f32 %v919, 1.0
    %v921 = vrcp.pop %v920
    %v922 = vmul.f32 1.0, %v921
    %v923 = vmul.f32 %v915, %v906
    %v924 = vadd.f32 %v637, %v923
    %v925 = vtanh.pop %v924
    %v926 = vsub.f32 1.0, %v922
    %v927 = vmul.f32 %v926, %v925
    %v928 = vmul.f32 %v922, %v688
    %v929 = vadd.f32 %v927, %v928
    %v931 = vsel %vm689, %v929, 0
    %933 = vmatprep.subr.mxu0 0.0
    %934 = vmatpush1.msra.mxu0 0.0
    %935 = vmatprep.subr.mxu0 0.0
    %936 = vmatpush1.msra.mxu0 0.0
    %937 = vmatprep.subr.mxu0 0.0
    %938 = vmatpush1.msra.mxu0 0.0
    %939 = vmatprep.subr.mxu0 0.0
    %940 = vmatpush1.msra.mxu0 0.0
    %941 = vmatprep.subr.mxu0 0.0
    %942 = vmatpush1.msra.mxu0 0.0
    %943 = vmatprep.subr.mxu0 0.0
    %944 = vmatpush1.msra.mxu0 0.0
    %945 = vmatprep.subr.mxu0 0.0
    %946 = vmatpush1.msra.mxu0 0.0
    %947 = vmatprep.subr.mxu0 0.0
    %948 = vmatpush1.msra.mxu0 0.0
    %949 = vmatprep.subr.mxu0 0.0
    %950 = vmatpush1.msra.mxu0 0.0
    %951 = vmatprep.subr.mxu0 0.0
    %952 = vmatpush1.msra.mxu0 0.0
    %953 = vmatprep.subr.mxu0 0.0
    %954 = vmatpush1.msra.mxu0 0.0
    %955 = vmatprep.subr.mxu0 0.0
    %956 = vmatpush1.msra.mxu0 0.0
    %957 = vmatprep.subr.mxu0 0.0
    %958 = vmatpush1.msra.mxu0 %v678
    %959 = vmatprep.subr.mxu0 0.0
    %960 = vmatpush1.msra.mxu0 %v677
    %961 = vmatprep.subr.mxu0 0.0
    %962 = vmatpush1.msra.mxu0 %v676
    %963 = vmatprep.subr.mxu0 0.0
    %964 = vmatpush1.msra.mxu0 %v675
    %965 = vmatprep.subr.mxu0 0.0
    %966 = vmatpush2.msra.mxu0 0.0
    %967 = vmatprep.subr.mxu0 0.0
    %968 = vmatpush2.msra.mxu0 0.0
    %969 = vmatprep.subr.mxu0 0.0
    %970 = vmatpush2.msra.mxu0 0.0
    %971 = vmatprep.subr.mxu0 0.0
    %972 = vmatpush2.msra.mxu0 0.0
    %973 = vmatprep.subr.mxu0 0.0
    %974 = vmatpush2.msra.mxu0 0.0
    %975 = vmatprep.subr.mxu0 0.0
    %976 = vmatpush2.msra.mxu0 0.0
    %977 = vmatprep.subr.mxu0 0.0
    %978 = vmatpush2.msra.mxu0 0.0
    %979 = vmatprep.subr.mxu0 0.0
    %980 = vmatpush2.msra.mxu0 0.0
    %981 = vmatprep.subr.mxu0 0.0
    %982 = vmatpush2.msra.mxu0 0.0
    %983 = vmatprep.subr.mxu0 0.0
    %984 = vmatpush2.msra.mxu0 0.0
    %985 = vmatprep.subr.mxu0 0.0
    %986 = vmatpush2.msra.mxu0 0.0
    %987 = vmatprep.subr.mxu0 0.0
    %988 = vmatpush2.msra.mxu0 0.0
    %989 = vmatprep.subr.mxu0 0.0
    %990 = vmatpush2.msra.mxu0 0.0
    %991 = vmatprep.subr.mxu0 0.0
    %992 = vmatpush2.msra.mxu0 0.0
    %993 = vmatprep.subr.mxu0 0.0
    %994 = vmatpush2.msra.mxu0 0.0
    %995 = vmatprep.subr.mxu0 0.0
    %996 = vmatpush2.msra.mxu0 0.0
    %997 = vmatprep.mubr.f32.mxu0 0.0
    %998 = vmatmul.mubr.f32.gmra.mxu0 %v931
    %v999 = vpop.f32.mrf.mxu0
    %v1000 = vadd.f32 0.0, %v999
    %v1001 = vpop.f32.mrf.mxu0
    %1002 = vdwg.mxu0
    %1003 = vmatprep.subr.mxu0 0.0
    %1004 = vmatpush1.msra.mxu0 0.0
    %1005 = vmatprep.subr.mxu0 0.0
    %1006 = vmatpush1.msra.mxu0 0.0
    %1007 = vmatprep.subr.mxu0 0.0
    %1008 = vmatpush1.msra.mxu0 0.0
    %1009 = vmatprep.subr.mxu0 0.0
    %1010 = vmatpush1.msra.mxu0 0.0
    %1011 = vmatprep.subr.mxu0 0.0
    %1012 = vmatpush1.msra.mxu0 0.0
    %1013 = vmatprep.subr.mxu0 0.0
    %1014 = vmatpush1.msra.mxu0 0.0
    %1015 = vmatprep.subr.mxu0 0.0
    %1016 = vmatpush1.msra.mxu0 0.0
    %1017 = vmatprep.subr.mxu0 0.0
    %1018 = vmatpush1.msra.mxu0 0.0
    %1019 = vmatprep.subr.mxu0 0.0
    %1020 = vmatpush1.msra.mxu0 0.0
    %1021 = vmatprep.subr.mxu0 0.0
    %1022 = vmatpush1.msra.mxu0 0.0
    %1023 = vmatprep.subr.mxu0 0.0
    %1024 = vmatpush1.msra.mxu0 0.0
    %1025 = vmatprep.subr.mxu0 0.0
    %1026 = vmatpush1.msra.mxu0 0.0
    %1027 = vmatprep.subr.mxu0 0.0
    %1028 = vmatpush1.msra.mxu0 %v682
    %1029 = vmatprep.subr.mxu0 0.0
    %1030 = vmatpush1.msra.mxu0 %v681
    %1031 = vmatprep.subr.mxu0 0.0
    %1032 = vmatpush1.msra.mxu0 %v680
    %1033 = vmatprep.subr.mxu0 0.0
    %1034 = vmatpush1.msra.mxu0 %v679
    %1035 = vmatprep.subr.mxu0 0.0
    %1036 = vmatpush2.msra.mxu0 0.0
    %1037 = vmatprep.subr.mxu0 0.0
    %1038 = vmatpush2.msra.mxu0 0.0
    %1039 = vmatprep.subr.mxu0 0.0
    %1040 = vmatpush2.msra.mxu0 0.0
    %1041 = vmatprep.subr.mxu0 0.0
    %1042 = vmatpush2.msra.mxu0 0.0
    %1043 = vmatprep.subr.mxu0 0.0
    %1044 = vmatpush2.msra.mxu0 0.0
    %1045 = vmatprep.subr.mxu0 0.0
    %1046 = vmatpush2.msra.mxu0 0.0
    %1047 = vmatprep.subr.mxu0 0.0
    %1048 = vmatpush2.msra.mxu0 0.0
    %1049 = vmatprep.subr.mxu0 0.0
    %1050 = vmatpush2.msra.mxu0 0.0
    %1051 = vmatprep.subr.mxu0 0.0
    %1052 = vmatpush2.msra.mxu0 0.0
    %1053 = vmatprep.subr.mxu0 0.0
    %1054 = vmatpush2.msra.mxu0 0.0
    %1055 = vmatprep.subr.mxu0 0.0
    %1056 = vmatpush2.msra.mxu0 0.0
    %1057 = vmatprep.subr.mxu0 0.0
    %1058 = vmatpush2.msra.mxu0 0.0
    %1059 = vmatprep.subr.mxu0 0.0
    %1060 = vmatpush2.msra.mxu0 0.0
    %1061 = vmatprep.subr.mxu0 0.0
    %1062 = vmatpush2.msra.mxu0 0.0
    %1063 = vmatprep.subr.mxu0 0.0
    %1064 = vmatpush2.msra.mxu0 0.0
    %1065 = vmatprep.subr.mxu0 0.0
    %1066 = vmatpush2.msra.mxu0 0.0
    %1067 = vmatprep.mubr.f32.mxu0 0.0
    %1068 = vmatmul.mubr.f32.gmra.mxu0 %v931
    %v1069 = vpop.f32.mrf.mxu0
    %v1070 = vadd.f32 0.0, %v1069
    %v1071 = vpop.f32.mrf.mxu0
    %1072 = vdwg.mxu0
    %1073 = vmatprep.subr.mxu0 0.0
    %1074 = vmatpush1.msra.mxu0 0.0
    %1075 = vmatprep.subr.mxu0 0.0
    %1076 = vmatpush1.msra.mxu0 0.0
    %1077 = vmatprep.subr.mxu0 0.0
    %1078 = vmatpush1.msra.mxu0 0.0
    %1079 = vmatprep.subr.mxu0 0.0
    %1080 = vmatpush1.msra.mxu0 0.0
    %1081 = vmatprep.subr.mxu0 0.0
    %1082 = vmatpush1.msra.mxu0 0.0
    %1083 = vmatprep.subr.mxu0 0.0
    %1084 = vmatpush1.msra.mxu0 0.0
    %1085 = vmatprep.subr.mxu0 0.0
    %1086 = vmatpush1.msra.mxu0 0.0
    %1087 = vmatprep.subr.mxu0 0.0
    %1088 = vmatpush1.msra.mxu0 0.0
    %1089 = vmatprep.subr.mxu0 0.0
    %1090 = vmatpush1.msra.mxu0 0.0
    %1091 = vmatprep.subr.mxu0 0.0
    %1092 = vmatpush1.msra.mxu0 0.0
    %1093 = vmatprep.subr.mxu0 0.0
    %1094 = vmatpush1.msra.mxu0 0.0
    %1095 = vmatprep.subr.mxu0 0.0
    %1096 = vmatpush1.msra.mxu0 0.0
    %1097 = vmatprep.subr.mxu0 0.0
    %1098 = vmatpush1.msra.mxu0 %v686
    %1099 = vmatprep.subr.mxu0 0.0
    %1100 = vmatpush1.msra.mxu0 %v685
    %1101 = vmatprep.subr.mxu0 0.0
    %1102 = vmatpush1.msra.mxu0 %v684
    %1103 = vmatprep.subr.mxu0 0.0
    %1104 = vmatpush1.msra.mxu0 %v683
    %1105 = vmatprep.subr.mxu0 0.0
    %1106 = vmatpush2.msra.mxu0 0.0
    %1107 = vmatprep.subr.mxu0 0.0
    %1108 = vmatpush2.msra.mxu0 0.0
    %1109 = vmatprep.subr.mxu0 0.0
    %1110 = vmatpush2.msra.mxu0 0.0
    %1111 = vmatprep.subr.mxu0 0.0
    %1112 = vmatpush2.msra.mxu0 0.0
    %1113 = vmatprep.subr.mxu0 0.0
    %1114 = vmatpush2.msra.mxu0 0.0
    %1115 = vmatprep.subr.mxu0 0.0
    %1116 = vmatpush2.msra.mxu0 0.0
    %1117 = vmatprep.subr.mxu0 0.0
    %1118 = vmatpush2.msra.mxu0 0.0
    %1119 = vmatprep.subr.mxu0 0.0
    %1120 = vmatpush2.msra.mxu0 0.0
    %1121 = vmatprep.subr.mxu0 0.0
    %1122 = vmatpush2.msra.mxu0 0.0
    %1123 = vmatprep.subr.mxu0 0.0
    %1124 = vmatpush2.msra.mxu0 0.0
    %1125 = vmatprep.subr.mxu0 0.0
    %1126 = vmatpush2.msra.mxu0 0.0
    %1127 = vmatprep.subr.mxu0 0.0
    %1128 = vmatpush2.msra.mxu0 0.0
    %1129 = vmatprep.subr.mxu0 0.0
    %1130 = vmatpush2.msra.mxu0 0.0
    %1131 = vmatprep.subr.mxu0 0.0
    %1132 = vmatpush2.msra.mxu0 0.0
    %1133 = vmatprep.subr.mxu0 0.0
    %1134 = vmatpush2.msra.mxu0 0.0
    %1135 = vmatprep.subr.mxu0 0.0
    %1136 = vmatpush2.msra.mxu0 0.0
    %1137 = vmatprep.mubr.f32.mxu0 0.0
    %1138 = vmatmul.mubr.f32.gmra.mxu0 %v931
    %v1139 = vpop.f32.mrf.mxu0
    %v1140 = vadd.f32 %v837, %v1139
    %v1141 = vpop.f32.mrf.mxu0
    %1142 = vdwg.mxu0
    %v1143 = vadd.f32 %v414, %v1000
    %v1144 = vxor.u32 %v1143, 2147483648
    %v1145 = vmul.f32 %v1144, 1.442695
    %v1146 = vpow.pop %v1145
    %v1147 = vadd.f32 %v1146, 1.0
    %v1148 = vrcp.pop %v1147
    %v1149 = vmul.f32 1.0, %v1148
    %v1150 = vadd.f32 %v528, %v1070
    %v1151 = vxor.u32 %v1150, 2147483648
    %v1152 = vmul.f32 %v1151, 1.442695
    %v1153 = vpow.pop %v1152
    %v1154 = vadd.f32 %v1153, 1.0
    %v1155 = vrcp.pop %v1154
    %v1156 = vmul.f32 1.0, %v1155
    %v1157 = vmul.f32 %v1149, %v1140
    %v1158 = vadd.f32 %v642, %v1157
    %v1159 = vtanh.pop %v1158
    %v1160 = vsub.f32 1.0, %v1156
    %v1161 = vmul.f32 %v1160, %v1159
    %v1162 = vmul.f32 %v1156, %v929
    %v1163 = vadd.f32 %v1161, %v1162
    %v1165 = vsel %vm689, %v1163, 0
    %1167 = vmatprep.subr.mxu0 0.0
    %1168 = vmatpush1.msra.mxu0 0.0
    %1169 = vmatprep.subr.mxu0 0.0
    %1170 = vmatpush1.msra.mxu0 0.0
    %1171 = vmatprep.subr.mxu0 0.0
    %1172 = vmatpush1.msra.mxu0 0.0
    %1173 = vmatprep.subr.mxu0 0.0
    %1174 = vmatpush1.msra.mxu0 0.0
    %1175 = vmatprep.subr.mxu0 0.0
    %1176 = vmatpush1.msra.mxu0 0.0
    %1177 = vmatprep.subr.mxu0 0.0
    %1178 = vmatpush1.msra.mxu0 0.0
    %1179 = vmatprep.subr.mxu0 0.0
    %1180 = vmatpush1.msra.mxu0 0.0
    %1181 = vmatprep.subr.mxu0 0.0
    %1182 = vmatpush1.msra.mxu0 0.0
    %1183 = vmatprep.subr.mxu0 0.0
    %1184 = vmatpush1.msra.mxu0 0.0
    %1185 = vmatprep.subr.mxu0 0.0
    %1186 = vmatpush1.msra.mxu0 0.0
    %1187 = vmatprep.subr.mxu0 0.0
    %1188 = vmatpush1.msra.mxu0 0.0
    %1189 = vmatprep.subr.mxu0 0.0
    %1190 = vmatpush1.msra.mxu0 0.0
    %1191 = vmatprep.subr.mxu0 0.0
    %1192 = vmatpush1.msra.mxu0 %v678
    %1193 = vmatprep.subr.mxu0 0.0
    %1194 = vmatpush1.msra.mxu0 %v677
    %1195 = vmatprep.subr.mxu0 0.0
    %1196 = vmatpush1.msra.mxu0 %v676
    %1197 = vmatprep.subr.mxu0 0.0
    %1198 = vmatpush1.msra.mxu0 %v675
    %1199 = vmatprep.subr.mxu0 0.0
    %1200 = vmatpush2.msra.mxu0 0.0
    %1201 = vmatprep.subr.mxu0 0.0
    %1202 = vmatpush2.msra.mxu0 0.0
    %1203 = vmatprep.subr.mxu0 0.0
    %1204 = vmatpush2.msra.mxu0 0.0
    %1205 = vmatprep.subr.mxu0 0.0
    %1206 = vmatpush2.msra.mxu0 0.0
    %1207 = vmatprep.subr.mxu0 0.0
    %1208 = vmatpush2.msra.mxu0 0.0
    %1209 = vmatprep.subr.mxu0 0.0
    %1210 = vmatpush2.msra.mxu0 0.0
    %1211 = vmatprep.subr.mxu0 0.0
    %1212 = vmatpush2.msra.mxu0 0.0
    %1213 = vmatprep.subr.mxu0 0.0
    %1214 = vmatpush2.msra.mxu0 0.0
    %1215 = vmatprep.subr.mxu0 0.0
    %1216 = vmatpush2.msra.mxu0 0.0
    %1217 = vmatprep.subr.mxu0 0.0
    %1218 = vmatpush2.msra.mxu0 0.0
    %1219 = vmatprep.subr.mxu0 0.0
    %1220 = vmatpush2.msra.mxu0 0.0
    %1221 = vmatprep.subr.mxu0 0.0
    %1222 = vmatpush2.msra.mxu0 0.0
    %1223 = vmatprep.subr.mxu0 0.0
    %1224 = vmatpush2.msra.mxu0 0.0
    %1225 = vmatprep.subr.mxu0 0.0
    %1226 = vmatpush2.msra.mxu0 0.0
    %1227 = vmatprep.subr.mxu0 0.0
    %1228 = vmatpush2.msra.mxu0 0.0
    %1229 = vmatprep.subr.mxu0 0.0
    %1230 = vmatpush2.msra.mxu0 0.0
    %1231 = vmatprep.mubr.f32.mxu0 0.0
    %1232 = vmatmul.mubr.f32.gmra.mxu0 %v1165
    %v1233 = vpop.f32.mrf.mxu0
    %v1234 = vadd.f32 0.0, %v1233
    %v1235 = vpop.f32.mrf.mxu0
    %1236 = vdwg.mxu0
    %1237 = vmatprep.subr.mxu0 0.0
    %1238 = vmatpush1.msra.mxu0 0.0
    %1239 = vmatprep.subr.mxu0 0.0
    %1240 = vmatpush1.msra.mxu0 0.0
    %1241 = vmatprep.subr.mxu0 0.0
    %1242 = vmatpush1.msra.mxu0 0.0
    %1243 = vmatprep.subr.mxu0 0.0
    %1244 = vmatpush1.msra.mxu0 0.0
    %1245 = vmatprep.subr.mxu0 0.0
    %1246 = vmatpush1.msra.mxu0 0.0
    %1247 = vmatprep.subr.mxu0 0.0
    %1248 = vmatpush1.msra.mxu0 0.0
    %1249 = vmatprep.subr.mxu0 0.0
    %1250 = vmatpush1.msra.mxu0 0.0
    %1251 = vmatprep.subr.mxu0 0.0
    %1252 = vmatpush1.msra.mxu0 0.0
    %1253 = vmatprep.subr.mxu0 0.0
    %1254 = vmatpush1.msra.mxu0 0.0
    %1255 = vmatprep.subr.mxu0 0.0
    %1256 = vmatpush1.msra.mxu0 0.0
    %1257 = vmatprep.subr.mxu0 0.0
    %1258 = vmatpush1.msra.mxu0 0.0
    %1259 = vmatprep.subr.mxu0 0.0
    %1260 = vmatpush1.msra.mxu0 0.0
    %1261 = vmatprep.subr.mxu0 0.0
    %1262 = vmatpush1.msra.mxu0 %v682
    %1263 = vmatprep.subr.mxu0 0.0
    %1264 = vmatpush1.msra.mxu0 %v681
    %1265 = vmatprep.subr.mxu0 0.0
    %1266 = vmatpush1.msra.mxu0 %v680
    %1267 = vmatprep.subr.mxu0 0.0
    %1268 = vmatpush1.msra.mxu0 %v679
    %1269 = vmatprep.subr.mxu0 0.0
    %1270 = vmatpush2.msra.mxu0 0.0
    %1271 = vmatprep.subr.mxu0 0.0
    %1272 = vmatpush2.msra.mxu0 0.0
    %1273 = vmatprep.subr.mxu0 0.0
    %1274 = vmatpush2.msra.mxu0 0.0
    %1275 = vmatprep.subr.mxu0 0.0
    %1276 = vmatpush2.msra.mxu0 0.0
    %1277 = vmatprep.subr.mxu0 0.0
    %1278 = vmatpush2.msra.mxu0 0.0
    %1279 = vmatprep.subr.mxu0 0.0
    %1280 = vmatpush2.msra.mxu0 0.0
    %1281 = vmatprep.subr.mxu0 0.0
    %1282 = vmatpush2.msra.mxu0 0.0
    %1283 = vmatprep.subr.mxu0 0.0
    %1284 = vmatpush2.msra.mxu0 0.0
    %1285 = vmatprep.subr.mxu0 0.0
    %1286 = vmatpush2.msra.mxu0 0.0
    %1287 = vmatprep.subr.mxu0 0.0
    %1288 = vmatpush2.msra.mxu0 0.0
    %1289 = vmatprep.subr.mxu0 0.0
    %1290 = vmatpush2.msra.mxu0 0.0
    %1291 = vmatprep.subr.mxu0 0.0
    %1292 = vmatpush2.msra.mxu0 0.0
    %1293 = vmatprep.subr.mxu0 0.0
    %1294 = vmatpush2.msra.mxu0 0.0
    %1295 = vmatprep.subr.mxu0 0.0
    %1296 = vmatpush2.msra.mxu0 0.0
    %1297 = vmatprep.subr.mxu0 0.0
    %1298 = vmatpush2.msra.mxu0 0.0
    %1299 = vmatprep.subr.mxu0 0.0
    %1300 = vmatpush2.msra.mxu0 0.0
    %1301 = vmatprep.mubr.f32.mxu0 0.0
    %1302 = vmatmul.mubr.f32.gmra.mxu0 %v1165
    %v1303 = vpop.f32.mrf.mxu0
    %v1304 = vadd.f32 0.0, %v1303
    %v1305 = vpop.f32.mrf.mxu0
    %1306 = vdwg.mxu0
    %1307 = vmatprep.subr.mxu0 0.0
    %1308 = vmatpush1.msra.mxu0 0.0
    %1309 = vmatprep.subr.mxu0 0.0
    %1310 = vmatpush1.msra.mxu0 0.0
    %1311 = vmatprep.subr.mxu0 0.0
    %1312 = vmatpush1.msra.mxu0 0.0
    %1313 = vmatprep.subr.mxu0 0.0
    %1314 = vmatpush1.msra.mxu0 0.0
    %1315 = vmatprep.subr.mxu0 0.0
    %1316 = vmatpush1.msra.mxu0 0.0
    %1317 = vmatprep.subr.mxu0 0.0
    %1318 = vmatpush1.msra.mxu0 0.0
    %1319 = vmatprep.subr.mxu0 0.0
    %1320 = vmatpush1.msra.mxu0 0.0
    %1321 = vmatprep.subr.mxu0 0.0
    %1322 = vmatpush1.msra.mxu0 0.0
    %1323 = vmatprep.subr.mxu0 0.0
    %1324 = vmatpush1.msra.mxu0 0.0
    %1325 = vmatprep.subr.mxu0 0.0
    %1326 = vmatpush1.msra.mxu0 0.0
    %1327 = vmatprep.subr.mxu0 0.0
    %1328 = vmatpush1.msra.mxu0 0.0
    %1329 = vmatprep.subr.mxu0 0.0
    %1330 = vmatpush1.msra.mxu0 0.0
    %1331 = vmatprep.subr.mxu0 0.0
    %1332 = vmatpush1.msra.mxu0 %v686
    %1333 = vmatprep.subr.mxu0 0.0
    %1334 = vmatpush1.msra.mxu0 %v685
    %1335 = vmatprep.subr.mxu0 0.0
    %1336 = vmatpush1.msra.mxu0 %v684
    %1337 = vmatprep.subr.mxu0 0.0
    %1338 = vmatpush1.msra.mxu0 %v683
    %1339 = vmatprep.subr.mxu0 0.0
    %1340 = vmatpush2.msra.mxu0 0.0
    %1341 = vmatprep.subr.mxu0 0.0
    %1342 = vmatpush2.msra.mxu0 0.0
    %1343 = vmatprep.subr.mxu0 0.0
    %1344 = vmatpush2.msra.mxu0 0.0
    %1345 = vmatprep.subr.mxu0 0.0
    %1346 = vmatpush2.msra.mxu0 0.0
    %1347 = vmatprep.subr.mxu0 0.0
    %1348 = vmatpush2.msra.mxu0 0.0
    %1349 = vmatprep.subr.mxu0 0.0
    %1350 = vmatpush2.msra.mxu0 0.0
    %1351 = vmatprep.subr.mxu0 0.0
    %1352 = vmatpush2.msra.mxu0 0.0
    %1353 = vmatprep.subr.mxu0 0.0
    %1354 = vmatpush2.msra.mxu0 0.0
    %1355 = vmatprep.subr.mxu0 0.0
    %1356 = vmatpush2.msra.mxu0 0.0
    %1357 = vmatprep.subr.mxu0 0.0
    %1358 = vmatpush2.msra.mxu0 0.0
    %1359 = vmatprep.subr.mxu0 0.0
    %1360 = vmatpush2.msra.mxu0 0.0
    %1361 = vmatprep.subr.mxu0 0.0
    %1362 = vmatpush2.msra.mxu0 0.0
    %1363 = vmatprep.subr.mxu0 0.0
    %1364 = vmatpush2.msra.mxu0 0.0
    %1365 = vmatprep.subr.mxu0 0.0
    %1366 = vmatpush2.msra.mxu0 0.0
    %1367 = vmatprep.subr.mxu0 0.0
    %1368 = vmatpush2.msra.mxu0 0.0
    %1369 = vmatprep.subr.mxu0 0.0
    %1370 = vmatpush2.msra.mxu0 0.0
    %1371 = vmatprep.mubr.f32.mxu0 0.0
    %1372 = vmatmul.mubr.f32.gmra.mxu0 %v1165
    %v1373 = vpop.f32.mrf.mxu0
    %v1374 = vadd.f32 %v837, %v1373
    %v1375 = vpop.f32.mrf.mxu0
    %1376 = vdwg.mxu0
    %v1377 = vadd.f32 %v419, %v1234
    %v1378 = vxor.u32 %v1377, 2147483648
    %v1379 = vmul.f32 %v1378, 1.442695
    %v1380 = vpow.pop %v1379
    %v1381 = vadd.f32 %v1380, 1.0
    %v1382 = vrcp.pop %v1381
    %v1383 = vmul.f32 1.0, %v1382
    %v1384 = vadd.f32 %v533, %v1304
    %v1385 = vxor.u32 %v1384, 2147483648
    %v1386 = vmul.f32 %v1385, 1.442695
    %v1387 = vpow.pop %v1386
    %v1388 = vadd.f32 %v1387, 1.0
    %v1389 = vrcp.pop %v1388
    %v1390 = vmul.f32 1.0, %v1389
    %v1391 = vmul.f32 %v1383, %v1374
    %v1392 = vadd.f32 %v647, %v1391
    %v1393 = vtanh.pop %v1392
    %v1394 = vsub.f32 1.0, %v1390
    %v1395 = vmul.f32 %v1394, %v1393
    %v1396 = vmul.f32 %v1390, %v1163
    %v1397 = vadd.f32 %v1395, %v1396
    %v1399 = vsel %vm689, %v1397, 0
    %1401 = vmatprep.subr.mxu0 0.0
    %1402 = vmatpush1.msra.mxu0 0.0
    %1403 = vmatprep.subr.mxu0 0.0
    %1404 = vmatpush1.msra.mxu0 0.0
    %1405 = vmatprep.subr.mxu0 0.0
    %1406 = vmatpush1.msra.mxu0 0.0
    %1407 = vmatprep.subr.mxu0 0.0
    %1408 = vmatpush1.msra.mxu0 0.0
    %1409 = vmatprep.subr.mxu0 0.0
    %1410 = vmatpush1.msra.mxu0 0.0
    %1411 = vmatprep.subr.mxu0 0.0
    %1412 = vmatpush1.msra.mxu0 0.0
    %1413 = vmatprep.subr.mxu0 0.0
    %1414 = vmatpush1.msra.mxu0 0.0
    %1415 = vmatprep.subr.mxu0 0.0
    %1416 = vmatpush1.msra.mxu0 0.0
    %1417 = vmatprep.subr.mxu0 0.0
    %1418 = vmatpush1.msra.mxu0 0.0
    %1419 = vmatprep.subr.mxu0 0.0
    %1420 = vmatpush1.msra.mxu0 0.0
    %1421 = vmatprep.subr.mxu0 0.0
    %1422 = vmatpush1.msra.mxu0 0.0
    %1423 = vmatprep.subr.mxu0 0.0
    %1424 = vmatpush1.msra.mxu0 0.0
    %1425 = vmatprep.subr.mxu0 0.0
    %1426 = vmatpush1.msra.mxu0 %v678
    %1427 = vmatprep.subr.mxu0 0.0
    %1428 = vmatpush1.msra.mxu0 %v677
    %1429 = vmatprep.subr.mxu0 0.0
    %1430 = vmatpush1.msra.mxu0 %v676
    %1431 = vmatprep.subr.mxu0 0.0
    %1432 = vmatpush1.msra.mxu0 %v675
    %1433 = vmatprep.subr.mxu0 0.0
    %1434 = vmatpush2.msra.mxu0 0.0
    %1435 = vmatprep.subr.mxu0 0.0
    %1436 = vmatpush2.msra.mxu0 0.0
    %1437 = vmatprep.subr.mxu0 0.0
    %1438 = vmatpush2.msra.mxu0 0.0
    %1439 = vmatprep.subr.mxu0 0.0
    %1440 = vmatpush2.msra.mxu0 0.0
    %1441 = vmatprep.subr.mxu0 0.0
    %1442 = vmatpush2.msra.mxu0 0.0
    %1443 = vmatprep.subr.mxu0 0.0
    %1444 = vmatpush2.msra.mxu0 0.0
    %1445 = vmatprep.subr.mxu0 0.0
    %1446 = vmatpush2.msra.mxu0 0.0
    %1447 = vmatprep.subr.mxu0 0.0
    %1448 = vmatpush2.msra.mxu0 0.0
    %1449 = vmatprep.subr.mxu0 0.0
    %1450 = vmatpush2.msra.mxu0 0.0
    %1451 = vmatprep.subr.mxu0 0.0
    %1452 = vmatpush2.msra.mxu0 0.0
    %1453 = vmatprep.subr.mxu0 0.0
    %1454 = vmatpush2.msra.mxu0 0.0
    %1455 = vmatprep.subr.mxu0 0.0
    %1456 = vmatpush2.msra.mxu0 0.0
    %1457 = vmatprep.subr.mxu0 0.0
    %1458 = vmatpush2.msra.mxu0 0.0
    %1459 = vmatprep.subr.mxu0 0.0
    %1460 = vmatpush2.msra.mxu0 0.0
    %1461 = vmatprep.subr.mxu0 0.0
    %1462 = vmatpush2.msra.mxu0 0.0
    %1463 = vmatprep.subr.mxu0 0.0
    %1464 = vmatpush2.msra.mxu0 0.0
    %1465 = vmatprep.mubr.f32.mxu0 0.0
    %1466 = vmatmul.mubr.f32.gmra.mxu0 %v1399
    %v1467 = vpop.f32.mrf.mxu0
    %v1468 = vadd.f32 0.0, %v1467
    %v1469 = vpop.f32.mrf.mxu0
    %1470 = vdwg.mxu0
    %1471 = vmatprep.subr.mxu0 0.0
    %1472 = vmatpush1.msra.mxu0 0.0
    %1473 = vmatprep.subr.mxu0 0.0
    %1474 = vmatpush1.msra.mxu0 0.0
    %1475 = vmatprep.subr.mxu0 0.0
    %1476 = vmatpush1.msra.mxu0 0.0
    %1477 = vmatprep.subr.mxu0 0.0
    %1478 = vmatpush1.msra.mxu0 0.0
    %1479 = vmatprep.subr.mxu0 0.0
    %1480 = vmatpush1.msra.mxu0 0.0
    %1481 = vmatprep.subr.mxu0 0.0
    %1482 = vmatpush1.msra.mxu0 0.0
    %1483 = vmatprep.subr.mxu0 0.0
    %1484 = vmatpush1.msra.mxu0 0.0
    %1485 = vmatprep.subr.mxu0 0.0
    %1486 = vmatpush1.msra.mxu0 0.0
    %1487 = vmatprep.subr.mxu0 0.0
    %1488 = vmatpush1.msra.mxu0 0.0
    %1489 = vmatprep.subr.mxu0 0.0
    %1490 = vmatpush1.msra.mxu0 0.0
    %1491 = vmatprep.subr.mxu0 0.0
    %1492 = vmatpush1.msra.mxu0 0.0
    %1493 = vmatprep.subr.mxu0 0.0
    %1494 = vmatpush1.msra.mxu0 0.0
    %1495 = vmatprep.subr.mxu0 0.0
    %1496 = vmatpush1.msra.mxu0 %v682
    %1497 = vmatprep.subr.mxu0 0.0
    %1498 = vmatpush1.msra.mxu0 %v681
    %1499 = vmatprep.subr.mxu0 0.0
    %1500 = vmatpush1.msra.mxu0 %v680
    %1501 = vmatprep.subr.mxu0 0.0
    %1502 = vmatpush1.msra.mxu0 %v679
    %1503 = vmatprep.subr.mxu0 0.0
    %1504 = vmatpush2.msra.mxu0 0.0
    %1505 = vmatprep.subr.mxu0 0.0
    %1506 = vmatpush2.msra.mxu0 0.0
    %1507 = vmatprep.subr.mxu0 0.0
    %1508 = vmatpush2.msra.mxu0 0.0
    %1509 = vmatprep.subr.mxu0 0.0
    %1510 = vmatpush2.msra.mxu0 0.0
    %1511 = vmatprep.subr.mxu0 0.0
    %1512 = vmatpush2.msra.mxu0 0.0
    %1513 = vmatprep.subr.mxu0 0.0
    %1514 = vmatpush2.msra.mxu0 0.0
    %1515 = vmatprep.subr.mxu0 0.0
    %1516 = vmatpush2.msra.mxu0 0.0
    %1517 = vmatprep.subr.mxu0 0.0
    %1518 = vmatpush2.msra.mxu0 0.0
    %1519 = vmatprep.subr.mxu0 0.0
    %1520 = vmatpush2.msra.mxu0 0.0
    %1521 = vmatprep.subr.mxu0 0.0
    %1522 = vmatpush2.msra.mxu0 0.0
    %1523 = vmatprep.subr.mxu0 0.0
    %1524 = vmatpush2.msra.mxu0 0.0
    %1525 = vmatprep.subr.mxu0 0.0
    %1526 = vmatpush2.msra.mxu0 0.0
    %1527 = vmatprep.subr.mxu0 0.0
    %1528 = vmatpush2.msra.mxu0 0.0
    %1529 = vmatprep.subr.mxu0 0.0
    %1530 = vmatpush2.msra.mxu0 0.0
    %1531 = vmatprep.subr.mxu0 0.0
    %1532 = vmatpush2.msra.mxu0 0.0
    %1533 = vmatprep.subr.mxu0 0.0
    %1534 = vmatpush2.msra.mxu0 0.0
    %1535 = vmatprep.mubr.f32.mxu0 0.0
    %1536 = vmatmul.mubr.f32.gmra.mxu0 %v1399
    %v1537 = vpop.f32.mrf.mxu0
    %v1538 = vadd.f32 0.0, %v1537
    %v1539 = vpop.f32.mrf.mxu0
    %1540 = vdwg.mxu0
    %1541 = vmatprep.subr.mxu0 0.0
    %1542 = vmatpush1.msra.mxu0 0.0
    %1543 = vmatprep.subr.mxu0 0.0
    %1544 = vmatpush1.msra.mxu0 0.0
    %1545 = vmatprep.subr.mxu0 0.0
    %1546 = vmatpush1.msra.mxu0 0.0
    %1547 = vmatprep.subr.mxu0 0.0
    %1548 = vmatpush1.msra.mxu0 0.0
    %1549 = vmatprep.subr.mxu0 0.0
    %1550 = vmatpush1.msra.mxu0 0.0
    %1551 = vmatprep.subr.mxu0 0.0
    %1552 = vmatpush1.msra.mxu0 0.0
    %1553 = vmatprep.subr.mxu0 0.0
    %1554 = vmatpush1.msra.mxu0 0.0
    %1555 = vmatprep.subr.mxu0 0.0
    %1556 = vmatpush1.msra.mxu0 0.0
    %1557 = vmatprep.subr.mxu0 0.0
    %1558 = vmatpush1.msra.mxu0 0.0
    %1559 = vmatprep.subr.mxu0 0.0
    %1560 = vmatpush1.msra.mxu0 0.0
    %1561 = vmatprep.subr.mxu0 0.0
    %1562 = vmatpush1.msra.mxu0 0.0
    %1563 = vmatprep.subr.mxu0 0.0
    %1564 = vmatpush1.msra.mxu0 0.0
    %1565 = vmatprep.subr.mxu0 0.0
    %1566 = vmatpush1.msra.mxu0 %v686
    %1567 = vmatprep.subr.mxu0 0.0
    %1568 = vmatpush1.msra.mxu0 %v685
    %1569 = vmatprep.subr.mxu0 0.0
    %1570 = vmatpush1.msra.mxu0 %v684
    %1571 = vmatprep.subr.mxu0 0.0
    %1572 = vmatpush1.msra.mxu0 %v683
    %1573 = vmatprep.subr.mxu0 0.0
    %1574 = vmatpush2.msra.mxu0 0.0
    %1575 = vmatprep.subr.mxu0 0.0
    %1576 = vmatpush2.msra.mxu0 0.0
    %1577 = vmatprep.subr.mxu0 0.0
    %1578 = vmatpush2.msra.mxu0 0.0
    %1579 = vmatprep.subr.mxu0 0.0
    %1580 = vmatpush2.msra.mxu0 0.0
    %1581 = vmatprep.subr.mxu0 0.0
    %1582 = vmatpush2.msra.mxu0 0.0
    %1583 = vmatprep.subr.mxu0 0.0
    %1584 = vmatpush2.msra.mxu0 0.0
    %1585 = vmatprep.subr.mxu0 0.0
    %1586 = vmatpush2.msra.mxu0 0.0
    %1587 = vmatprep.subr.mxu0 0.0
    %1588 = vmatpush2.msra.mxu0 0.0
    %1589 = vmatprep.subr.mxu0 0.0
    %1590 = vmatpush2.msra.mxu0 0.0
    %1591 = vmatprep.subr.mxu0 0.0
    %1592 = vmatpush2.msra.mxu0 0.0
    %1593 = vmatprep.subr.mxu0 0.0
    %1594 = vmatpush2.msra.mxu0 0.0
    %1595 = vmatprep.subr.mxu0 0.0
    %1596 = vmatpush2.msra.mxu0 0.0
    %1597 = vmatprep.subr.mxu0 0.0
    %1598 = vmatpush2.msra.mxu0 0.0
    %1599 = vmatprep.subr.mxu0 0.0
    %1600 = vmatpush2.msra.mxu0 0.0
    %1601 = vmatprep.subr.mxu0 0.0
    %1602 = vmatpush2.msra.mxu0 0.0
    %1603 = vmatprep.subr.mxu0 0.0
    %1604 = vmatpush2.msra.mxu0 0.0
    %1605 = vmatprep.mubr.f32.mxu0 0.0
    %1606 = vmatmul.mubr.f32.gmra.mxu0 %v1399
    %v1607 = vpop.f32.mrf.mxu0
    %v1608 = vadd.f32 %v837, %v1607
    %v1609 = vpop.f32.mrf.mxu0
    %1610 = vdwg.mxu0
    %v1611 = vadd.f32 %v424, %v1468
    %v1612 = vxor.u32 %v1611, 2147483648
    %v1613 = vmul.f32 %v1612, 1.442695
    %v1614 = vpow.pop %v1613
    %v1615 = vadd.f32 %v1614, 1.0
    %v1616 = vrcp.pop %v1615
    %v1617 = vmul.f32 1.0, %v1616
    %v1618 = vadd.f32 %v538, %v1538
    %v1619 = vxor.u32 %v1618, 2147483648
    %v1620 = vmul.f32 %v1619, 1.442695
    %v1621 = vpow.pop %v1620
    %v1622 = vadd.f32 %v1621, 1.0
    %v1623 = vrcp.pop %v1622
    %v1624 = vmul.f32 1.0, %v1623
    %v1625 = vmul.f32 %v1617, %v1608
    %v1626 = vadd.f32 %v652, %v1625
    %v1627 = vtanh.pop %v1626
    %v1628 = vsub.f32 1.0, %v1624
    %v1629 = vmul.f32 %v1628, %v1627
    %v1630 = vmul.f32 %v1624, %v1397
    %v1631 = vadd.f32 %v1629, %v1630
    %v1633 = vsel %vm689, %v1631, 0
    %1635 = vmatprep.subr.mxu0 0.0
    %1636 = vmatpush1.msra.mxu0 0.0
    %1637 = vmatprep.subr.mxu0 0.0
    %1638 = vmatpush1.msra.mxu0 0.0
    %1639 = vmatprep.subr.mxu0 0.0
    %1640 = vmatpush1.msra.mxu0 0.0
    %1641 = vmatprep.subr.mxu0 0.0
    %1642 = vmatpush1.msra.mxu0 0.0
    %1643 = vmatprep.subr.mxu0 0.0
    %1644 = vmatpush1.msra.mxu0 0.0
    %1645 = vmatprep.subr.mxu0 0.0
    %1646 = vmatpush1.msra.mxu0 0.0
    %1647 = vmatprep.subr.mxu0 0.0
    %1648 = vmatpush1.msra.mxu0 0.0
    %1649 = vmatprep.subr.mxu0 0.0
    %1650 = vmatpush1.msra.mxu0 0.0
    %1651 = vmatprep.subr.mxu0 0.0
    %1652 = vmatpush1.msra.mxu0 0.0
    %1653 = vmatprep.subr.mxu0 0.0
    %1654 = vmatpush1.msra.mxu0 0.0
    %1655 = vmatprep.subr.mxu0 0.0
    %1656 = vmatpush1.msra.mxu0 0.0
    %1657 = vmatprep.subr.mxu0 0.0
    %1658 = vmatpush1.msra.mxu0 0.0
    %1659 = vmatprep.subr.mxu0 0.0
    %1660 = vmatpush1.msra.mxu0 %v678
    %1661 = vmatprep.subr.mxu0 0.0
    %1662 = vmatpush1.msra.mxu0 %v677
    %1663 = vmatprep.subr.mxu0 0.0
    %1664 = vmatpush1.msra.mxu0 %v676
    %1665 = vmatprep.subr.mxu0 0.0
    %1666 = vmatpush1.msra.mxu0 %v675
    %1667 = vmatprep.subr.mxu0 0.0
    %1668 = vmatpush2.msra.mxu0 0.0
    %1669 = vmatprep.subr.mxu0 0.0
    %1670 = vmatpush2.msra.mxu0 0.0
    %1671 = vmatprep.subr.mxu0 0.0
    %1672 = vmatpush2.msra.mxu0 0.0
    %1673 = vmatprep.subr.mxu0 0.0
    %1674 = vmatpush2.msra.mxu0 0.0
    %1675 = vmatprep.subr.mxu0 0.0
    %1676 = vmatpush2.msra.mxu0 0.0
    %1677 = vmatprep.subr.mxu0 0.0
    %1678 = vmatpush2.msra.mxu0 0.0
    %1679 = vmatprep.subr.mxu0 0.0
    %1680 = vmatpush2.msra.mxu0 0.0
    %1681 = vmatprep.subr.mxu0 0.0
    %1682 = vmatpush2.msra.mxu0 0.0
    %1683 = vmatprep.subr.mxu0 0.0
    %1684 = vmatpush2.msra.mxu0 0.0
    %1685 = vmatprep.subr.mxu0 0.0
    %1686 = vmatpush2.msra.mxu0 0.0
    %1687 = vmatprep.subr.mxu0 0.0
    %1688 = vmatpush2.msra.mxu0 0.0
    %1689 = vmatprep.subr.mxu0 0.0
    %1690 = vmatpush2.msra.mxu0 0.0
    %1691 = vmatprep.subr.mxu0 0.0
    %1692 = vmatpush2.msra.mxu0 0.0
    %1693 = vmatprep.subr.mxu0 0.0
    %1694 = vmatpush2.msra.mxu0 0.0
    %1695 = vmatprep.subr.mxu0 0.0
    %1696 = vmatpush2.msra.mxu0 0.0
    %1697 = vmatprep.subr.mxu0 0.0
    %1698 = vmatpush2.msra.mxu0 0.0
    %1699 = vmatprep.mubr.f32.mxu0 0.0
    %1700 = vmatmul.mubr.f32.gmra.mxu0 %v1633
    %v1701 = vpop.f32.mrf.mxu0
    %v1702 = vadd.f32 0.0, %v1701
    %v1703 = vpop.f32.mrf.mxu0
    %1704 = vdwg.mxu0
    %1705 = vmatprep.subr.mxu0 0.0
    %1706 = vmatpush1.msra.mxu0 0.0
    %1707 = vmatprep.subr.mxu0 0.0
    %1708 = vmatpush1.msra.mxu0 0.0
    %1709 = vmatprep.subr.mxu0 0.0
    %1710 = vmatpush1.msra.mxu0 0.0
    %1711 = vmatprep.subr.mxu0 0.0
    %1712 = vmatpush1.msra.mxu0 0.0
    %1713 = vmatprep.subr.mxu0 0.0
    %1714 = vmatpush1.msra.mxu0 0.0
    %1715 = vmatprep.subr.mxu0 0.0
    %1716 = vmatpush1.msra.mxu0 0.0
    %1717 = vmatprep.subr.mxu0 0.0
    %1718 = vmatpush1.msra.mxu0 0.0
    %1719 = vmatprep.subr.mxu0 0.0
    %1720 = vmatpush1.msra.mxu0 0.0
    %1721 = vmatprep.subr.mxu0 0.0
    %1722 = vmatpush1.msra.mxu0 0.0
    %1723 = vmatprep.subr.mxu0 0.0
    %1724 = vmatpush1.msra.mxu0 0.0
    %1725 = vmatprep.subr.mxu0 0.0
    %1726 = vmatpush1.msra.mxu0 0.0
    %1727 = vmatprep.subr.mxu0 0.0
    %1728 = vmatpush1.msra.mxu0 0.0
    %1729 = vmatprep.subr.mxu0 0.0
    %1730 = vmatpush1.msra.mxu0 %v682
    %1731 = vmatprep.subr.mxu0 0.0
    %1732 = vmatpush1.msra.mxu0 %v681
    %1733 = vmatprep.subr.mxu0 0.0
    %1734 = vmatpush1.msra.mxu0 %v680
    %1735 = vmatprep.subr.mxu0 0.0
    %1736 = vmatpush1.msra.mxu0 %v679
    %1737 = vmatprep.subr.mxu0 0.0
    %1738 = vmatpush2.msra.mxu0 0.0
    %1739 = vmatprep.subr.mxu0 0.0
    %1740 = vmatpush2.msra.mxu0 0.0
    %1741 = vmatprep.subr.mxu0 0.0
    %1742 = vmatpush2.msra.mxu0 0.0
    %1743 = vmatprep.subr.mxu0 0.0
    %1744 = vmatpush2.msra.mxu0 0.0
    %1745 = vmatprep.subr.mxu0 0.0
    %1746 = vmatpush2.msra.mxu0 0.0
    %1747 = vmatprep.subr.mxu0 0.0
    %1748 = vmatpush2.msra.mxu0 0.0
    %1749 = vmatprep.subr.mxu0 0.0
    %1750 = vmatpush2.msra.mxu0 0.0
    %1751 = vmatprep.subr.mxu0 0.0
    %1752 = vmatpush2.msra.mxu0 0.0
    %1753 = vmatprep.subr.mxu0 0.0
    %1754 = vmatpush2.msra.mxu0 0.0
    %1755 = vmatprep.subr.mxu0 0.0
    %1756 = vmatpush2.msra.mxu0 0.0
    %1757 = vmatprep.subr.mxu0 0.0
    %1758 = vmatpush2.msra.mxu0 0.0
    %1759 = vmatprep.subr.mxu0 0.0
    %1760 = vmatpush2.msra.mxu0 0.0
    %1761 = vmatprep.subr.mxu0 0.0
    %1762 = vmatpush2.msra.mxu0 0.0
    %1763 = vmatprep.subr.mxu0 0.0
    %1764 = vmatpush2.msra.mxu0 0.0
    %1765 = vmatprep.subr.mxu0 0.0
    %1766 = vmatpush2.msra.mxu0 0.0
    %1767 = vmatprep.subr.mxu0 0.0
    %1768 = vmatpush2.msra.mxu0 0.0
    %1769 = vmatprep.mubr.f32.mxu0 0.0
    %1770 = vmatmul.mubr.f32.gmra.mxu0 %v1633
    %v1771 = vpop.f32.mrf.mxu0
    %v1772 = vadd.f32 0.0, %v1771
    %v1773 = vpop.f32.mrf.mxu0
    %1774 = vdwg.mxu0
    %1775 = vmatprep.subr.mxu0 0.0
    %1776 = vmatpush1.msra.mxu0 0.0
    %1777 = vmatprep.subr.mxu0 0.0
    %1778 = vmatpush1.msra.mxu0 0.0
    %1779 = vmatprep.subr.mxu0 0.0
    %1780 = vmatpush1.msra.mxu0 0.0
    %1781 = vmatprep.subr.mxu0 0.0
    %1782 = vmatpush1.msra.mxu0 0.0
    %1783 = vmatprep.subr.mxu0 0.0
    %1784 = vmatpush1.msra.mxu0 0.0
    %1785 = vmatprep.subr.mxu0 0.0
    %1786 = vmatpush1.msra.mxu0 0.0
    %1787 = vmatprep.subr.mxu0 0.0
    %1788 = vmatpush1.msra.mxu0 0.0
    %1789 = vmatprep.subr.mxu0 0.0
    %1790 = vmatpush1.msra.mxu0 0.0
    %1791 = vmatprep.subr.mxu0 0.0
    %1792 = vmatpush1.msra.mxu0 0.0
    %1793 = vmatprep.subr.mxu0 0.0
    %1794 = vmatpush1.msra.mxu0 0.0
    %1795 = vmatprep.subr.mxu0 0.0
    %1796 = vmatpush1.msra.mxu0 0.0
    %1797 = vmatprep.subr.mxu0 0.0
    %1798 = vmatpush1.msra.mxu0 0.0
    %1799 = vmatprep.subr.mxu0 0.0
    %1800 = vmatpush1.msra.mxu0 %v686
    %1801 = vmatprep.subr.mxu0 0.0
    %1802 = vmatpush1.msra.mxu0 %v685
    %1803 = vmatprep.subr.mxu0 0.0
    %1804 = vmatpush1.msra.mxu0 %v684
    %1805 = vmatprep.subr.mxu0 0.0
    %1806 = vmatpush1.msra.mxu0 %v683
    %1807 = vmatprep.subr.mxu0 0.0
    %1808 = vmatpush2.msra.mxu0 0.0
    %1809 = vmatprep.subr.mxu0 0.0
    %1810 = vmatpush2.msra.mxu0 0.0
    %1811 = vmatprep.subr.mxu0 0.0
    %1812 = vmatpush2.msra.mxu0 0.0
    %1813 = vmatprep.subr.mxu0 0.0
    %1814 = vmatpush2.msra.mxu0 0.0
    %1815 = vmatprep.subr.mxu0 0.0
    %1816 = vmatpush2.msra.mxu0 0.0
    %1817 = vmatprep.subr.mxu0 0.0
    %1818 = vmatpush2.msra.mxu0 0.0
    %1819 = vmatprep.subr.mxu0 0.0
    %1820 = vmatpush2.msra.mxu0 0.0
    %1821 = vmatprep.subr.mxu0 0.0
    %1822 = vmatpush2.msra.mxu0 0.0
    %1823 = vmatprep.subr.mxu0 0.0
    %1824 = vmatpush2.msra.mxu0 0.0
    %1825 = vmatprep.subr.mxu0 0.0
    %1826 = vmatpush2.msra.mxu0 0.0
    %1827 = vmatprep.subr.mxu0 0.0
    %1828 = vmatpush2.msra.mxu0 0.0
    %1829 = vmatprep.subr.mxu0 0.0
    %1830 = vmatpush2.msra.mxu0 0.0
    %1831 = vmatprep.subr.mxu0 0.0
    %1832 = vmatpush2.msra.mxu0 0.0
    %1833 = vmatprep.subr.mxu0 0.0
    %1834 = vmatpush2.msra.mxu0 0.0
    %1835 = vmatprep.subr.mxu0 0.0
    %1836 = vmatpush2.msra.mxu0 0.0
    %1837 = vmatprep.subr.mxu0 0.0
    %1838 = vmatpush2.msra.mxu0 0.0
    %1839 = vmatprep.mubr.f32.mxu0 0.0
    %1840 = vmatmul.mubr.f32.gmra.mxu0 %v1633
    %v1841 = vpop.f32.mrf.mxu0
    %v1842 = vadd.f32 %v837, %v1841
    %v1843 = vpop.f32.mrf.mxu0
    %1844 = vdwg.mxu0
    %v1845 = vadd.f32 %v429, %v1702
    %v1846 = vxor.u32 %v1845, 2147483648
    %v1847 = vmul.f32 %v1846, 1.442695
    %v1848 = vpow.pop %v1847
    %v1849 = vadd.f32 %v1848, 1.0
    %v1850 = vrcp.pop %v1849
    %v1851 = vmul.f32 1.0, %v1850
    %v1852 = vadd.f32 %v543, %v1772
    %v1853 = vxor.u32 %v1852, 2147483648
    %v1854 = vmul.f32 %v1853, 1.442695
    %v1855 = vpow.pop %v1854
    %v1856 = vadd.f32 %v1855, 1.0
    %v1857 = vrcp.pop %v1856
    %v1858 = vmul.f32 1.0, %v1857
    %v1859 = vmul.f32 %v1851, %v1842
    %v1860 = vadd.f32 %v657, %v1859
    %v1861 = vtanh.pop %v1860
    %v1862 = vsub.f32 1.0, %v1858
    %v1863 = vmul.f32 %v1862, %v1861
    %v1864 = vmul.f32 %v1858, %v1631
    %v1865 = vadd.f32 %v1863, %v1864
    %v1867 = vsel %vm689, %v1865, 0
    %1869 = vmatprep.subr.mxu0 0.0
    %1870 = vmatpush1.msra.mxu0 0.0
    %1871 = vmatprep.subr.mxu0 0.0
    %1872 = vmatpush1.msra.mxu0 0.0
    %1873 = vmatprep.subr.mxu0 0.0
    %1874 = vmatpush1.msra.mxu0 0.0
    %1875 = vmatprep.subr.mxu0 0.0
    %1876 = vmatpush1.msra.mxu0 0.0
    %1877 = vmatprep.subr.mxu0 0.0
    %1878 = vmatpush1.msra.mxu0 0.0
    %1879 = vmatprep.subr.mxu0 0.0
    %1880 = vmatpush1.msra.mxu0 0.0
    %1881 = vmatprep.subr.mxu0 0.0
    %1882 = vmatpush1.msra.mxu0 0.0
    %1883 = vmatprep.subr.mxu0 0.0
    %1884 = vmatpush1.msra.mxu0 0.0
    %1885 = vmatprep.subr.mxu0 0.0
    %1886 = vmatpush1.msra.mxu0 0.0
    %1887 = vmatprep.subr.mxu0 0.0
    %1888 = vmatpush1.msra.mxu0 0.0
    %1889 = vmatprep.subr.mxu0 0.0
    %1890 = vmatpush1.msra.mxu0 0.0
    %1891 = vmatprep.subr.mxu0 0.0
    %1892 = vmatpush1.msra.mxu0 0.0
    %1893 = vmatprep.subr.mxu0 0.0
    %1894 = vmatpush1.msra.mxu0 %v678
    %1895 = vmatprep.subr.mxu0 0.0
    %1896 = vmatpush1.msra.mxu0 %v677
    %1897 = vmatprep.subr.mxu0 0.0
    %1898 = vmatpush1.msra.mxu0 %v676
    %1899 = vmatprep.subr.mxu0 0.0
    %1900 = vmatpush1.msra.mxu0 %v675
    %1901 = vmatprep.subr.mxu0 0.0
    %1902 = vmatpush2.msra.mxu0 0.0
    %1903 = vmatprep.subr.mxu0 0.0
    %1904 = vmatpush2.msra.mxu0 0.0
    %1905 = vmatprep.subr.mxu0 0.0
    %1906 = vmatpush2.msra.mxu0 0.0
    %1907 = vmatprep.subr.mxu0 0.0
    %1908 = vmatpush2.msra.mxu0 0.0
    %1909 = vmatprep.subr.mxu0 0.0
    %1910 = vmatpush2.msra.mxu0 0.0
    %1911 = vmatprep.subr.mxu0 0.0
    %1912 = vmatpush2.msra.mxu0 0.0
    %1913 = vmatprep.subr.mxu0 0.0
    %1914 = vmatpush2.msra.mxu0 0.0
    %1915 = vmatprep.subr.mxu0 0.0
    %1916 = vmatpush2.msra.mxu0 0.0
    %1917 = vmatprep.subr.mxu0 0.0
    %1918 = vmatpush2.msra.mxu0 0.0
    %1919 = vmatprep.subr.mxu0 0.0
    %1920 = vmatpush2.msra.mxu0 0.0
    %1921 = vmatprep.subr.mxu0 0.0
    %1922 = vmatpush2.msra.mxu0 0.0
    %1923 = vmatprep.subr.mxu0 0.0
    %1924 = vmatpush2.msra.mxu0 0.0
    %1925 = vmatprep.subr.mxu0 0.0
    %1926 = vmatpush2.msra.mxu0 0.0
    %1927 = vmatprep.subr.mxu0 0.0
    %1928 = vmatpush2.msra.mxu0 0.0
    %1929 = vmatprep.subr.mxu0 0.0
    %1930 = vmatpush2.msra.mxu0 0.0
    %1931 = vmatprep.subr.mxu0 0.0
    %1932 = vmatpush2.msra.mxu0 0.0
    %1933 = vmatprep.mubr.f32.mxu0 0.0
    %1934 = vmatmul.mubr.f32.gmra.mxu0 %v1867
    %v1935 = vpop.f32.mrf.mxu0
    %v1936 = vadd.f32 0.0, %v1935
    %v1937 = vpop.f32.mrf.mxu0
    %1938 = vdwg.mxu0
    %1939 = vmatprep.subr.mxu0 0.0
    %1940 = vmatpush1.msra.mxu0 0.0
    %1941 = vmatprep.subr.mxu0 0.0
    %1942 = vmatpush1.msra.mxu0 0.0
    %1943 = vmatprep.subr.mxu0 0.0
    %1944 = vmatpush1.msra.mxu0 0.0
    %1945 = vmatprep.subr.mxu0 0.0
    %1946 = vmatpush1.msra.mxu0 0.0
    %1947 = vmatprep.subr.mxu0 0.0
    %1948 = vmatpush1.msra.mxu0 0.0
    %1949 = vmatprep.subr.mxu0 0.0
    %1950 = vmatpush1.msra.mxu0 0.0
    %1951 = vmatprep.subr.mxu0 0.0
    %1952 = vmatpush1.msra.mxu0 0.0
    %1953 = vmatprep.subr.mxu0 0.0
    %1954 = vmatpush1.msra.mxu0 0.0
    %1955 = vmatprep.subr.mxu0 0.0
    %1956 = vmatpush1.msra.mxu0 0.0
    %1957 = vmatprep.subr.mxu0 0.0
    %1958 = vmatpush1.msra.mxu0 0.0
    %1959 = vmatprep.subr.mxu0 0.0
    %1960 = vmatpush1.msra.mxu0 0.0
    %1961 = vmatprep.subr.mxu0 0.0
    %1962 = vmatpush1.msra.mxu0 0.0
    %1963 = vmatprep.subr.mxu0 0.0
    %1964 = vmatpush1.msra.mxu0 %v682
    %1965 = vmatprep.subr.mxu0 0.0
    %1966 = vmatpush1.msra.mxu0 %v681
    %1967 = vmatprep.subr.mxu0 0.0
    %1968 = vmatpush1.msra.mxu0 %v680
    %1969 = vmatprep.subr.mxu0 0.0
    %1970 = vmatpush1.msra.mxu0 %v679
    %1971 = vmatprep.subr.mxu0 0.0
    %1972 = vmatpush2.msra.mxu0 0.0
    %1973 = vmatprep.subr.mxu0 0.0
    %1974 = vmatpush2.msra.mxu0 0.0
    %1975 = vmatprep.subr.mxu0 0.0
    %1976 = vmatpush2.msra.mxu0 0.0
    %1977 = vmatprep.subr.mxu0 0.0
    %1978 = vmatpush2.msra.mxu0 0.0
    %1979 = vmatprep.subr.mxu0 0.0
    %1980 = vmatpush2.msra.mxu0 0.0
    %1981 = vmatprep.subr.mxu0 0.0
    %1982 = vmatpush2.msra.mxu0 0.0
    %1983 = vmatprep.subr.mxu0 0.0
    %1984 = vmatpush2.msra.mxu0 0.0
    %1985 = vmatprep.subr.mxu0 0.0
    %1986 = vmatpush2.msra.mxu0 0.0
    %1987 = vmatprep.subr.mxu0 0.0
    %1988 = vmatpush2.msra.mxu0 0.0
    %1989 = vmatprep.subr.mxu0 0.0
    %1990 = vmatpush2.msra.mxu0 0.0
    %1991 = vmatprep.subr.mxu0 0.0
    %1992 = vmatpush2.msra.mxu0 0.0
    %1993 = vmatprep.subr.mxu0 0.0
    %1994 = vmatpush2.msra.mxu0 0.0
    %1995 = vmatprep.subr.mxu0 0.0
    %1996 = vmatpush2.msra.mxu0 0.0
    %1997 = vmatprep.subr.mxu0 0.0
    %1998 = vmatpush2.msra.mxu0 0.0
    %1999 = vmatprep.subr.mxu0 0.0
    %2000 = vmatpush2.msra.mxu0 0.0
    %2001 = vmatprep.subr.mxu0 0.0
    %2002 = vmatpush2.msra.mxu0 0.0
    %2003 = vmatprep.mubr.f32.mxu0 0.0
    %2004 = vmatmul.mubr.f32.gmra.mxu0 %v1867
    %v2005 = vpop.f32.mrf.mxu0
    %v2006 = vadd.f32 0.0, %v2005
    %v2007 = vpop.f32.mrf.mxu0
    %2008 = vdwg.mxu0
    %2009 = vmatprep.subr.mxu0 0.0
    %2010 = vmatpush1.msra.mxu0 0.0
    %2011 = vmatprep.subr.mxu0 0.0
    %2012 = vmatpush1.msra.mxu0 0.0
    %2013 = vmatprep.subr.mxu0 0.0
    %2014 = vmatpush1.msra.mxu0 0.0
    %2015 = vmatprep.subr.mxu0 0.0
    %2016 = vmatpush1.msra.mxu0 0.0
    %2017 = vmatprep.subr.mxu0 0.0
    %2018 = vmatpush1.msra.mxu0 0.0
    %2019 = vmatprep.subr.mxu0 0.0
    %2020 = vmatpush1.msra.mxu0 0.0
    %2021 = vmatprep.subr.mxu0 0.0
    %2022 = vmatpush1.msra.mxu0 0.0
    %2023 = vmatprep.subr.mxu0 0.0
    %2024 = vmatpush1.msra.mxu0 0.0
    %2025 = vmatprep.subr.mxu0 0.0
    %2026 = vmatpush1.msra.mxu0 0.0
    %2027 = vmatprep.subr.mxu0 0.0
    %2028 = vmatpush1.msra.mxu0 0.0
    %2029 = vmatprep.subr.mxu0 0.0
    %2030 = vmatpush1.msra.mxu0 0.0
    %2031 = vmatprep.subr.mxu0 0.0
    %2032 = vmatpush1.msra.mxu0 0.0
    %2033 = vmatprep.subr.mxu0 0.0
    %2034 = vmatpush1.msra.mxu0 %v686
    %2035 = vmatprep.subr.mxu0 0.0
    %2036 = vmatpush1.msra.mxu0 %v685
    %2037 = vmatprep.subr.mxu0 0.0
    %2038 = vmatpush1.msra.mxu0 %v684
    %2039 = vmatprep.subr.mxu0 0.0
    %2040 = vmatpush1.msra.mxu0 %v683
    %2041 = vmatprep.subr.mxu0 0.0
    %2042 = vmatpush2.msra.mxu0 0.0
    %2043 = vmatprep.subr.mxu0 0.0
    %2044 = vmatpush2.msra.mxu0 0.0
    %2045 = vmatprep.subr.mxu0 0.0
    %2046 = vmatpush2.msra.mxu0 0.0
    %2047 = vmatprep.subr.mxu0 0.0
    %2048 = vmatpush2.msra.mxu0 0.0
    %2049 = vmatprep.subr.mxu0 0.0
    %2050 = vmatpush2.msra.mxu0 0.0
    %2051 = vmatprep.subr.mxu0 0.0
    %2052 = vmatpush2.msra.mxu0 0.0
    %2053 = vmatprep.subr.mxu0 0.0
    %2054 = vmatpush2.msra.mxu0 0.0
    %2055 = vmatprep.subr.mxu0 0.0
    %2056 = vmatpush2.msra.mxu0 0.0
    %2057 = vmatprep.subr.mxu0 0.0
    %2058 = vmatpush2.msra.mxu0 0.0
    %2059 = vmatprep.subr.mxu0 0.0
    %2060 = vmatpush2.msra.mxu0 0.0
    %2061 = vmatprep.subr.mxu0 0.0
    %2062 = vmatpush2.msra.mxu0 0.0
    %2063 = vmatprep.subr.mxu0 0.0
    %2064 = vmatpush2.msra.mxu0 0.0
    %2065 = vmatprep.subr.mxu0 0.0
    %2066 = vmatpush2.msra.mxu0 0.0
    %2067 = vmatprep.subr.mxu0 0.0
    %2068 = vmatpush2.msra.mxu0 0.0
    %2069 = vmatprep.subr.mxu0 0.0
    %2070 = vmatpush2.msra.mxu0 0.0
    %2071 = vmatprep.subr.mxu0 0.0
    %2072 = vmatpush2.msra.mxu0 0.0
    %2073 = vmatprep.mubr.f32.mxu0 0.0
    %2074 = vmatmul.mubr.f32.gmra.mxu0 %v1867
    %v2075 = vpop.f32.mrf.mxu0
    %v2076 = vadd.f32 %v837, %v2075
    %v2077 = vpop.f32.mrf.mxu0
    %2078 = vdwg.mxu0
    %v2079 = vadd.f32 %v434, %v1936
    %v2080 = vxor.u32 %v2079, 2147483648
    %v2081 = vmul.f32 %v2080, 1.442695
    %v2082 = vpow.pop %v2081
    %v2083 = vadd.f32 %v2082, 1.0
    %v2084 = vrcp.pop %v2083
    %v2085 = vmul.f32 1.0, %v2084
    %v2086 = vadd.f32 %v548, %v2006
    %v2087 = vxor.u32 %v2086, 2147483648
    %v2088 = vmul.f32 %v2087, 1.442695
    %v2089 = vpow.pop %v2088
    %v2090 = vadd.f32 %v2089, 1.0
    %v2091 = vrcp.pop %v2090
    %v2092 = vmul.f32 1.0, %v2091
    %v2093 = vmul.f32 %v2085, %v2076
    %v2094 = vadd.f32 %v662, %v2093
    %v2095 = vtanh.pop %v2094
    %v2096 = vsub.f32 1.0, %v2092
    %v2097 = vmul.f32 %v2096, %v2095
    %v2098 = vmul.f32 %v2092, %v1865
    %v2099 = vadd.f32 %v2097, %v2098
    %v2101 = vsel %vm689, %v2099, 0
    %2103 = vmatprep.subr.mxu0 0.0
    %2104 = vmatpush1.msra.mxu0 0.0
    %2105 = vmatprep.subr.mxu0 0.0
    %2106 = vmatpush1.msra.mxu0 0.0
    %2107 = vmatprep.subr.mxu0 0.0
    %2108 = vmatpush1.msra.mxu0 0.0
    %2109 = vmatprep.subr.mxu0 0.0
    %2110 = vmatpush1.msra.mxu0 0.0
    %2111 = vmatprep.subr.mxu0 0.0
    %2112 = vmatpush1.msra.mxu0 0.0
    %2113 = vmatprep.subr.mxu0 0.0
    %2114 = vmatpush1.msra.mxu0 0.0
    %2115 = vmatprep.subr.mxu0 0.0
    %2116 = vmatpush1.msra.mxu0 0.0
    %2117 = vmatprep.subr.mxu0 0.0
    %2118 = vmatpush1.msra.mxu0 0.0
    %2119 = vmatprep.subr.mxu0 0.0
    %2120 = vmatpush1.msra.mxu0 0.0
    %2121 = vmatprep.subr.mxu0 0.0
    %2122 = vmatpush1.msra.mxu0 0.0
    %2123 = vmatprep.subr.mxu0 0.0
    %2124 = vmatpush1.msra.mxu0 0.0
    %2125 = vmatprep.subr.mxu0 0.0
    %2126 = vmatpush1.msra.mxu0 0.0
    %2127 = vmatprep.subr.mxu0 0.0
    %2128 = vmatpush1.msra.mxu0 %v678
    %2129 = vmatprep.subr.mxu0 0.0
    %2130 = vmatpush1.msra.mxu0 %v677
    %2131 = vmatprep.subr.mxu0 0.0
    %2132 = vmatpush1.msra.mxu0 %v676
    %2133 = vmatprep.subr.mxu0 0.0
    %2134 = vmatpush1.msra.mxu0 %v675
    %2135 = vmatprep.subr.mxu0 0.0
    %2136 = vmatpush2.msra.mxu0 0.0
    %2137 = vmatprep.subr.mxu0 0.0
    %2138 = vmatpush2.msra.mxu0 0.0
    %2139 = vmatprep.subr.mxu0 0.0
    %2140 = vmatpush2.msra.mxu0 0.0
    %2141 = vmatprep.subr.mxu0 0.0
    %2142 = vmatpush2.msra.mxu0 0.0
    %2143 = vmatprep.subr.mxu0 0.0
    %2144 = vmatpush2.msra.mxu0 0.0
    %2145 = vmatprep.subr.mxu0 0.0
    %2146 = vmatpush2.msra.mxu0 0.0
    %2147 = vmatprep.subr.mxu0 0.0
    %2148 = vmatpush2.msra.mxu0 0.0
    %2149 = vmatprep.subr.mxu0 0.0
    %2150 = vmatpush2.msra.mxu0 0.0
    %2151 = vmatprep.subr.mxu0 0.0
    %2152 = vmatpush2.msra.mxu0 0.0
    %2153 = vmatprep.subr.mxu0 0.0
    %2154 = vmatpush2.msra.mxu0 0.0
    %2155 = vmatprep.subr.mxu0 0.0
    %2156 = vmatpush2.msra.mxu0 0.0
    %2157 = vmatprep.subr.mxu0 0.0
    %2158 = vmatpush2.msra.mxu0 0.0
    %2159 = vmatprep.subr.mxu0 0.0
    %2160 = vmatpush2.msra.mxu0 0.0
    %2161 = vmatprep.subr.mxu0 0.0
    %2162 = vmatpush2.msra.mxu0 0.0
    %2163 = vmatprep.subr.mxu0 0.0
    %2164 = vmatpush2.msra.mxu0 0.0
    %2165 = vmatprep.subr.mxu0 0.0
    %2166 = vmatpush2.msra.mxu0 0.0
    %2167 = vmatprep.mubr.f32.mxu0 0.0
    %2168 = vmatmul.mubr.f32.gmra.mxu0 %v2101
    %v2169 = vpop.f32.mrf.mxu0
    %v2170 = vadd.f32 0.0, %v2169
    %v2171 = vpop.f32.mrf.mxu0
    %2172 = vdwg.mxu0
    %2173 = vmatprep.subr.mxu0 0.0
    %2174 = vmatpush1.msra.mxu0 0.0
    %2175 = vmatprep.subr.mxu0 0.0
    %2176 = vmatpush1.msra.mxu0 0.0
    %2177 = vmatprep.subr.mxu0 0.0
    %2178 = vmatpush1.msra.mxu0 0.0
    %2179 = vmatprep.subr.mxu0 0.0
    %2180 = vmatpush1.msra.mxu0 0.0
    %2181 = vmatprep.subr.mxu0 0.0
    %2182 = vmatpush1.msra.mxu0 0.0
    %2183 = vmatprep.subr.mxu0 0.0
    %2184 = vmatpush1.msra.mxu0 0.0
    %2185 = vmatprep.subr.mxu0 0.0
    %2186 = vmatpush1.msra.mxu0 0.0
    %2187 = vmatprep.subr.mxu0 0.0
    %2188 = vmatpush1.msra.mxu0 0.0
    %2189 = vmatprep.subr.mxu0 0.0
    %2190 = vmatpush1.msra.mxu0 0.0
    %2191 = vmatprep.subr.mxu0 0.0
    %2192 = vmatpush1.msra.mxu0 0.0
    %2193 = vmatprep.subr.mxu0 0.0
    %2194 = vmatpush1.msra.mxu0 0.0
    %2195 = vmatprep.subr.mxu0 0.0
    %2196 = vmatpush1.msra.mxu0 0.0
    %2197 = vmatprep.subr.mxu0 0.0
    %2198 = vmatpush1.msra.mxu0 %v682
    %2199 = vmatprep.subr.mxu0 0.0
    %2200 = vmatpush1.msra.mxu0 %v681
    %2201 = vmatprep.subr.mxu0 0.0
    %2202 = vmatpush1.msra.mxu0 %v680
    %2203 = vmatprep.subr.mxu0 0.0
    %2204 = vmatpush1.msra.mxu0 %v679
    %2205 = vmatprep.subr.mxu0 0.0
    %2206 = vmatpush2.msra.mxu0 0.0
    %2207 = vmatprep.subr.mxu0 0.0
    %2208 = vmatpush2.msra.mxu0 0.0
    %2209 = vmatprep.subr.mxu0 0.0
    %2210 = vmatpush2.msra.mxu0 0.0
    %2211 = vmatprep.subr.mxu0 0.0
    %2212 = vmatpush2.msra.mxu0 0.0
    %2213 = vmatprep.subr.mxu0 0.0
    %2214 = vmatpush2.msra.mxu0 0.0
    %2215 = vmatprep.subr.mxu0 0.0
    %2216 = vmatpush2.msra.mxu0 0.0
    %2217 = vmatprep.subr.mxu0 0.0
    %2218 = vmatpush2.msra.mxu0 0.0
    %2219 = vmatprep.subr.mxu0 0.0
    %2220 = vmatpush2.msra.mxu0 0.0
    %2221 = vmatprep.subr.mxu0 0.0
    %2222 = vmatpush2.msra.mxu0 0.0
    %2223 = vmatprep.subr.mxu0 0.0
    %2224 = vmatpush2.msra.mxu0 0.0
    %2225 = vmatprep.subr.mxu0 0.0
    %2226 = vmatpush2.msra.mxu0 0.0
    %2227 = vmatprep.subr.mxu0 0.0
    %2228 = vmatpush2.msra.mxu0 0.0
    %2229 = vmatprep.subr.mxu0 0.0
    %2230 = vmatpush2.msra.mxu0 0.0
    %2231 = vmatprep.subr.mxu0 0.0
    %2232 = vmatpush2.msra.mxu0 0.0
    %2233 = vmatprep.subr.mxu0 0.0
    %2234 = vmatpush2.msra.mxu0 0.0
    %2235 = vmatprep.subr.mxu0 0.0
    %2236 = vmatpush2.msra.mxu0 0.0
    %2237 = vmatprep.mubr.f32.mxu0 0.0
    %2238 = vmatmul.mubr.f32.gmra.mxu0 %v2101
    %v2239 = vpop.f32.mrf.mxu0
    %v2240 = vadd.f32 0.0, %v2239
    %v2241 = vpop.f32.mrf.mxu0
    %2242 = vdwg.mxu0
    %2243 = vmatprep.subr.mxu0 0.0
    %2244 = vmatpush1.msra.mxu0 0.0
    %2245 = vmatprep.subr.mxu0 0.0
    %2246 = vmatpush1.msra.mxu0 0.0
    %2247 = vmatprep.subr.mxu0 0.0
    %2248 = vmatpush1.msra.mxu0 0.0
    %2249 = vmatprep.subr.mxu0 0.0
    %2250 = vmatpush1.msra.mxu0 0.0
    %2251 = vmatprep.subr.mxu0 0.0
    %2252 = vmatpush1.msra.mxu0 0.0
    %2253 = vmatprep.subr.mxu0 0.0
    %2254 = vmatpush1.msra.mxu0 0.0
    %2255 = vmatprep.subr.mxu0 0.0
    %2256 = vmatpush1.msra.mxu0 0.0
    %2257 = vmatprep.subr.mxu0 0.0
    %2258 = vmatpush1.msra.mxu0 0.0
    %2259 = vmatprep.subr.mxu0 0.0
    %2260 = vmatpush1.msra.mxu0 0.0
    %2261 = vmatprep.subr.mxu0 0.0
    %2262 = vmatpush1.msra.mxu0 0.0
    %2263 = vmatprep.subr.mxu0 0.0
    %2264 = vmatpush1.msra.mxu0 0.0
    %2265 = vmatprep.subr.mxu0 0.0
    %2266 = vmatpush1.msra.mxu0 0.0
    %2267 = vmatprep.subr.mxu0 0.0
    %2268 = vmatpush1.msra.mxu0 %v686
    %2269 = vmatprep.subr.mxu0 0.0
    %2270 = vmatpush1.msra.mxu0 %v685
    %2271 = vmatprep.subr.mxu0 0.0
    %2272 = vmatpush1.msra.mxu0 %v684
    %2273 = vmatprep.subr.mxu0 0.0
    %2274 = vmatpush1.msra.mxu0 %v683
    %2275 = vmatprep.subr.mxu0 0.0
    %2276 = vmatpush2.msra.mxu0 0.0
    %2277 = vmatprep.subr.mxu0 0.0
    %2278 = vmatpush2.msra.mxu0 0.0
    %2279 = vmatprep.subr.mxu0 0.0
    %2280 = vmatpush2.msra.mxu0 0.0
    %2281 = vmatprep.subr.mxu0 0.0
    %2282 = vmatpush2.msra.mxu0 0.0
    %2283 = vmatprep.subr.mxu0 0.0
    %2284 = vmatpush2.msra.mxu0 0.0
    %2285 = vmatprep.subr.mxu0 0.0
    %2286 = vmatpush2.msra.mxu0 0.0
    %2287 = vmatprep.subr.mxu0 0.0
    %2288 = vmatpush2.msra.mxu0 0.0
    %2289 = vmatprep.subr.mxu0 0.0
    %2290 = vmatpush2.msra.mxu0 0.0
    %2291 = vmatprep.subr.mxu0 0.0
    %2292 = vmatpush2.msra.mxu0 0.0
    %2293 = vmatprep.subr.mxu0 0.0
    %2294 = vmatpush2.msra.mxu0 0.0
    %2295 = vmatprep.subr.mxu0 0.0
    %2296 = vmatpush2.msra.mxu0 0.0
    %2297 = vmatprep.subr.mxu0 0.0
    %2298 = vmatpush2.msra.mxu0 0.0
    %2299 = vmatprep.subr.mxu0 0.0
    %2300 = vmatpush2.msra.mxu0 0.0
    %2301 = vmatprep.subr.mxu0 0.0
    %2302 = vmatpush2.msra.mxu0 0.0
    %2303 = vmatprep.subr.mxu0 0.0
    %2304 = vmatpush2.msra.mxu0 0.0
    %2305 = vmatprep.subr.mxu0 0.0
    %2306 = vmatpush2.msra.mxu0 0.0
    %2307 = vmatprep.mubr.f32.mxu0 0.0
    %2308 = vmatmul.mubr.f32.gmra.mxu0 %v2101
    %v2309 = vpop.f32.mrf.mxu0
    %v2310 = vadd.f32 %v837, %v2309
    %v2311 = vpop.f32.mrf.mxu0
    %2312 = vdwg.mxu0
    %v2313 = vadd.f32 %v439, %v2170
    %v2314 = vxor.u32 %v2313, 2147483648
    %v2315 = vmul.f32 %v2314, 1.442695
    %v2316 = vpow.pop %v2315
    %v2317 = vadd.f32 %v2316, 1.0
    %v2318 = vrcp.pop %v2317
    %v2319 = vmul.f32 1.0, %v2318
    %v2320 = vadd.f32 %v553, %v2240
    %v2321 = vxor.u32 %v2320, 2147483648
    %v2322 = vmul.f32 %v2321, 1.442695
    %v2323 = vpow.pop %v2322
    %v2324 = vadd.f32 %v2323, 1.0
    %v2325 = vrcp.pop %v2324
    %v2326 = vmul.f32 1.0, %v2325
    %v2327 = vmul.f32 %v2319, %v2310
    %v2328 = vadd.f32 %v667, %v2327
    %v2329 = vtanh.pop %v2328
    %v2330 = vsub.f32 1.0, %v2326
    %v2331 = vmul.f32 %v2330, %v2329
    %v2332 = vmul.f32 %v2326, %v2099
    %v2333 = vadd.f32 %v2331, %v2332
    %v2335 = vsel %vm689, %v2333, 0
    %2337 = vmatprep.subr.mxu0 0.0
    %2338 = vmatpush1.msra.mxu0 0.0
    %2339 = vmatprep.subr.mxu0 0.0
    %2340 = vmatpush1.msra.mxu0 0.0
    %2341 = vmatprep.subr.mxu0 0.0
    %2342 = vmatpush1.msra.mxu0 0.0
    %2343 = vmatprep.subr.mxu0 0.0
    %2344 = vmatpush1.msra.mxu0 0.0
    %2345 = vmatprep.subr.mxu0 0.0
    %2346 = vmatpush1.msra.mxu0 0.0
    %2347 = vmatprep.subr.mxu0 0.0
    %2348 = vmatpush1.msra.mxu0 0.0
    %2349 = vmatprep.subr.mxu0 0.0
    %2350 = vmatpush1.msra.mxu0 0.0
    %2351 = vmatprep.subr.mxu0 0.0
    %2352 = vmatpush1.msra.mxu0 0.0
    %2353 = vmatprep.subr.mxu0 0.0
    %2354 = vmatpush1.msra.mxu0 0.0
    %2355 = vmatprep.subr.mxu0 0.0
    %2356 = vmatpush1.msra.mxu0 0.0
    %2357 = vmatprep.subr.mxu0 0.0
    %2358 = vmatpush1.msra.mxu0 0.0
    %2359 = vmatprep.subr.mxu0 0.0
    %2360 = vmatpush1.msra.mxu0 0.0
    %2361 = vmatprep.subr.mxu0 0.0
    %2362 = vmatpush1.msra.mxu0 %v678
    %2363 = vmatprep.subr.mxu0 0.0
    %2364 = vmatpush1.msra.mxu0 %v677
    %2365 = vmatprep.subr.mxu0 0.0
    %2366 = vmatpush1.msra.mxu0 %v676
    %2367 = vmatprep.subr.mxu0 0.0
    %2368 = vmatpush1.msra.mxu0 %v675
    %2369 = vmatprep.subr.mxu0 0.0
    %2370 = vmatpush2.msra.mxu0 0.0
    %2371 = vmatprep.subr.mxu0 0.0
    %2372 = vmatpush2.msra.mxu0 0.0
    %2373 = vmatprep.subr.mxu0 0.0
    %2374 = vmatpush2.msra.mxu0 0.0
    %2375 = vmatprep.subr.mxu0 0.0
    %2376 = vmatpush2.msra.mxu0 0.0
    %2377 = vmatprep.subr.mxu0 0.0
    %2378 = vmatpush2.msra.mxu0 0.0
    %2379 = vmatprep.subr.mxu0 0.0
    %2380 = vmatpush2.msra.mxu0 0.0
    %2381 = vmatprep.subr.mxu0 0.0
    %2382 = vmatpush2.msra.mxu0 0.0
    %2383 = vmatprep.subr.mxu0 0.0
    %2384 = vmatpush2.msra.mxu0 0.0
    %2385 = vmatprep.subr.mxu0 0.0
    %2386 = vmatpush2.msra.mxu0 0.0
    %2387 = vmatprep.subr.mxu0 0.0
    %2388 = vmatpush2.msra.mxu0 0.0
    %2389 = vmatprep.subr.mxu0 0.0
    %2390 = vmatpush2.msra.mxu0 0.0
    %2391 = vmatprep.subr.mxu0 0.0
    %2392 = vmatpush2.msra.mxu0 0.0
    %2393 = vmatprep.subr.mxu0 0.0
    %2394 = vmatpush2.msra.mxu0 0.0
    %2395 = vmatprep.subr.mxu0 0.0
    %2396 = vmatpush2.msra.mxu0 0.0
    %2397 = vmatprep.subr.mxu0 0.0
    %2398 = vmatpush2.msra.mxu0 0.0
    %2399 = vmatprep.subr.mxu0 0.0
    %2400 = vmatpush2.msra.mxu0 0.0
    %2401 = vmatprep.mubr.f32.mxu0 0.0
    %2402 = vmatmul.mubr.f32.gmra.mxu0 %v2335
    %v2403 = vpop.f32.mrf.mxu0
    %v2404 = vadd.f32 0.0, %v2403
    %v2405 = vpop.f32.mrf.mxu0
    %2406 = vdwg.mxu0
    %2407 = vmatprep.subr.mxu0 0.0
    %2408 = vmatpush1.msra.mxu0 0.0
    %2409 = vmatprep.subr.mxu0 0.0
    %2410 = vmatpush1.msra.mxu0 0.0
    %2411 = vmatprep.subr.mxu0 0.0
    %2412 = vmatpush1.msra.mxu0 0.0
    %2413 = vmatprep.subr.mxu0 0.0
    %2414 = vmatpush1.msra.mxu0 0.0
    %2415 = vmatprep.subr.mxu0 0.0
    %2416 = vmatpush1.msra.mxu0 0.0
    %2417 = vmatprep.subr.mxu0 0.0
    %2418 = vmatpush1.msra.mxu0 0.0
    %2419 = vmatprep.subr.mxu0 0.0
    %2420 = vmatpush1.msra.mxu0 0.0
    %2421 = vmatprep.subr.mxu0 0.0
    %2422 = vmatpush1.msra.mxu0 0.0
    %2423 = vmatprep.subr.mxu0 0.0
    %2424 = vmatpush1.msra.mxu0 0.0
    %2425 = vmatprep.subr.mxu0 0.0
    %2426 = vmatpush1.msra.mxu0 0.0
    %2427 = vmatprep.subr.mxu0 0.0
    %2428 = vmatpush1.msra.mxu0 0.0
    %2429 = vmatprep.subr.mxu0 0.0
    %2430 = vmatpush1.msra.mxu0 0.0
    %2431 = vmatprep.subr.mxu0 0.0
    %2432 = vmatpush1.msra.mxu0 %v682
    %2433 = vmatprep.subr.mxu0 0.0
    %2434 = vmatpush1.msra.mxu0 %v681
    %2435 = vmatprep.subr.mxu0 0.0
    %2436 = vmatpush1.msra.mxu0 %v680
    %2437 = vmatprep.subr.mxu0 0.0
    %2438 = vmatpush1.msra.mxu0 %v679
    %2439 = vmatprep.subr.mxu0 0.0
    %2440 = vmatpush2.msra.mxu0 0.0
    %2441 = vmatprep.subr.mxu0 0.0
    %2442 = vmatpush2.msra.mxu0 0.0
    %2443 = vmatprep.subr.mxu0 0.0
    %2444 = vmatpush2.msra.mxu0 0.0
    %2445 = vmatprep.subr.mxu0 0.0
    %2446 = vmatpush2.msra.mxu0 0.0
    %2447 = vmatprep.subr.mxu0 0.0
    %2448 = vmatpush2.msra.mxu0 0.0
    %2449 = vmatprep.subr.mxu0 0.0
    %2450 = vmatpush2.msra.mxu0 0.0
    %2451 = vmatprep.subr.mxu0 0.0
    %2452 = vmatpush2.msra.mxu0 0.0
    %2453 = vmatprep.subr.mxu0 0.0
    %2454 = vmatpush2.msra.mxu0 0.0
    %2455 = vmatprep.subr.mxu0 0.0
    %2456 = vmatpush2.msra.mxu0 0.0
    %2457 = vmatprep.subr.mxu0 0.0
    %2458 = vmatpush2.msra.mxu0 0.0
    %2459 = vmatprep.subr.mxu0 0.0
    %2460 = vmatpush2.msra.mxu0 0.0
    %2461 = vmatprep.subr.mxu0 0.0
    %2462 = vmatpush2.msra.mxu0 0.0
    %2463 = vmatprep.subr.mxu0 0.0
    %2464 = vmatpush2.msra.mxu0 0.0
    %2465 = vmatprep.subr.mxu0 0.0
    %2466 = vmatpush2.msra.mxu0 0.0
    %2467 = vmatprep.subr.mxu0 0.0
    %2468 = vmatpush2.msra.mxu0 0.0
    %2469 = vmatprep.subr.mxu0 0.0
    %2470 = vmatpush2.msra.mxu0 0.0
    %2471 = vmatprep.mubr.f32.mxu0 0.0
    %2472 = vmatmul.mubr.f32.gmra.mxu0 %v2335
    %v2473 = vpop.f32.mrf.mxu0
    %v2474 = vadd.f32 0.0, %v2473
    %v2475 = vpop.f32.mrf.mxu0
    %2476 = vdwg.mxu0
    %2477 = vmatprep.subr.mxu0 0.0
    %2478 = vmatpush1.msra.mxu0 0.0
    %2479 = vmatprep.subr.mxu0 0.0
    %2480 = vmatpush1.msra.mxu0 0.0
    %2481 = vmatprep.subr.mxu0 0.0
    %2482 = vmatpush1.msra.mxu0 0.0
    %2483 = vmatprep.subr.mxu0 0.0
    %2484 = vmatpush1.msra.mxu0 0.0
    %2485 = vmatprep.subr.mxu0 0.0
    %2486 = vmatpush1.msra.mxu0 0.0
    %2487 = vmatprep.subr.mxu0 0.0
    %2488 = vmatpush1.msra.mxu0 0.0
    %2489 = vmatprep.subr.mxu0 0.0
    %2490 = vmatpush1.msra.mxu0 0.0
    %2491 = vmatprep.subr.mxu0 0.0
    %2492 = vmatpush1.msra.mxu0 0.0
    %2493 = vmatprep.subr.mxu0 0.0
    %2494 = vmatpush1.msra.mxu0 0.0
    %2495 = vmatprep.subr.mxu0 0.0
    %2496 = vmatpush1.msra.mxu0 0.0
    %2497 = vmatprep.subr.mxu0 0.0
    %2498 = vmatpush1.msra.mxu0 0.0
    %2499 = vmatprep.subr.mxu0 0.0
    %2500 = vmatpush1.msra.mxu0 0.0
    %2501 = vmatprep.subr.mxu0 0.0
    %2502 = vmatpush1.msra.mxu0 %v686
    %2503 = vmatprep.subr.mxu0 0.0
    %2504 = vmatpush1.msra.mxu0 %v685
    %2505 = vmatprep.subr.mxu0 0.0
    %2506 = vmatpush1.msra.mxu0 %v684
    %2507 = vmatprep.subr.mxu0 0.0
    %2508 = vmatpush1.msra.mxu0 %v683
    %2509 = vmatprep.subr.mxu0 0.0
    %2510 = vmatpush2.msra.mxu0 0.0
    %2511 = vmatprep.subr.mxu0 0.0
    %2512 = vmatpush2.msra.mxu0 0.0
    %2513 = vmatprep.subr.mxu0 0.0
    %2514 = vmatpush2.msra.mxu0 0.0
    %2515 = vmatprep.subr.mxu0 0.0
    %2516 = vmatpush2.msra.mxu0 0.0
    %2517 = vmatprep.subr.mxu0 0.0
    %2518 = vmatpush2.msra.mxu0 0.0
    %2519 = vmatprep.subr.mxu0 0.0
    %2520 = vmatpush2.msra.mxu0 0.0
    %2521 = vmatprep.subr.mxu0 0.0
    %2522 = vmatpush2.msra.mxu0 0.0
    %2523 = vmatprep.subr.mxu0 0.0
    %2524 = vmatpush2.msra.mxu0 0.0
    %2525 = vmatprep.subr.mxu0 0.0
    %2526 = vmatpush2.msra.mxu0 0.0
    %2527 = vmatprep.subr.mxu0 0.0
    %2528 = vmatpush2.msra.mxu0 0.0
    %2529 = vmatprep.subr.mxu0 0.0
    %2530 = vmatpush2.msra.mxu0 0.0
    %2531 = vmatprep.subr.mxu0 0.0
    %2532 = vmatpush2.msra.mxu0 0.0
    %2533 = vmatprep.subr.mxu0 0.0
    %2534 = vmatpush2.msra.mxu0 0.0
    %2535 = vmatprep.subr.mxu0 0.0
    %2536 = vmatpush2.msra.mxu0 0.0
    %2537 = vmatprep.subr.mxu0 0.0
    %2538 = vmatpush2.msra.mxu0 0.0
    %2539 = vmatprep.subr.mxu0 0.0
    %2540 = vmatpush2.msra.mxu0 0.0
    %2541 = vmatprep.mubr.f32.mxu0 0.0
    %2542 = vmatmul.mubr.f32.gmra.mxu0 %v2335
    %v2543 = vpop.f32.mrf.mxu0
    %v2544 = vadd.f32 %v837, %v2543
    %v2545 = vpop.f32.mrf.mxu0
    %2546 = vdwg.mxu0
    %v2547 = vadd.f32 %v444, %v2404
    %v2548 = vxor.u32 %v2547, 2147483648
    %v2549 = vmul.f32 %v2548, 1.442695
    %v2550 = vpow.pop %v2549
    %v2551 = vadd.f32 %v2550, 1.0
    %v2552 = vrcp.pop %v2551
    %v2553 = vmul.f32 1.0, %v2552
    %v2554 = vadd.f32 %v558, %v2474
    %v2555 = vxor.u32 %v2554, 2147483648
    %v2556 = vmul.f32 %v2555, 1.442695
    %v2557 = vpow.pop %v2556
    %v2558 = vadd.f32 %v2557, 1.0
    %v2559 = vrcp.pop %v2558
    %v2560 = vmul.f32 1.0, %v2559
    %v2561 = vmul.f32 %v2553, %v2544
    %v2562 = vadd.f32 %v672, %v2561
    %v2563 = vtanh.pop %v2562
    %v2564 = vsub.f32 1.0, %v2560
    %v2565 = vmul.f32 %v2564, %v2563
    %v2566 = vmul.f32 %v2560, %v2333
    %v2567 = vadd.f32 %v2565, %v2566
    %2568 = vst.msk [vmem:[#allocation29] sm:$0xff] %vm689, %v2567
    %v2569 = vld [vmem:[#allocation20] sm:$0xff]
    %v2570 = vld [vmem:[#allocation20 + $0x8] sm:$0xff]
    %v2571 = vld [vmem:[#allocation20 + $0x10] sm:$0xff]
    %v2572 = vld [vmem:[#allocation20 + $0x18] sm:$0xff]
    %v2573 = vld [vmem:[#allocation28] sm:$0x1]
    %v2575 = vlaneseq
    %v2576 = vshrl.u32 %v2575, 7
    %v2577 = vsub.s32 0, %v2576
    %v2578 = vrot.slane %v2573, %v2577
    %v2581 = vsel %vm689, %v2567, 0
    %2583 = vmatprep.subr.mxu0 0.0
    %2584 = vmatpush1.msra.mxu0 0.0
    %2585 = vmatprep.subr.mxu0 0.0
    %2586 = vmatpush1.msra.mxu0 0.0
    %2587 = vmatprep.subr.mxu0 0.0
    %2588 = vmatpush1.msra.mxu0 0.0
    %2589 = vmatprep.subr.mxu0 0.0
    %2590 = vmatpush1.msra.mxu0 0.0
    %2591 = vmatprep.subr.mxu0 0.0
    %2592 = vmatpush1.msra.mxu0 0.0
    %2593 = vmatprep.subr.mxu0 0.0
    %2594 = vmatpush1.msra.mxu0 0.0
    %2595 = vmatprep.subr.mxu0 0.0
    %2596 = vmatpush1.msra.mxu0 0.0
    %2597 = vmatprep.subr.mxu0 0.0
    %2598 = vmatpush1.msra.mxu0 0.0
    %2599 = vmatprep.subr.mxu0 0.0
    %2600 = vmatpush1.msra.mxu0 0.0
    %2601 = vmatprep.subr.mxu0 0.0
    %2602 = vmatpush1.msra.mxu0 0.0
    %2603 = vmatprep.subr.mxu0 0.0
    %2604 = vmatpush1.msra.mxu0 0.0
    %2605 = vmatprep.subr.mxu0 0.0
    %2606 = vmatpush1.msra.mxu0 0.0
    %2607 = vmatprep.subr.mxu0 0.0
    %2608 = vmatpush1.msra.mxu0 %v2572
    %2609 = vmatprep.subr.mxu0 0.0
    %2610 = vmatpush1.msra.mxu0 %v2571
    %2611 = vmatprep.subr.mxu0 0.0
    %2612 = vmatpush1.msra.mxu0 %v2570
    %2613 = vmatprep.subr.mxu0 0.0
    %2614 = vmatpush1.msra.mxu0 %v2569
    %2615 = vmatprep.subr.mxu0 0.0
    %2616 = vmatpush2.msra.mxu0 0.0
    %2617 = vmatprep.subr.mxu0 0.0
    %2618 = vmatpush2.msra.mxu0 0.0
    %2619 = vmatprep.subr.mxu0 0.0
    %2620 = vmatpush2.msra.mxu0 0.0
    %2621 = vmatprep.subr.mxu0 0.0
    %2622 = vmatpush2.msra.mxu0 0.0
    %2623 = vmatprep.subr.mxu0 0.0
    %2624 = vmatpush2.msra.mxu0 0.0
    %2625 = vmatprep.subr.mxu0 0.0
    %2626 = vmatpush2.msra.mxu0 0.0
    %2627 = vmatprep.subr.mxu0 0.0
    %2628 = vmatpush2.msra.mxu0 0.0
    %2629 = vmatprep.subr.mxu0 0.0
    %2630 = vmatpush2.msra.mxu0 0.0
    %2631 = vmatprep.subr.mxu0 0.0
    %2632 = vmatpush2.msra.mxu0 0.0
    %2633 = vmatprep.subr.mxu0 0.0
    %2634 = vmatpush2.msra.mxu0 0.0
    %2635 = vmatprep.subr.mxu0 0.0
    %2636 = vmatpush2.msra.mxu0 0.0
    %2637 = vmatprep.subr.mxu0 0.0
    %2638 = vmatpush2.msra.mxu0 0.0
    %2639 = vmatprep.subr.mxu0 0.0
    %2640 = vmatpush2.msra.mxu0 0.0
    %2641 = vmatprep.subr.mxu0 0.0
    %2642 = vmatpush2.msra.mxu0 0.0
    %2643 = vmatprep.subr.mxu0 0.0
    %2644 = vmatpush2.msra.mxu0 0.0
    %2645 = vmatprep.subr.mxu0 0.0
    %2646 = vmatpush2.msra.mxu0 0.0
    %2647 = vmatprep.mubr.f32.mxu0 0.0
    %2648 = vmatmul.mubr.f32.gmra.mxu0 %v931
    %v2649 = vpop.f32.mrf.mxu0
    %v2650 = vadd.f32 %v2578, %v2649
    %v2651 = vpop.f32.mrf.mxu0
    %2652 = vmatprep.mubr.f32.mxu0 0.0
    %2653 = vmatmul.mubr.f32.gmra.mxu0 %v1165
    %v2654 = vpop.f32.mrf.mxu0
    %v2655 = vadd.f32 %v2578, %v2654
    %v2656 = vpop.f32.mrf.mxu0
    %2657 = vmatprep.mubr.f32.mxu0 0.0
    %2658 = vmatmul.mubr.f32.gmra.mxu0 %v1399
    %v2659 = vpop.f32.mrf.mxu0
    %v2660 = vadd.f32 %v2578, %v2659
    %v2661 = vpop.f32.mrf.mxu0
    %2662 = vmatprep.mubr.f32.mxu0 0.0
    %2663 = vmatmul.mubr.f32.gmra.mxu0 %v1633
    %v2664 = vpop.f32.mrf.mxu0
    %v2665 = vadd.f32 %v2578, %v2664
    %v2666 = vpop.f32.mrf.mxu0
    %2667 = vmatprep.mubr.f32.mxu0 0.0
    %2668 = vmatmul.mubr.f32.gmra.mxu0 %v1867
    %v2669 = vpop.f32.mrf.mxu0
    %v2670 = vadd.f32 %v2578, %v2669
    %v2671 = vpop.f32.mrf.mxu0
    %2672 = vmatprep.mubr.f32.mxu0 0.0
    %2673 = vmatmul.mubr.f32.gmra.mxu0 %v2101
    %v2674 = vpop.f32.mrf.mxu0
    %v2675 = vadd.f32 %v2578, %v2674
    %v2676 = vpop.f32.mrf.mxu0
    %2677 = vmatprep.mubr.f32.mxu0 0.0
    %2678 = vmatmul.mubr.f32.gmra.mxu0 %v2335
    %v2679 = vpop.f32.mrf.mxu0
    %v2680 = vadd.f32 %v2578, %v2679
    %v2681 = vpop.f32.mrf.mxu0
    %2682 = vmatprep.mubr.f32.mxu0 0.0
    %2683 = vmatmul.mubr.f32.gmra.mxu0 %v2581
    %v2684 = vpop.f32.mrf.mxu0
    %v2685 = vadd.f32 %v2578, %v2684
    %v2686 = vpop.f32.mrf.mxu0
    %2687 = vdwg.mxu0
    %v2688 = vld [vmem:[#allocation22] sm:$0xff]
    %v2689 = vld [vmem:[#allocation22 + $0x8] sm:$0xff]
    %v2690 = vld [vmem:[#allocation22 + $0x10] sm:$0xff]
    %v2691 = vld [vmem:[#allocation22 + $0x18] sm:$0xff]
    %v2692 = vld [vmem:[%s19] sm:$0x1]
    %v2694 = vlaneseq
    %v2695 = vshrl.u32 %v2694, 7
    %v2696 = vsub.s32 0, %v2695
    %v2697 = vrot.slane %v2692, %v2696
    %2699 = vmatprep.subr.mxu0 0.0
    %2700 = vmatpush1.msra.mxu0 0.0
    %2701 = vmatprep.subr.mxu0 0.0
    %2702 = vmatpush1.msra.mxu0 0.0
    %2703 = vmatprep.subr.mxu0 0.0
    %2704 = vmatpush1.msra.mxu0 0.0
    %2705 = vmatprep.subr.mxu0 0.0
    %2706 = vmatpush1.msra.mxu0 0.0
    %2707 = vmatprep.subr.mxu0 0.0
    %2708 = vmatpush1.msra.mxu0 0.0
    %2709 = vmatprep.subr.mxu0 0.0
    %2710 = vmatpush1.msra.mxu0 0.0
    %2711 = vmatprep.subr.mxu0 0.0
    %2712 = vmatpush1.msra.mxu0 0.0
    %2713 = vmatprep.subr.mxu0 0.0
    %2714 = vmatpush1.msra.mxu0 0.0
    %2715 = vmatprep.subr.mxu0 0.0
    %2716 = vmatpush1.msra.mxu0 0.0
    %2717 = vmatprep.subr.mxu0 0.0
    %2718 = vmatpush1.msra.mxu0 0.0
    %2719 = vmatprep.subr.mxu0 0.0
    %2720 = vmatpush1.msra.mxu0 0.0
    %2721 = vmatprep.subr.mxu0 0.0
    %2722 = vmatpush1.msra.mxu0 0.0
    %2723 = vmatprep.subr.mxu0 0.0
    %2724 = vmatpush1.msra.mxu0 %v2691
    %2725 = vmatprep.subr.mxu0 0.0
    %2726 = vmatpush1.msra.mxu0 %v2690
    %2727 = vmatprep.subr.mxu0 0.0
    %2728 = vmatpush1.msra.mxu0 %v2689
    %2729 = vmatprep.subr.mxu0 0.0
    %2730 = vmatpush1.msra.mxu0 %v2688
    %2731 = vmatprep.subr.mxu0 0.0
    %2732 = vmatpush2.msra.mxu0 0.0
    %2733 = vmatprep.subr.mxu0 0.0
    %2734 = vmatpush2.msra.mxu0 0.0
    %2735 = vmatprep.subr.mxu0 0.0
    %2736 = vmatpush2.msra.mxu0 0.0
    %2737 = vmatprep.subr.mxu0 0.0
    %2738 = vmatpush2.msra.mxu0 0.0
    %2739 = vmatprep.subr.mxu0 0.0
    %2740 = vmatpush2.msra.mxu0 0.0
    %2741 = vmatprep.subr.mxu0 0.0
    %2742 = vmatpush2.msra.mxu0 0.0
    %2743 = vmatprep.subr.mxu0 0.0
    %2744 = vmatpush2.msra.mxu0 0.0
    %2745 = vmatprep.subr.mxu0 0.0
    %2746 = vmatpush2.msra.mxu0 0.0
    %2747 = vmatprep.subr.mxu0 0.0
    %2748 = vmatpush2.msra.mxu0 0.0
    %2749 = vmatprep.subr.mxu0 0.0
    %2750 = vmatpush2.msra.mxu0 0.0
    %2751 = vmatprep.subr.mxu0 0.0
    %2752 = vmatpush2.msra.mxu0 0.0
    %2753 = vmatprep.subr.mxu0 0.0
    %2754 = vmatpush2.msra.mxu0 0.0
    %2755 = vmatprep.subr.mxu0 0.0
    %2756 = vmatpush2.msra.mxu0 0.0
    %2757 = vmatprep.subr.mxu0 0.0
    %2758 = vmatpush2.msra.mxu0 0.0
    %2759 = vmatprep.subr.mxu0 0.0
    %2760 = vmatpush2.msra.mxu0 0.0
    %2761 = vmatprep.subr.mxu0 0.0
    %2762 = vmatpush2.msra.mxu0 0.0
    %2763 = vmatprep.mubr.f32.mxu0 0.0
    %2764 = vmatmul.mubr.f32.gmra.mxu0 %v931
    %v2765 = vpop.f32.mrf.mxu0
    %v2766 = vadd.f32 %v2697, %v2765
    %v2767 = vpop.f32.mrf.mxu0
    %2768 = vmatprep.mubr.f32.mxu0 0.0
    %2769 = vmatmul.mubr.f32.gmra.mxu0 %v1165
    %v2770 = vpop.f32.mrf.mxu0
    %v2771 = vadd.f32 %v2697, %v2770
    %v2772 = vpop.f32.mrf.mxu0
    %2773 = vmatprep.mubr.f32.mxu0 0.0
    %2774 = vmatmul.mubr.f32.gmra.mxu0 %v1399
    %v2775 = vpop.f32.mrf.mxu0
    %v2776 = vadd.f32 %v2697, %v2775
    %v2777 = vpop.f32.mrf.mxu0
    %2778 = vmatprep.mubr.f32.mxu0 0.0
    %2779 = vmatmul.mubr.f32.gmra.mxu0 %v1633
    %v2780 = vpop.f32.mrf.mxu0
    %v2781 = vadd.f32 %v2697, %v2780
    %v2782 = vpop.f32.mrf.mxu0
    %2783 = vmatprep.mubr.f32.mxu0 0.0
    %2784 = vmatmul.mubr.f32.gmra.mxu0 %v1867
    %v2785 = vpop.f32.mrf.mxu0
    %v2786 = vadd.f32 %v2697, %v2785
    %v2787 = vpop.f32.mrf.mxu0
    %2788 = vmatprep.mubr.f32.mxu0 0.0
    %2789 = vmatmul.mubr.f32.gmra.mxu0 %v2101
    %v2790 = vpop.f32.mrf.mxu0
    %v2791 = vadd.f32 %v2697, %v2790
    %v2792 = vpop.f32.mrf.mxu0
    %2793 = vmatprep.mubr.f32.mxu0 0.0
    %2794 = vmatmul.mubr.f32.gmra.mxu0 %v2335
    %v2795 = vpop.f32.mrf.mxu0
    %v2796 = vadd.f32 %v2697, %v2795
    %v2797 = vpop.f32.mrf.mxu0
    %2798 = vmatprep.mubr.f32.mxu0 0.0
    %2799 = vmatmul.mubr.f32.gmra.mxu0 %v2581
    %v2800 = vpop.f32.mrf.mxu0
    %v2801 = vadd.f32 %v2697, %v2800
    %v2802 = vpop.f32.mrf.mxu0
    %2803 = vdwg.mxu0
    %v2804 = vld [vmem:[#allocation23] sm:$0xff]
    %v2805 = vld [vmem:[#allocation23 + $0x8] sm:$0xff]
    %v2806 = vld [vmem:[#allocation23 + $0x10] sm:$0xff]
    %v2807 = vld [vmem:[#allocation23 + $0x18] sm:$0xff]
    %v2808 = vld [vmem:[%s20] sm:$0x1]
    %v2810 = vlaneseq
    %v2811 = vshrl.u32 %v2810, 7
    %v2812 = vsub.s32 0, %v2811
    %v2813 = vrot.slane %v2808, %v2812
    %2815 = vmatprep.subr.mxu0 0.0
    %2816 = vmatpush1.msra.mxu0 0.0
    %2817 = vmatprep.subr.mxu0 0.0
    %2818 = vmatpush1.msra.mxu0 0.0
    %2819 = vmatprep.subr.mxu0 0.0
    %2820 = vmatpush1.msra.mxu0 0.0
    %2821 = vmatprep.subr.mxu0 0.0
    %2822 = vmatpush1.msra.mxu0 0.0
    %2823 = vmatprep.subr.mxu0 0.0
    %2824 = vmatpush1.msra.mxu0 0.0
    %2825 = vmatprep.subr.mxu0 0.0
    %2826 = vmatpush1.msra.mxu0 0.0
    %2827 = vmatprep.subr.mxu0 0.0
    %2828 = vmatpush1.msra.mxu0 0.0
    %2829 = vmatprep.subr.mxu0 0.0
    %2830 = vmatpush1.msra.mxu0 0.0
    %2831 = vmatprep.subr.mxu0 0.0
    %2832 = vmatpush1.msra.mxu0 0.0
    %2833 = vmatprep.subr.mxu0 0.0
    %2834 = vmatpush1.msra.mxu0 0.0
    %2835 = vmatprep.subr.mxu0 0.0
    %2836 = vmatpush1.msra.mxu0 0.0
    %2837 = vmatprep.subr.mxu0 0.0
    %2838 = vmatpush1.msra.mxu0 0.0
    %2839 = vmatprep.subr.mxu0 0.0
    %2840 = vmatpush1.msra.mxu0 %v2807
    %2841 = vmatprep.subr.mxu0 0.0
    %2842 = vmatpush1.msra.mxu0 %v2806
    %2843 = vmatprep.subr.mxu0 0.0
    %2844 = vmatpush1.msra.mxu0 %v2805
    %2845 = vmatprep.subr.mxu0 0.0
    %2846 = vmatpush1.msra.mxu0 %v2804
    %2847 = vmatprep.subr.mxu0 0.0
    %2848 = vmatpush2.msra.mxu0 0.0
    %2849 = vmatprep.subr.mxu0 0.0
    %2850 = vmatpush2.msra.mxu0 0.0
    %2851 = vmatprep.subr.mxu0 0.0
    %2852 = vmatpush2.msra.mxu0 0.0
    %2853 = vmatprep.subr.mxu0 0.0
    %2854 = vmatpush2.msra.mxu0 0.0
    %2855 = vmatprep.subr.mxu0 0.0
    %2856 = vmatpush2.msra.mxu0 0.0
    %2857 = vmatprep.subr.mxu0 0.0
    %2858 = vmatpush2.msra.mxu0 0.0
    %2859 = vmatprep.subr.mxu0 0.0
    %2860 = vmatpush2.msra.mxu0 0.0
    %2861 = vmatprep.subr.mxu0 0.0
    %2862 = vmatpush2.msra.mxu0 0.0
    %2863 = vmatprep.subr.mxu0 0.0
    %2864 = vmatpush2.msra.mxu0 0.0
    %2865 = vmatprep.subr.mxu0 0.0
    %2866 = vmatpush2.msra.mxu0 0.0
    %2867 = vmatprep.subr.mxu0 0.0
    %2868 = vmatpush2.msra.mxu0 0.0
    %2869 = vmatprep.subr.mxu0 0.0
    %2870 = vmatpush2.msra.mxu0 0.0
    %2871 = vmatprep.subr.mxu0 0.0
    %2872 = vmatpush2.msra.mxu0 0.0
    %2873 = vmatprep.subr.mxu0 0.0
    %2874 = vmatpush2.msra.mxu0 0.0
    %2875 = vmatprep.subr.mxu0 0.0
    %2876 = vmatpush2.msra.mxu0 0.0
    %2877 = vmatprep.subr.mxu0 0.0
    %2878 = vmatpush2.msra.mxu0 0.0
    %2879 = vmatprep.mubr.f32.mxu0 0.0
    %2880 = vmatmul.mubr.f32.gmra.mxu0 %v931
    %v2881 = vpop.f32.mrf.mxu0
    %v2882 = vadd.f32 %v2813, %v2881
    %v2883 = vpop.f32.mrf.mxu0
    %2884 = vmatprep.mubr.f32.mxu0 0.0
    %2885 = vmatmul.mubr.f32.gmra.mxu0 %v1165
    %v2886 = vpop.f32.mrf.mxu0
    %v2887 = vadd.f32 %v2813, %v2886
    %v2888 = vpop.f32.mrf.mxu0
    %2889 = vmatprep.mubr.f32.mxu0 0.0
    %2890 = vmatmul.mubr.f32.gmra.mxu0 %v1399
    %v2891 = vpop.f32.mrf.mxu0
    %v2892 = vadd.f32 %v2813, %v2891
    %v2893 = vpop.f32.mrf.mxu0
    %2894 = vmatprep.mubr.f32.mxu0 0.0
    %2895 = vmatmul.mubr.f32.gmra.mxu0 %v1633
    %v2896 = vpop.f32.mrf.mxu0
    %v2897 = vadd.f32 %v2813, %v2896
    %v2898 = vpop.f32.mrf.mxu0
    %2899 = vmatprep.mubr.f32.mxu0 0.0
    %2900 = vmatmul.mubr.f32.gmra.mxu0 %v1867
    %v2901 = vpop.f32.mrf.mxu0
    %v2902 = vadd.f32 %v2813, %v2901
    %v2903 = vpop.f32.mrf.mxu0
    %2904 = vmatprep.mubr.f32.mxu0 0.0
    %2905 = vmatmul.mubr.f32.gmra.mxu0 %v2101
    %v2906 = vpop.f32.mrf.mxu0
    %v2907 = vadd.f32 %v2813, %v2906
    %v2908 = vpop.f32.mrf.mxu0
    %2909 = vmatprep.mubr.f32.mxu0 0.0
    %2910 = vmatmul.mubr.f32.gmra.mxu0 %v2335
    %v2911 = vpop.f32.mrf.mxu0
    %v2912 = vadd.f32 %v2813, %v2911
    %v2913 = vpop.f32.mrf.mxu0
    %2914 = vmatprep.mubr.f32.mxu0 0.0
    %2915 = vmatmul.mubr.f32.gmra.mxu0 %v2581
    %v2916 = vpop.f32.mrf.mxu0
    %v2917 = vadd.f32 %v2813, %v2916
    %v2918 = vpop.f32.mrf.mxu0
    %2919 = vdwg.mxu0
    %v2920 = vld [vmem:[#allocation25] sm:$0xff]
    %v2921 = vld [vmem:[#allocation25 + $0x8] sm:$0xff]
    %v2922 = vld [vmem:[#allocation25 + $0x10] sm:$0xff]
    %v2923 = vld [vmem:[#allocation25 + $0x18] sm:$0xff]
    %v2924 = vld [vmem:[#allocation26] sm:$0xff]
    %v2925 = vld [vmem:[#allocation26 + $0x8] sm:$0xff]
    %v2926 = vld [vmem:[#allocation26 + $0x10] sm:$0xff]
    %v2927 = vld [vmem:[#allocation26 + $0x18] sm:$0xff]
    %v2928 = vld [vmem:[%s17] sm:$0xff]
    %v2929 = vld [vmem:[%s17 + $0x8] sm:$0xff]
    %v2930 = vld [vmem:[%s17 + $0x10] sm:$0xff]
    %v2931 = vld [vmem:[%s17 + $0x18] sm:$0xff]
    %v2932 = vld [vmem:[%s21] sm:$0x1]
    %s2933 = scalar_lea.vmem [#allocation5], 8
    %v2934 = vld [vmem:[%s2933] sm:$0xff]
    %v2936 = vsel %vm689, %v2934, 0
    %2938 = vmatprep.subr.mxu0 0.0
    %2939 = vmatpush1.msra.mxu0 0.0
    %2940 = vmatprep.subr.mxu0 0.0
    %2941 = vmatpush1.msra.mxu0 0.0
    %2942 = vmatprep.subr.mxu0 0.0
    %2943 = vmatpush1.msra.mxu0 0.0
    %2944 = vmatprep.subr.mxu0 0.0
    %2945 = vmatpush1.msra.mxu0 0.0
    %2946 = vmatprep.subr.mxu0 0.0
    %2947 = vmatpush1.msra.mxu0 0.0
    %2948 = vmatprep.subr.mxu0 0.0
    %2949 = vmatpush1.msra.mxu0 0.0
    %2950 = vmatprep.subr.mxu0 0.0
    %2951 = vmatpush1.msra.mxu0 0.0
    %2952 = vmatprep.subr.mxu0 0.0
    %2953 = vmatpush1.msra.mxu0 0.0
    %2954 = vmatprep.subr.mxu0 0.0
    %2955 = vmatpush1.msra.mxu0 0.0
    %2956 = vmatprep.subr.mxu0 0.0
    %2957 = vmatpush1.msra.mxu0 0.0
    %2958 = vmatprep.subr.mxu0 0.0
    %2959 = vmatpush1.msra.mxu0 0.0
    %2960 = vmatprep.subr.mxu0 0.0
    %2961 = vmatpush1.msra.mxu0 0.0
    %2962 = vmatprep.subr.mxu0 0.0
    %2963 = vmatpush1.msra.mxu0 %v2923
    %2964 = vmatprep.subr.mxu0 0.0
    %2965 = vmatpush1.msra.mxu0 %v2922
    %2966 = vmatprep.subr.mxu0 0.0
    %2967 = vmatpush1.msra.mxu0 %v2921
    %2968 = vmatprep.subr.mxu0 0.0
    %2969 = vmatpush1.msra.mxu0 %v2920
    %2970 = vmatprep.subr.mxu0 0.0
    %2971 = vmatpush2.msra.mxu0 0.0
    %2972 = vmatprep.subr.mxu0 0.0
    %2973 = vmatpush2.msra.mxu0 0.0
    %2974 = vmatprep.subr.mxu0 0.0
    %2975 = vmatpush2.msra.mxu0 0.0
    %2976 = vmatprep.subr.mxu0 0.0
    %2977 = vmatpush2.msra.mxu0 0.0
    %2978 = vmatprep.subr.mxu0 0.0
    %2979 = vmatpush2.msra.mxu0 0.0
    %2980 = vmatprep.subr.mxu0 0.0
    %2981 = vmatpush2.msra.mxu0 0.0
    %2982 = vmatprep.subr.mxu0 0.0
    %2983 = vmatpush2.msra.mxu0 0.0
    %2984 = vmatprep.subr.mxu0 0.0
    %2985 = vmatpush2.msra.mxu0 0.0
    %2986 = vmatprep.subr.mxu0 0.0
    %2987 = vmatpush2.msra.mxu0 0.0
    %2988 = vmatprep.subr.mxu0 0.0
    %2989 = vmatpush2.msra.mxu0 0.0
    %2990 = vmatprep.subr.mxu0 0.0
    %2991 = vmatpush2.msra.mxu0 0.0
    %2992 = vmatprep.subr.mxu0 0.0
    %2993 = vmatpush2.msra.mxu0 0.0
    %2994 = vmatprep.subr.mxu0 0.0
    %2995 = vmatpush2.msra.mxu0 0.0
    %2996 = vmatprep.subr.mxu0 0.0
    %2997 = vmatpush2.msra.mxu0 0.0
    %2998 = vmatprep.subr.mxu0 0.0
    %2999 = vmatpush2.msra.mxu0 0.0
    %3000 = vmatprep.subr.mxu0 0.0
    %3001 = vmatpush2.msra.mxu0 0.0
    %3002 = vmatprep.mubr.f32.mxu0 0.0
    %3003 = vmatmul.mubr.f32.gmra.mxu0 %v2936
    %v3004 = vpop.f32.mrf.mxu0
    %v3005 = vadd.f32 0.0, %v3004
    %v3006 = vpop.f32.mrf.mxu0
    %3007 = vdwg.mxu0
    %3008 = vmatprep.subr.mxu0 0.0
    %3009 = vmatpush1.msra.mxu0 0.0
    %3010 = vmatprep.subr.mxu0 0.0
    %3011 = vmatpush1.msra.mxu0 0.0
    %3012 = vmatprep.subr.mxu0 0.0
    %3013 = vmatpush1.msra.mxu0 0.0
    %3014 = vmatprep.subr.mxu0 0.0
    %3015 = vmatpush1.msra.mxu0 0.0
    %3016 = vmatprep.subr.mxu0 0.0
    %3017 = vmatpush1.msra.mxu0 0.0
    %3018 = vmatprep.subr.mxu0 0.0
    %3019 = vmatpush1.msra.mxu0 0.0
    %3020 = vmatprep.subr.mxu0 0.0
    %3021 = vmatpush1.msra.mxu0 0.0
    %3022 = vmatprep.subr.mxu0 0.0
    %3023 = vmatpush1.msra.mxu0 0.0
    %3024 = vmatprep.subr.mxu0 0.0
    %3025 = vmatpush1.msra.mxu0 0.0
    %3026 = vmatprep.subr.mxu0 0.0
    %3027 = vmatpush1.msra.mxu0 0.0
    %3028 = vmatprep.subr.mxu0 0.0
    %3029 = vmatpush1.msra.mxu0 0.0
    %3030 = vmatprep.subr.mxu0 0.0
    %3031 = vmatpush1.msra.mxu0 0.0
    %3032 = vmatprep.subr.mxu0 0.0
    %3033 = vmatpush1.msra.mxu0 %v2927
    %3034 = vmatprep.subr.mxu0 0.0
    %3035 = vmatpush1.msra.mxu0 %v2926
    %3036 = vmatprep.subr.mxu0 0.0
    %3037 = vmatpush1.msra.mxu0 %v2925
    %3038 = vmatprep.subr.mxu0 0.0
    %3039 = vmatpush1.msra.mxu0 %v2924
    %3040 = vmatprep.subr.mxu0 0.0
    %3041 = vmatpush2.msra.mxu0 0.0
    %3042 = vmatprep.subr.mxu0 0.0
    %3043 = vmatpush2.msra.mxu0 0.0
    %3044 = vmatprep.subr.mxu0 0.0
    %3045 = vmatpush2.msra.mxu0 0.0
    %3046 = vmatprep.subr.mxu0 0.0
    %3047 = vmatpush2.msra.mxu0 0.0
    %3048 = vmatprep.subr.mxu0 0.0
    %3049 = vmatpush2.msra.mxu0 0.0
    %3050 = vmatprep.subr.mxu0 0.0
    %3051 = vmatpush2.msra.mxu0 0.0
    %3052 = vmatprep.subr.mxu0 0.0
    %3053 = vmatpush2.msra.mxu0 0.0
    %3054 = vmatprep.subr.mxu0 0.0
    %3055 = vmatpush2.msra.mxu0 0.0
    %3056 = vmatprep.subr.mxu0 0.0
    %3057 = vmatpush2.msra.mxu0 0.0
    %3058 = vmatprep.subr.mxu0 0.0
    %3059 = vmatpush2.msra.mxu0 0.0
    %3060 = vmatprep.subr.mxu0 0.0
    %3061 = vmatpush2.msra.mxu0 0.0
    %3062 = vmatprep.subr.mxu0 0.0
    %3063 = vmatpush2.msra.mxu0 0.0
    %3064 = vmatprep.subr.mxu0 0.0
    %3065 = vmatpush2.msra.mxu0 0.0
    %3066 = vmatprep.subr.mxu0 0.0
    %3067 = vmatpush2.msra.mxu0 0.0
    %3068 = vmatprep.subr.mxu0 0.0
    %3069 = vmatpush2.msra.mxu0 0.0
    %3070 = vmatprep.subr.mxu0 0.0
    %3071 = vmatpush2.msra.mxu0 0.0
    %3072 = vmatprep.mubr.f32.mxu0 0.0
    %3073 = vmatmul.mubr.f32.gmra.mxu0 %v2936
    %v3074 = vpop.f32.mrf.mxu0
    %v3075 = vadd.f32 0.0, %v3074
    %v3076 = vpop.f32.mrf.mxu0
    %3077 = vdwg.mxu0
    %v3079 = vlaneseq
    %v3080 = vshrl.u32 %v3079, 7
    %v3081 = vsub.s32 0, %v3080
    %v3082 = vrot.slane %v2932, %v3081
    %3084 = vmatprep.subr.mxu0 0.0
    %3085 = vmatpush1.msra.mxu0 0.0
    %3086 = vmatprep.subr.mxu0 0.0
    %3087 = vmatpush1.msra.mxu0 0.0
    %3088 = vmatprep.subr.mxu0 0.0
    %3089 = vmatpush1.msra.mxu0 0.0
    %3090 = vmatprep.subr.mxu0 0.0
    %3091 = vmatpush1.msra.mxu0 0.0
    %3092 = vmatprep.subr.mxu0 0.0
    %3093 = vmatpush1.msra.mxu0 0.0
    %3094 = vmatprep.subr.mxu0 0.0
    %3095 = vmatpush1.msra.mxu0 0.0
    %3096 = vmatprep.subr.mxu0 0.0
    %3097 = vmatpush1.msra.mxu0 0.0
    %3098 = vmatprep.subr.mxu0 0.0
    %3099 = vmatpush1.msra.mxu0 0.0
    %3100 = vmatprep.subr.mxu0 0.0
    %3101 = vmatpush1.msra.mxu0 0.0
    %3102 = vmatprep.subr.mxu0 0.0
    %3103 = vmatpush1.msra.mxu0 0.0
    %3104 = vmatprep.subr.mxu0 0.0
    %3105 = vmatpush1.msra.mxu0 0.0
    %3106 = vmatprep.subr.mxu0 0.0
    %3107 = vmatpush1.msra.mxu0 0.0
    %3108 = vmatprep.subr.mxu0 0.0
    %3109 = vmatpush1.msra.mxu0 %v2931
    %3110 = vmatprep.subr.mxu0 0.0
    %3111 = vmatpush1.msra.mxu0 %v2930
    %3112 = vmatprep.subr.mxu0 0.0
    %3113 = vmatpush1.msra.mxu0 %v2929
    %3114 = vmatprep.subr.mxu0 0.0
    %3115 = vmatpush1.msra.mxu0 %v2928
    %3116 = vmatprep.subr.mxu0 0.0
    %3117 = vmatpush2.msra.mxu0 0.0
    %3118 = vmatprep.subr.mxu0 0.0
    %3119 = vmatpush2.msra.mxu0 0.0
    %3120 = vmatprep.subr.mxu0 0.0
    %3121 = vmatpush2.msra.mxu0 0.0
    %3122 = vmatprep.subr.mxu0 0.0
    %3123 = vmatpush2.msra.mxu0 0.0
    %3124 = vmatprep.subr.mxu0 0.0
    %3125 = vmatpush2.msra.mxu0 0.0
    %3126 = vmatprep.subr.mxu0 0.0
    %3127 = vmatpush2.msra.mxu0 0.0
    %3128 = vmatprep.subr.mxu0 0.0
    %3129 = vmatpush2.msra.mxu0 0.0
    %3130 = vmatprep.subr.mxu0 0.0
    %3131 = vmatpush2.msra.mxu0 0.0
    %3132 = vmatprep.subr.mxu0 0.0
    %3133 = vmatpush2.msra.mxu0 0.0
    %3134 = vmatprep.subr.mxu0 0.0
    %3135 = vmatpush2.msra.mxu0 0.0
    %3136 = vmatprep.subr.mxu0 0.0
    %3137 = vmatpush2.msra.mxu0 0.0
    %3138 = vmatprep.subr.mxu0 0.0
    %3139 = vmatpush2.msra.mxu0 0.0
    %3140 = vmatprep.subr.mxu0 0.0
    %3141 = vmatpush2.msra.mxu0 0.0
    %3142 = vmatprep.subr.mxu0 0.0
    %3143 = vmatpush2.msra.mxu0 0.0
    %3144 = vmatprep.subr.mxu0 0.0
    %3145 = vmatpush2.msra.mxu0 0.0
    %3146 = vmatprep.subr.mxu0 0.0
    %3147 = vmatpush2.msra.mxu0 0.0
    %3148 = vmatprep.mubr.f32.mxu0 0.0
    %3149 = vmatmul.mubr.f32.gmra.mxu0 %v2936
    %v3150 = vpop.f32.mrf.mxu0
    %v3151 = vadd.f32 %v3082, %v3150
    %v3152 = vpop.f32.mrf.mxu0
    %3153 = vdwg.mxu0
    %v3154 = vadd.f32 %v2650, %v3005
    %v3155 = vxor.u32 %v3154, 2147483648
    %v3156 = vmul.f32 %v3155, 1.442695
    %v3157 = vpow.pop %v3156
    %v3158 = vadd.f32 %v3157, 1.0
    %v3159 = vrcp.pop %v3158
    %v3160 = vmul.f32 1.0, %v3159
    %v3161 = vadd.f32 %v2766, %v3075
    %v3162 = vxor.u32 %v3161, 2147483648
    %v3163 = vmul.f32 %v3162, 1.442695
    %v3164 = vpow.pop %v3163
    %v3165 = vadd.f32 %v3164, 1.0
    %v3166 = vrcp.pop %v3165
    %v3167 = vmul.f32 1.0, %v3166
    %v3168 = vmul.f32 %v3160, %v3151
    %v3169 = vadd.f32 %v2882, %v3168
    %v3170 = vtanh.pop %v3169
    %v3171 = vsub.f32 1.0, %v3167
    %v3172 = vmul.f32 %v3171, %v3170
    %v3173 = vmul.f32 %v3167, %v2934
    %v3174 = vadd.f32 %v3172, %v3173
    %v3176 = vsel %vm689, %v3174, 0
    %3178 = vmatprep.subr.mxu0 0.0
    %3179 = vmatpush1.msra.mxu0 0.0
    %3180 = vmatprep.subr.mxu0 0.0
    %3181 = vmatpush1.msra.mxu0 0.0
    %3182 = vmatprep.subr.mxu0 0.0
    %3183 = vmatpush1.msra.mxu0 0.0
    %3184 = vmatprep.subr.mxu0 0.0
    %3185 = vmatpush1.msra.mxu0 0.0
    %3186 = vmatprep.subr.mxu0 0.0
    %3187 = vmatpush1.msra.mxu0 0.0
    %3188 = vmatprep.subr.mxu0 0.0
    %3189 = vmatpush1.msra.mxu0 0.0
    %3190 = vmatprep.subr.mxu0 0.0
    %3191 = vmatpush1.msra.mxu0 0.0
    %3192 = vmatprep.subr.mxu0 0.0
    %3193 = vmatpush1.msra.mxu0 0.0
    %3194 = vmatprep.subr.mxu0 0.0
    %3195 = vmatpush1.msra.mxu0 0.0
    %3196 = vmatprep.subr.mxu0 0.0
    %3197 = vmatpush1.msra.mxu0 0.0
    %3198 = vmatprep.subr.mxu0 0.0
    %3199 = vmatpush1.msra.mxu0 0.0
    %3200 = vmatprep.subr.mxu0 0.0
    %3201 = vmatpush1.msra.mxu0 0.0
    %3202 = vmatprep.subr.mxu0 0.0
    %3203 = vmatpush1.msra.mxu0 %v2923
    %3204 = vmatprep.subr.mxu0 0.0
    %3205 = vmatpush1.msra.mxu0 %v2922
    %3206 = vmatprep.subr.mxu0 0.0
    %3207 = vmatpush1.msra.mxu0 %v2921
    %3208 = vmatprep.subr.mxu0 0.0
    %3209 = vmatpush1.msra.mxu0 %v2920
    %3210 = vmatprep.subr.mxu0 0.0
    %3211 = vmatpush2.msra.mxu0 0.0
    %3212 = vmatprep.subr.mxu0 0.0
    %3213 = vmatpush2.msra.mxu0 0.0
    %3214 = vmatprep.subr.mxu0 0.0
    %3215 = vmatpush2.msra.mxu0 0.0
    %3216 = vmatprep.subr.mxu0 0.0
    %3217 = vmatpush2.msra.mxu0 0.0
    %3218 = vmatprep.subr.mxu0 0.0
    %3219 = vmatpush2.msra.mxu0 0.0
    %3220 = vmatprep.subr.mxu0 0.0
    %3221 = vmatpush2.msra.mxu0 0.0
    %3222 = vmatprep.subr.mxu0 0.0
    %3223 = vmatpush2.msra.mxu0 0.0
    %3224 = vmatprep.subr.mxu0 0.0
    %3225 = vmatpush2.msra.mxu0 0.0
    %3226 = vmatprep.subr.mxu0 0.0
    %3227 = vmatpush2.msra.mxu0 0.0
    %3228 = vmatprep.subr.mxu0 0.0
    %3229 = vmatpush2.msra.mxu0 0.0
    %3230 = vmatprep.subr.mxu0 0.0
    %3231 = vmatpush2.msra.mxu0 0.0
    %3232 = vmatprep.subr.mxu0 0.0
    %3233 = vmatpush2.msra.mxu0 0.0
    %3234 = vmatprep.subr.mxu0 0.0
    %3235 = vmatpush2.msra.mxu0 0.0
    %3236 = vmatprep.subr.mxu0 0.0
    %3237 = vmatpush2.msra.mxu0 0.0
    %3238 = vmatprep.subr.mxu0 0.0
    %3239 = vmatpush2.msra.mxu0 0.0
    %3240 = vmatprep.subr.mxu0 0.0
    %3241 = vmatpush2.msra.mxu0 0.0
    %3242 = vmatprep.mubr.f32.mxu0 0.0
    %3243 = vmatmul.mubr.f32.gmra.mxu0 %v3176
    %v3244 = vpop.f32.mrf.mxu0
    %v3245 = vadd.f32 0.0, %v3244
    %v3246 = vpop.f32.mrf.mxu0
    %3247 = vdwg.mxu0
    %3248 = vmatprep.subr.mxu0 0.0
    %3249 = vmatpush1.msra.mxu0 0.0
    %3250 = vmatprep.subr.mxu0 0.0
    %3251 = vmatpush1.msra.mxu0 0.0
    %3252 = vmatprep.subr.mxu0 0.0
    %3253 = vmatpush1.msra.mxu0 0.0
    %3254 = vmatprep.subr.mxu0 0.0
    %3255 = vmatpush1.msra.mxu0 0.0
    %3256 = vmatprep.subr.mxu0 0.0
    %3257 = vmatpush1.msra.mxu0 0.0
    %3258 = vmatprep.subr.mxu0 0.0
    %3259 = vmatpush1.msra.mxu0 0.0
    %3260 = vmatprep.subr.mxu0 0.0
    %3261 = vmatpush1.msra.mxu0 0.0
    %3262 = vmatprep.subr.mxu0 0.0
    %3263 = vmatpush1.msra.mxu0 0.0
    %3264 = vmatprep.subr.mxu0 0.0
    %3265 = vmatpush1.msra.mxu0 0.0
    %3266 = vmatprep.subr.mxu0 0.0
    %3267 = vmatpush1.msra.mxu0 0.0
    %3268 = vmatprep.subr.mxu0 0.0
    %3269 = vmatpush1.msra.mxu0 0.0
    %3270 = vmatprep.subr.mxu0 0.0
    %3271 = vmatpush1.msra.mxu0 0.0
    %3272 = vmatprep.subr.mxu0 0.0
    %3273 = vmatpush1.msra.mxu0 %v2927
    %3274 = vmatprep.subr.mxu0 0.0
    %3275 = vmatpush1.msra.mxu0 %v2926
    %3276 = vmatprep.subr.mxu0 0.0
    %3277 = vmatpush1.msra.mxu0 %v2925
    %3278 = vmatprep.subr.mxu0 0.0
    %3279 = vmatpush1.msra.mxu0 %v2924
    %3280 = vmatprep.subr.mxu0 0.0
    %3281 = vmatpush2.msra.mxu0 0.0
    %3282 = vmatprep.subr.mxu0 0.0
    %3283 = vmatpush2.msra.mxu0 0.0
    %3284 = vmatprep.subr.mxu0 0.0
    %3285 = vmatpush2.msra.mxu0 0.0
    %3286 = vmatprep.subr.mxu0 0.0
    %3287 = vmatpush2.msra.mxu0 0.0
    %3288 = vmatprep.subr.mxu0 0.0
    %3289 = vmatpush2.msra.mxu0 0.0
    %3290 = vmatprep.subr.mxu0 0.0
    %3291 = vmatpush2.msra.mxu0 0.0
    %3292 = vmatprep.subr.mxu0 0.0
    %3293 = vmatpush2.msra.mxu0 0.0
    %3294 = vmatprep.subr.mxu0 0.0
    %3295 = vmatpush2.msra.mxu0 0.0
    %3296 = vmatprep.subr.mxu0 0.0
    %3297 = vmatpush2.msra.mxu0 0.0
    %3298 = vmatprep.subr.mxu0 0.0
    %3299 = vmatpush2.msra.mxu0 0.0
    %3300 = vmatprep.subr.mxu0 0.0
    %3301 = vmatpush2.msra.mxu0 0.0
    %3302 = vmatprep.subr.mxu0 0.0
    %3303 = vmatpush2.msra.mxu0 0.0
    %3304 = vmatprep.subr.mxu0 0.0
    %3305 = vmatpush2.msra.mxu0 0.0
    %3306 = vmatprep.subr.mxu0 0.0
    %3307 = vmatpush2.msra.mxu0 0.0
    %3308 = vmatprep.subr.mxu0 0.0
    %3309 = vmatpush2.msra.mxu0 0.0
    %3310 = vmatprep.subr.mxu0 0.0
    %3311 = vmatpush2.msra.mxu0 0.0
    %3312 = vmatprep.mubr.f32.mxu0 0.0
    %3313 = vmatmul.mubr.f32.gmra.mxu0 %v3176
    %v3314 = vpop.f32.mrf.mxu0
    %v3315 = vadd.f32 0.0, %v3314
    %v3316 = vpop.f32.mrf.mxu0
    %3317 = vdwg.mxu0
    %3318 = vmatprep.subr.mxu0 0.0
    %3319 = vmatpush1.msra.mxu0 0.0
    %3320 = vmatprep.subr.mxu0 0.0
    %3321 = vmatpush1.msra.mxu0 0.0
    %3322 = vmatprep.subr.mxu0 0.0
    %3323 = vmatpush1.msra.mxu0 0.0
    %3324 = vmatprep.subr.mxu0 0.0
    %3325 = vmatpush1.msra.mxu0 0.0
    %3326 = vmatprep.subr.mxu0 0.0
    %3327 = vmatpush1.msra.mxu0 0.0
    %3328 = vmatprep.subr.mxu0 0.0
    %3329 = vmatpush1.msra.mxu0 0.0
    %3330 = vmatprep.subr.mxu0 0.0
    %3331 = vmatpush1.msra.mxu0 0.0
    %3332 = vmatprep.subr.mxu0 0.0
    %3333 = vmatpush1.msra.mxu0 0.0
    %3334 = vmatprep.subr.mxu0 0.0
    %3335 = vmatpush1.msra.mxu0 0.0
    %3336 = vmatprep.subr.mxu0 0.0
    %3337 = vmatpush1.msra.mxu0 0.0
    %3338 = vmatprep.subr.mxu0 0.0
    %3339 = vmatpush1.msra.mxu0 0.0
    %3340 = vmatprep.subr.mxu0 0.0
    %3341 = vmatpush1.msra.mxu0 0.0
    %3342 = vmatprep.subr.mxu0 0.0
    %3343 = vmatpush1.msra.mxu0 %v2931
    %3344 = vmatprep.subr.mxu0 0.0
    %3345 = vmatpush1.msra.mxu0 %v2930
    %3346 = vmatprep.subr.mxu0 0.0
    %3347 = vmatpush1.msra.mxu0 %v2929
    %3348 = vmatprep.subr.mxu0 0.0
    %3349 = vmatpush1.msra.mxu0 %v2928
    %3350 = vmatprep.subr.mxu0 0.0
    %3351 = vmatpush2.msra.mxu0 0.0
    %3352 = vmatprep.subr.mxu0 0.0
    %3353 = vmatpush2.msra.mxu0 0.0
    %3354 = vmatprep.subr.mxu0 0.0
    %3355 = vmatpush2.msra.mxu0 0.0
    %3356 = vmatprep.subr.mxu0 0.0
    %3357 = vmatpush2.msra.mxu0 0.0
    %3358 = vmatprep.subr.mxu0 0.0
    %3359 = vmatpush2.msra.mxu0 0.0
    %3360 = vmatprep.subr.mxu0 0.0
    %3361 = vmatpush2.msra.mxu0 0.0
    %3362 = vmatprep.subr.mxu0 0.0
    %3363 = vmatpush2.msra.mxu0 0.0
    %3364 = vmatprep.subr.mxu0 0.0
    %3365 = vmatpush2.msra.mxu0 0.0
    %3366 = vmatprep.subr.mxu0 0.0
    %3367 = vmatpush2.msra.mxu0 0.0
    %3368 = vmatprep.subr.mxu0 0.0
    %3369 = vmatpush2.msra.mxu0 0.0
    %3370 = vmatprep.subr.mxu0 0.0
    %3371 = vmatpush2.msra.mxu0 0.0
    %3372 = vmatprep.subr.mxu0 0.0
    %3373 = vmatpush2.msra.mxu0 0.0
    %3374 = vmatprep.subr.mxu0 0.0
    %3375 = vmatpush2.msra.mxu0 0.0
    %3376 = vmatprep.subr.mxu0 0.0
    %3377 = vmatpush2.msra.mxu0 0.0
    %3378 = vmatprep.subr.mxu0 0.0
    %3379 = vmatpush2.msra.mxu0 0.0
    %3380 = vmatprep.subr.mxu0 0.0
    %3381 = vmatpush2.msra.mxu0 0.0
    %3382 = vmatprep.mubr.f32.mxu0 0.0
    %3383 = vmatmul.mubr.f32.gmra.mxu0 %v3176
    %v3384 = vpop.f32.mrf.mxu0
    %v3385 = vadd.f32 %v3082, %v3384
    %v3386 = vpop.f32.mrf.mxu0
    %3387 = vdwg.mxu0
    %v3388 = vadd.f32 %v2655, %v3245
    %v3389 = vxor.u32 %v3388, 2147483648
    %v3390 = vmul.f32 %v3389, 1.442695
    %v3391 = vpow.pop %v3390
    %v3392 = vadd.f32 %v3391, 1.0
    %v3393 = vrcp.pop %v3392
    %v3394 = vmul.f32 1.0, %v3393
    %v3395 = vadd.f32 %v2771, %v3315
    %v3396 = vxor.u32 %v3395, 2147483648
    %v3397 = vmul.f32 %v3396, 1.442695
    %v3398 = vpow.pop %v3397
    %v3399 = vadd.f32 %v3398, 1.0
    %v3400 = vrcp.pop %v3399
    %v3401 = vmul.f32 1.0, %v3400
    %v3402 = vmul.f32 %v3394, %v3385
    %v3403 = vadd.f32 %v2887, %v3402
    %v3404 = vtanh.pop %v3403
    %v3405 = vsub.f32 1.0, %v3401
    %v3406 = vmul.f32 %v3405, %v3404
    %v3407 = vmul.f32 %v3401, %v3174
    %v3408 = vadd.f32 %v3406, %v3407
    %v3410 = vsel %vm689, %v3408, 0
    %3412 = vmatprep.subr.mxu0 0.0
    %3413 = vmatpush1.msra.mxu0 0.0
    %3414 = vmatprep.subr.mxu0 0.0
    %3415 = vmatpush1.msra.mxu0 0.0
    %3416 = vmatprep.subr.mxu0 0.0
    %3417 = vmatpush1.msra.mxu0 0.0
    %3418 = vmatprep.subr.mxu0 0.0
    %3419 = vmatpush1.msra.mxu0 0.0
    %3420 = vmatprep.subr.mxu0 0.0
    %3421 = vmatpush1.msra.mxu0 0.0
    %3422 = vmatprep.subr.mxu0 0.0
    %3423 = vmatpush1.msra.mxu0 0.0
    %3424 = vmatprep.subr.mxu0 0.0
    %3425 = vmatpush1.msra.mxu0 0.0
    %3426 = vmatprep.subr.mxu0 0.0
    %3427 = vmatpush1.msra.mxu0 0.0
    %3428 = vmatprep.subr.mxu0 0.0
    %3429 = vmatpush1.msra.mxu0 0.0
    %3430 = vmatprep.subr.mxu0 0.0
    %3431 = vmatpush1.msra.mxu0 0.0
    %3432 = vmatprep.subr.mxu0 0.0
    %3433 = vmatpush1.msra.mxu0 0.0
    %3434 = vmatprep.subr.mxu0 0.0
    %3435 = vmatpush1.msra.mxu0 0.0
    %3436 = vmatprep.subr.mxu0 0.0
    %3437 = vmatpush1.msra.mxu0 %v2923
    %3438 = vmatprep.subr.mxu0 0.0
    %3439 = vmatpush1.msra.mxu0 %v2922
    %3440 = vmatprep.subr.mxu0 0.0
    %3441 = vmatpush1.msra.mxu0 %v2921
    %3442 = vmatprep.subr.mxu0 0.0
    %3443 = vmatpush1.msra.mxu0 %v2920
    %3444 = vmatprep.subr.mxu0 0.0
    %3445 = vmatpush2.msra.mxu0 0.0
    %3446 = vmatprep.subr.mxu0 0.0
    %3447 = vmatpush2.msra.mxu0 0.0
    %3448 = vmatprep.subr.mxu0 0.0
    %3449 = vmatpush2.msra.mxu0 0.0
    %3450 = vmatprep.subr.mxu0 0.0
    %3451 = vmatpush2.msra.mxu0 0.0
    %3452 = vmatprep.subr.mxu0 0.0
    %3453 = vmatpush2.msra.mxu0 0.0
    %3454 = vmatprep.subr.mxu0 0.0
    %3455 = vmatpush2.msra.mxu0 0.0
    %3456 = vmatprep.subr.mxu0 0.0
    %3457 = vmatpush2.msra.mxu0 0.0
    %3458 = vmatprep.subr.mxu0 0.0
    %3459 = vmatpush2.msra.mxu0 0.0
    %3460 = vmatprep.subr.mxu0 0.0
    %3461 = vmatpush2.msra.mxu0 0.0
    %3462 = vmatprep.subr.mxu0 0.0
    %3463 = vmatpush2.msra.mxu0 0.0
    %3464 = vmatprep.subr.mxu0 0.0
    %3465 = vmatpush2.msra.mxu0 0.0
    %3466 = vmatprep.subr.mxu0 0.0
    %3467 = vmatpush2.msra.mxu0 0.0
    %3468 = vmatprep.subr.mxu0 0.0
    %3469 = vmatpush2.msra.mxu0 0.0
    %3470 = vmatprep.subr.mxu0 0.0
    %3471 = vmatpush2.msra.mxu0 0.0
    %3472 = vmatprep.subr.mxu0 0.0
    %3473 = vmatpush2.msra.mxu0 0.0
    %3474 = vmatprep.subr.mxu0 0.0
    %3475 = vmatpush2.msra.mxu0 0.0
    %3476 = vmatprep.mubr.f32.mxu0 0.0
    %3477 = vmatmul.mubr.f32.gmra.mxu0 %v3410
    %v3478 = vpop.f32.mrf.mxu0
    %v3479 = vadd.f32 0.0, %v3478
    %v3480 = vpop.f32.mrf.mxu0
    %3481 = vdwg.mxu0
    %3482 = vmatprep.subr.mxu0 0.0
    %3483 = vmatpush1.msra.mxu0 0.0
    %3484 = vmatprep.subr.mxu0 0.0
    %3485 = vmatpush1.msra.mxu0 0.0
    %3486 = vmatprep.subr.mxu0 0.0
    %3487 = vmatpush1.msra.mxu0 0.0
    %3488 = vmatprep.subr.mxu0 0.0
    %3489 = vmatpush1.msra.mxu0 0.0
    %3490 = vmatprep.subr.mxu0 0.0
    %3491 = vmatpush1.msra.mxu0 0.0
    %3492 = vmatprep.subr.mxu0 0.0
    %3493 = vmatpush1.msra.mxu0 0.0
    %3494 = vmatprep.subr.mxu0 0.0
    %3495 = vmatpush1.msra.mxu0 0.0
    %3496 = vmatprep.subr.mxu0 0.0
    %3497 = vmatpush1.msra.mxu0 0.0
    %3498 = vmatprep.subr.mxu0 0.0
    %3499 = vmatpush1.msra.mxu0 0.0
    %3500 = vmatprep.subr.mxu0 0.0
    %3501 = vmatpush1.msra.mxu0 0.0
    %3502 = vmatprep.subr.mxu0 0.0
    %3503 = vmatpush1.msra.mxu0 0.0
    %3504 = vmatprep.subr.mxu0 0.0
    %3505 = vmatpush1.msra.mxu0 0.0
    %3506 = vmatprep.subr.mxu0 0.0
    %3507 = vmatpush1.msra.mxu0 %v2927
    %3508 = vmatprep.subr.mxu0 0.0
    %3509 = vmatpush1.msra.mxu0 %v2926
    %3510 = vmatprep.subr.mxu0 0.0
    %3511 = vmatpush1.msra.mxu0 %v2925
    %3512 = vmatprep.subr.mxu0 0.0
    %3513 = vmatpush1.msra.mxu0 %v2924
    %3514 = vmatprep.subr.mxu0 0.0
    %3515 = vmatpush2.msra.mxu0 0.0
    %3516 = vmatprep.subr.mxu0 0.0
    %3517 = vmatpush2.msra.mxu0 0.0
    %3518 = vmatprep.subr.mxu0 0.0
    %3519 = vmatpush2.msra.mxu0 0.0
    %3520 = vmatprep.subr.mxu0 0.0
    %3521 = vmatpush2.msra.mxu0 0.0
    %3522 = vmatprep.subr.mxu0 0.0
    %3523 = vmatpush2.msra.mxu0 0.0
    %3524 = vmatprep.subr.mxu0 0.0
    %3525 = vmatpush2.msra.mxu0 0.0
    %3526 = vmatprep.subr.mxu0 0.0
    %3527 = vmatpush2.msra.mxu0 0.0
    %3528 = vmatprep.subr.mxu0 0.0
    %3529 = vmatpush2.msra.mxu0 0.0
    %3530 = vmatprep.subr.mxu0 0.0
    %3531 = vmatpush2.msra.mxu0 0.0
    %3532 = vmatprep.subr.mxu0 0.0
    %3533 = vmatpush2.msra.mxu0 0.0
    %3534 = vmatprep.subr.mxu0 0.0
    %3535 = vmatpush2.msra.mxu0 0.0
    %3536 = vmatprep.subr.mxu0 0.0
    %3537 = vmatpush2.msra.mxu0 0.0
    %3538 = vmatprep.subr.mxu0 0.0
    %3539 = vmatpush2.msra.mxu0 0.0
    %3540 = vmatprep.subr.mxu0 0.0
    %3541 = vmatpush2.msra.mxu0 0.0
    %3542 = vmatprep.subr.mxu0 0.0
    %3543 = vmatpush2.msra.mxu0 0.0
    %3544 = vmatprep.subr.mxu0 0.0
    %3545 = vmatpush2.msra.mxu0 0.0
    %3546 = vmatprep.mubr.f32.mxu0 0.0
    %3547 = vmatmul.mubr.f32.gmra.mxu0 %v3410
    %v3548 = vpop.f32.mrf.mxu0
    %v3549 = vadd.f32 0.0, %v3548
    %v3550 = vpop.f32.mrf.mxu0
    %3551 = vdwg.mxu0
    %3552 = vmatprep.subr.mxu0 0.0
    %3553 = vmatpush1.msra.mxu0 0.0
    %3554 = vmatprep.subr.mxu0 0.0
    %3555 = vmatpush1.msra.mxu0 0.0
    %3556 = vmatprep.subr.mxu0 0.0
    %3557 = vmatpush1.msra.mxu0 0.0
    %3558 = vmatprep.subr.mxu0 0.0
    %3559 = vmatpush1.msra.mxu0 0.0
    %3560 = vmatprep.subr.mxu0 0.0
    %3561 = vmatpush1.msra.mxu0 0.0
    %3562 = vmatprep.subr.mxu0 0.0
    %3563 = vmatpush1.msra.mxu0 0.0
    %3564 = vmatprep.subr.mxu0 0.0
    %3565 = vmatpush1.msra.mxu0 0.0
    %3566 = vmatprep.subr.mxu0 0.0
    %3567 = vmatpush1.msra.mxu0 0.0
    %3568 = vmatprep.subr.mxu0 0.0
    %3569 = vmatpush1.msra.mxu0 0.0
    %3570 = vmatprep.subr.mxu0 0.0
    %3571 = vmatpush1.msra.mxu0 0.0
    %3572 = vmatprep.subr.mxu0 0.0
    %3573 = vmatpush1.msra.mxu0 0.0
    %3574 = vmatprep.subr.mxu0 0.0
    %3575 = vmatpush1.msra.mxu0 0.0
    %3576 = vmatprep.subr.mxu0 0.0
    %3577 = vmatpush1.msra.mxu0 %v2931
    %3578 = vmatprep.subr.mxu0 0.0
    %3579 = vmatpush1.msra.mxu0 %v2930
    %3580 = vmatprep.subr.mxu0 0.0
    %3581 = vmatpush1.msra.mxu0 %v2929
    %3582 = vmatprep.subr.mxu0 0.0
    %3583 = vmatpush1.msra.mxu0 %v2928
    %3584 = vmatprep.subr.mxu0 0.0
    %3585 = vmatpush2.msra.mxu0 0.0
    %3586 = vmatprep.subr.mxu0 0.0
    %3587 = vmatpush2.msra.mxu0 0.0
    %3588 = vmatprep.subr.mxu0 0.0
    %3589 = vmatpush2.msra.mxu0 0.0
    %3590 = vmatprep.subr.mxu0 0.0
    %3591 = vmatpush2.msra.mxu0 0.0
    %3592 = vmatprep.subr.mxu0 0.0
    %3593 = vmatpush2.msra.mxu0 0.0
    %3594 = vmatprep.subr.mxu0 0.0
    %3595 = vmatpush2.msra.mxu0 0.0
    %3596 = vmatprep.subr.mxu0 0.0
    %3597 = vmatpush2.msra.mxu0 0.0
    %3598 = vmatprep.subr.mxu0 0.0
    %3599 = vmatpush2.msra.mxu0 0.0
    %3600 = vmatprep.subr.mxu0 0.0
    %3601 = vmatpush2.msra.mxu0 0.0
    %3602 = vmatprep.subr.mxu0 0.0
    %3603 = vmatpush2.msra.mxu0 0.0
    %3604 = vmatprep.subr.mxu0 0.0
    %3605 = vmatpush2.msra.mxu0 0.0
    %3606 = vmatprep.subr.mxu0 0.0
    %3607 = vmatpush2.msra.mxu0 0.0
    %3608 = vmatprep.subr.mxu0 0.0
    %3609 = vmatpush2.msra.mxu0 0.0
    %3610 = vmatprep.subr.mxu0 0.0
    %3611 = vmatpush2.msra.mxu0 0.0
    %3612 = vmatprep.subr.mxu0 0.0
    %3613 = vmatpush2.msra.mxu0 0.0
    %3614 = vmatprep.subr.mxu0 0.0
    %3615 = vmatpush2.msra.mxu0 0.0
    %3616 = vmatprep.mubr.f32.mxu0 0.0
    %3617 = vmatmul.mubr.f32.gmra.mxu0 %v3410
    %v3618 = vpop.f32.mrf.mxu0
    %v3619 = vadd.f32 %v3082, %v3618
    %v3620 = vpop.f32.mrf.mxu0
    %3621 = vdwg.mxu0
    %v3622 = vadd.f32 %v2660, %v3479
    %v3623 = vxor.u32 %v3622, 2147483648
    %v3624 = vmul.f32 %v3623, 1.442695
    %v3625 = vpow.pop %v3624
    %v3626 = vadd.f32 %v3625, 1.0
    %v3627 = vrcp.pop %v3626
    %v3628 = vmul.f32 1.0, %v3627
    %v3629 = vadd.f32 %v2776, %v3549
    %v3630 = vxor.u32 %v3629, 2147483648
    %v3631 = vmul.f32 %v3630, 1.442695
    %v3632 = vpow.pop %v3631
    %v3633 = vadd.f32 %v3632, 1.0
    %v3634 = vrcp.pop %v3633
    %v3635 = vmul.f32 1.0, %v3634
    %v3636 = vmul.f32 %v3628, %v3619
    %v3637 = vadd.f32 %v2892, %v3636
    %v3638 = vtanh.pop %v3637
    %v3639 = vsub.f32 1.0, %v3635
    %v3640 = vmul.f32 %v3639, %v3638
    %v3641 = vmul.f32 %v3635, %v3408
    %v3642 = vadd.f32 %v3640, %v3641
    %v3644 = vsel %vm689, %v3642, 0
    %3646 = vmatprep.subr.mxu0 0.0
    %3647 = vmatpush1.msra.mxu0 0.0
    %3648 = vmatprep.subr.mxu0 0.0
    %3649 = vmatpush1.msra.mxu0 0.0
    %3650 = vmatprep.subr.mxu0 0.0
    %3651 = vmatpush1.msra.mxu0 0.0
    %3652 = vmatprep.subr.mxu0 0.0
    %3653 = vmatpush1.msra.mxu0 0.0
    %3654 = vmatprep.subr.mxu0 0.0
    %3655 = vmatpush1.msra.mxu0 0.0
    %3656 = vmatprep.subr.mxu0 0.0
    %3657 = vmatpush1.msra.mxu0 0.0
    %3658 = vmatprep.subr.mxu0 0.0
    %3659 = vmatpush1.msra.mxu0 0.0
    %3660 = vmatprep.subr.mxu0 0.0
    %3661 = vmatpush1.msra.mxu0 0.0
    %3662 = vmatprep.subr.mxu0 0.0
    %3663 = vmatpush1.msra.mxu0 0.0
    %3664 = vmatprep.subr.mxu0 0.0
    %3665 = vmatpush1.msra.mxu0 0.0
    %3666 = vmatprep.subr.mxu0 0.0
    %3667 = vmatpush1.msra.mxu0 0.0
    %3668 = vmatprep.subr.mxu0 0.0
    %3669 = vmatpush1.msra.mxu0 0.0
    %3670 = vmatprep.subr.mxu0 0.0
    %3671 = vmatpush1.msra.mxu0 %v2923
    %3672 = vmatprep.subr.mxu0 0.0
    %3673 = vmatpush1.msra.mxu0 %v2922
    %3674 = vmatprep.subr.mxu0 0.0
    %3675 = vmatpush1.msra.mxu0 %v2921
    %3676 = vmatprep.subr.mxu0 0.0
    %3677 = vmatpush1.msra.mxu0 %v2920
    %3678 = vmatprep.subr.mxu0 0.0
    %3679 = vmatpush2.msra.mxu0 0.0
    %3680 = vmatprep.subr.mxu0 0.0
    %3681 = vmatpush2.msra.mxu0 0.0
    %3682 = vmatprep.subr.mxu0 0.0
    %3683 = vmatpush2.msra.mxu0 0.0
    %3684 = vmatprep.subr.mxu0 0.0
    %3685 = vmatpush2.msra.mxu0 0.0
    %3686 = vmatprep.subr.mxu0 0.0
    %3687 = vmatpush2.msra.mxu0 0.0
    %3688 = vmatprep.subr.mxu0 0.0
    %3689 = vmatpush2.msra.mxu0 0.0
    %3690 = vmatprep.subr.mxu0 0.0
    %3691 = vmatpush2.msra.mxu0 0.0
    %3692 = vmatprep.subr.mxu0 0.0
    %3693 = vmatpush2.msra.mxu0 0.0
    %3694 = vmatprep.subr.mxu0 0.0
    %3695 = vmatpush2.msra.mxu0 0.0
    %3696 = vmatprep.subr.mxu0 0.0
    %3697 = vmatpush2.msra.mxu0 0.0
    %3698 = vmatprep.subr.mxu0 0.0
    %3699 = vmatpush2.msra.mxu0 0.0
    %3700 = vmatprep.subr.mxu0 0.0
    %3701 = vmatpush2.msra.mxu0 0.0
    %3702 = vmatprep.subr.mxu0 0.0
    %3703 = vmatpush2.msra.mxu0 0.0
    %3704 = vmatprep.subr.mxu0 0.0
    %3705 = vmatpush2.msra.mxu0 0.0
    %3706 = vmatprep.subr.mxu0 0.0
    %3707 = vmatpush2.msra.mxu0 0.0
    %3708 = vmatprep.subr.mxu0 0.0
    %3709 = vmatpush2.msra.mxu0 0.0
    %3710 = vmatprep.mubr.f32.mxu0 0.0
    %3711 = vmatmul.mubr.f32.gmra.mxu0 %v3644
    %v3712 = vpop.f32.mrf.mxu0
    %v3713 = vadd.f32 0.0, %v3712
    %v3714 = vpop.f32.mrf.mxu0
    %3715 = vdwg.mxu0
    %3716 = vmatprep.subr.mxu0 0.0
    %3717 = vmatpush1.msra.mxu0 0.0
    %3718 = vmatprep.subr.mxu0 0.0
    %3719 = vmatpush1.msra.mxu0 0.0
    %3720 = vmatprep.subr.mxu0 0.0
    %3721 = vmatpush1.msra.mxu0 0.0
    %3722 = vmatprep.subr.mxu0 0.0
    %3723 = vmatpush1.msra.mxu0 0.0
    %3724 = vmatprep.subr.mxu0 0.0
    %3725 = vmatpush1.msra.mxu0 0.0
    %3726 = vmatprep.subr.mxu0 0.0
    %3727 = vmatpush1.msra.mxu0 0.0
    %3728 = vmatprep.subr.mxu0 0.0
    %3729 = vmatpush1.msra.mxu0 0.0
    %3730 = vmatprep.subr.mxu0 0.0
    %3731 = vmatpush1.msra.mxu0 0.0
    %3732 = vmatprep.subr.mxu0 0.0
    %3733 = vmatpush1.msra.mxu0 0.0
    %3734 = vmatprep.subr.mxu0 0.0
    %3735 = vmatpush1.msra.mxu0 0.0
    %3736 = vmatprep.subr.mxu0 0.0
    %3737 = vmatpush1.msra.mxu0 0.0
    %3738 = vmatprep.subr.mxu0 0.0
    %3739 = vmatpush1.msra.mxu0 0.0
    %3740 = vmatprep.subr.mxu0 0.0
    %3741 = vmatpush1.msra.mxu0 %v2927
    %3742 = vmatprep.subr.mxu0 0.0
    %3743 = vmatpush1.msra.mxu0 %v2926
    %3744 = vmatprep.subr.mxu0 0.0
    %3745 = vmatpush1.msra.mxu0 %v2925
    %3746 = vmatprep.subr.mxu0 0.0
    %3747 = vmatpush1.msra.mxu0 %v2924
    %3748 = vmatprep.subr.mxu0 0.0
    %3749 = vmatpush2.msra.mxu0 0.0
    %3750 = vmatprep.subr.mxu0 0.0
    %3751 = vmatpush2.msra.mxu0 0.0
    %3752 = vmatprep.subr.mxu0 0.0
    %3753 = vmatpush2.msra.mxu0 0.0
    %3754 = vmatprep.subr.mxu0 0.0
    %3755 = vmatpush2.msra.mxu0 0.0
    %3756 = vmatprep.subr.mxu0 0.0
    %3757 = vmatpush2.msra.mxu0 0.0
    %3758 = vmatprep.subr.mxu0 0.0
    %3759 = vmatpush2.msra.mxu0 0.0
    %3760 = vmatprep.subr.mxu0 0.0
    %3761 = vmatpush2.msra.mxu0 0.0
    %3762 = vmatprep.subr.mxu0 0.0
    %3763 = vmatpush2.msra.mxu0 0.0
    %3764 = vmatprep.subr.mxu0 0.0
    %3765 = vmatpush2.msra.mxu0 0.0
    %3766 = vmatprep.subr.mxu0 0.0
    %3767 = vmatpush2.msra.mxu0 0.0
    %3768 = vmatprep.subr.mxu0 0.0
    %3769 = vmatpush2.msra.mxu0 0.0
    %3770 = vmatprep.subr.mxu0 0.0
    %3771 = vmatpush2.msra.mxu0 0.0
    %3772 = vmatprep.subr.mxu0 0.0
    %3773 = vmatpush2.msra.mxu0 0.0
    %3774 = vmatprep.subr.mxu0 0.0
    %3775 = vmatpush2.msra.mxu0 0.0
    %3776 = vmatprep.subr.mxu0 0.0
    %3777 = vmatpush2.msra.mxu0 0.0
    %3778 = vmatprep.subr.mxu0 0.0
    %3779 = vmatpush2.msra.mxu0 0.0
    %3780 = vmatprep.mubr.f32.mxu0 0.0
    %3781 = vmatmul.mubr.f32.gmra.mxu0 %v3644
    %v3782 = vpop.f32.mrf.mxu0
    %v3783 = vadd.f32 0.0, %v3782
    %v3784 = vpop.f32.mrf.mxu0
    %3785 = vdwg.mxu0
    %3786 = vmatprep.subr.mxu0 0.0
    %3787 = vmatpush1.msra.mxu0 0.0
    %3788 = vmatprep.subr.mxu0 0.0
    %3789 = vmatpush1.msra.mxu0 0.0
    %3790 = vmatprep.subr.mxu0 0.0
    %3791 = vmatpush1.msra.mxu0 0.0
    %3792 = vmatprep.subr.mxu0 0.0
    %3793 = vmatpush1.msra.mxu0 0.0
    %3794 = vmatprep.subr.mxu0 0.0
    %3795 = vmatpush1.msra.mxu0 0.0
    %3796 = vmatprep.subr.mxu0 0.0
    %3797 = vmatpush1.msra.mxu0 0.0
    %3798 = vmatprep.subr.mxu0 0.0
    %3799 = vmatpush1.msra.mxu0 0.0
    %3800 = vmatprep.subr.mxu0 0.0
    %3801 = vmatpush1.msra.mxu0 0.0
    %3802 = vmatprep.subr.mxu0 0.0
    %3803 = vmatpush1.msra.mxu0 0.0
    %3804 = vmatprep.subr.mxu0 0.0
    %3805 = vmatpush1.msra.mxu0 0.0
    %3806 = vmatprep.subr.mxu0 0.0
    %3807 = vmatpush1.msra.mxu0 0.0
    %3808 = vmatprep.subr.mxu0 0.0
    %3809 = vmatpush1.msra.mxu0 0.0
    %3810 = vmatprep.subr.mxu0 0.0
    %3811 = vmatpush1.msra.mxu0 %v2931
    %3812 = vmatprep.subr.mxu0 0.0
    %3813 = vmatpush1.msra.mxu0 %v2930
    %3814 = vmatprep.subr.mxu0 0.0
    %3815 = vmatpush1.msra.mxu0 %v2929
    %3816 = vmatprep.subr.mxu0 0.0
    %3817 = vmatpush1.msra.mxu0 %v2928
    %3818 = vmatprep.subr.mxu0 0.0
    %3819 = vmatpush2.msra.mxu0 0.0
    %3820 = vmatprep.subr.mxu0 0.0
    %3821 = vmatpush2.msra.mxu0 0.0
    %3822 = vmatprep.subr.mxu0 0.0
    %3823 = vmatpush2.msra.mxu0 0.0
    %3824 = vmatprep.subr.mxu0 0.0
    %3825 = vmatpush2.msra.mxu0 0.0
    %3826 = vmatprep.subr.mxu0 0.0
    %3827 = vmatpush2.msra.mxu0 0.0
    %3828 = vmatprep.subr.mxu0 0.0
    %3829 = vmatpush2.msra.mxu0 0.0
    %3830 = vmatprep.subr.mxu0 0.0
    %3831 = vmatpush2.msra.mxu0 0.0
    %3832 = vmatprep.subr.mxu0 0.0
    %3833 = vmatpush2.msra.mxu0 0.0
    %3834 = vmatprep.subr.mxu0 0.0
    %3835 = vmatpush2.msra.mxu0 0.0
    %3836 = vmatprep.subr.mxu0 0.0
    %3837 = vmatpush2.msra.mxu0 0.0
    %3838 = vmatprep.subr.mxu0 0.0
    %3839 = vmatpush2.msra.mxu0 0.0
    %3840 = vmatprep.subr.mxu0 0.0
    %3841 = vmatpush2.msra.mxu0 0.0
    %3842 = vmatprep.subr.mxu0 0.0
    %3843 = vmatpush2.msra.mxu0 0.0
    %3844 = vmatprep.subr.mxu0 0.0
    %3845 = vmatpush2.msra.mxu0 0.0
    %3846 = vmatprep.subr.mxu0 0.0
    %3847 = vmatpush2.msra.mxu0 0.0
    %3848 = vmatprep.subr.mxu0 0.0
    %3849 = vmatpush2.msra.mxu0 0.0
    %3850 = vmatprep.mubr.f32.mxu0 0.0
    %3851 = vmatmul.mubr.f32.gmra.mxu0 %v3644
    %v3852 = vpop.f32.mrf.mxu0
    %v3853 = vadd.f32 %v3082, %v3852
    %v3854 = vpop.f32.mrf.mxu0
    %3855 = vdwg.mxu0
    %v3856 = vadd.f32 %v2665, %v3713
    %v3857 = vxor.u32 %v3856, 2147483648
    %v3858 = vmul.f32 %v3857, 1.442695
    %v3859 = vpow.pop %v3858
    %v3860 = vadd.f32 %v3859, 1.0
    %v3861 = vrcp.pop %v3860
    %v3862 = vmul.f32 1.0, %v3861
    %v3863 = vadd.f32 %v2781, %v3783
    %v3864 = vxor.u32 %v3863, 2147483648
    %v3865 = vmul.f32 %v3864, 1.442695
    %v3866 = vpow.pop %v3865
    %v3867 = vadd.f32 %v3866, 1.0
    %v3868 = vrcp.pop %v3867
    %v3869 = vmul.f32 1.0, %v3868
    %v3870 = vmul.f32 %v3862, %v3853
    %v3871 = vadd.f32 %v2897, %v3870
    %v3872 = vtanh.pop %v3871
    %v3873 = vsub.f32 1.0, %v3869
    %v3874 = vmul.f32 %v3873, %v3872
    %v3875 = vmul.f32 %v3869, %v3642
    %v3876 = vadd.f32 %v3874, %v3875
    %v3878 = vsel %vm689, %v3876, 0
    %3880 = vmatprep.subr.mxu0 0.0
    %3881 = vmatpush1.msra.mxu0 0.0
    %3882 = vmatprep.subr.mxu0 0.0
    %3883 = vmatpush1.msra.mxu0 0.0
    %3884 = vmatprep.subr.mxu0 0.0
    %3885 = vmatpush1.msra.mxu0 0.0
    %3886 = vmatprep.subr.mxu0 0.0
    %3887 = vmatpush1.msra.mxu0 0.0
    %3888 = vmatprep.subr.mxu0 0.0
    %3889 = vmatpush1.msra.mxu0 0.0
    %3890 = vmatprep.subr.mxu0 0.0
    %3891 = vmatpush1.msra.mxu0 0.0
    %3892 = vmatprep.subr.mxu0 0.0
    %3893 = vmatpush1.msra.mxu0 0.0
    %3894 = vmatprep.subr.mxu0 0.0
    %3895 = vmatpush1.msra.mxu0 0.0
    %3896 = vmatprep.subr.mxu0 0.0
    %3897 = vmatpush1.msra.mxu0 0.0
    %3898 = vmatprep.subr.mxu0 0.0
    %3899 = vmatpush1.msra.mxu0 0.0
    %3900 = vmatprep.subr.mxu0 0.0
    %3901 = vmatpush1.msra.mxu0 0.0
    %3902 = vmatprep.subr.mxu0 0.0
    %3903 = vmatpush1.msra.mxu0 0.0
    %3904 = vmatprep.subr.mxu0 0.0
    %3905 = vmatpush1.msra.mxu0 %v2923
    %3906 = vmatprep.subr.mxu0 0.0
    %3907 = vmatpush1.msra.mxu0 %v2922
    %3908 = vmatprep.subr.mxu0 0.0
    %3909 = vmatpush1.msra.mxu0 %v2921
    %3910 = vmatprep.subr.mxu0 0.0
    %3911 = vmatpush1.msra.mxu0 %v2920
    %3912 = vmatprep.subr.mxu0 0.0
    %3913 = vmatpush2.msra.mxu0 0.0
    %3914 = vmatprep.subr.mxu0 0.0
    %3915 = vmatpush2.msra.mxu0 0.0
    %3916 = vmatprep.subr.mxu0 0.0
    %3917 = vmatpush2.msra.mxu0 0.0
    %3918 = vmatprep.subr.mxu0 0.0
    %3919 = vmatpush2.msra.mxu0 0.0
    %3920 = vmatprep.subr.mxu0 0.0
    %3921 = vmatpush2.msra.mxu0 0.0
    %3922 = vmatprep.subr.mxu0 0.0
    %3923 = vmatpush2.msra.mxu0 0.0
    %3924 = vmatprep.subr.mxu0 0.0
    %3925 = vmatpush2.msra.mxu0 0.0
    %3926 = vmatprep.subr.mxu0 0.0
    %3927 = vmatpush2.msra.mxu0 0.0
    %3928 = vmatprep.subr.mxu0 0.0
    %3929 = vmatpush2.msra.mxu0 0.0
    %3930 = vmatprep.subr.mxu0 0.0
    %3931 = vmatpush2.msra.mxu0 0.0
    %3932 = vmatprep.subr.mxu0 0.0
    %3933 = vmatpush2.msra.mxu0 0.0
    %3934 = vmatprep.subr.mxu0 0.0
    %3935 = vmatpush2.msra.mxu0 0.0
    %3936 = vmatprep.subr.mxu0 0.0
    %3937 = vmatpush2.msra.mxu0 0.0
    %3938 = vmatprep.subr.mxu0 0.0
    %3939 = vmatpush2.msra.mxu0 0.0
    %3940 = vmatprep.subr.mxu0 0.0
    %3941 = vmatpush2.msra.mxu0 0.0
    %3942 = vmatprep.subr.mxu0 0.0
    %3943 = vmatpush2.msra.mxu0 0.0
    %3944 = vmatprep.mubr.f32.mxu0 0.0
    %3945 = vmatmul.mubr.f32.gmra.mxu0 %v3878
    %v3946 = vpop.f32.mrf.mxu0
    %v3947 = vadd.f32 0.0, %v3946
    %v3948 = vpop.f32.mrf.mxu0
    %3949 = vdwg.mxu0
    %3950 = vmatprep.subr.mxu0 0.0
    %3951 = vmatpush1.msra.mxu0 0.0
    %3952 = vmatprep.subr.mxu0 0.0
    %3953 = vmatpush1.msra.mxu0 0.0
    %3954 = vmatprep.subr.mxu0 0.0
    %3955 = vmatpush1.msra.mxu0 0.0
    %3956 = vmatprep.subr.mxu0 0.0
    %3957 = vmatpush1.msra.mxu0 0.0
    %3958 = vmatprep.subr.mxu0 0.0
    %3959 = vmatpush1.msra.mxu0 0.0
    %3960 = vmatprep.subr.mxu0 0.0
    %3961 = vmatpush1.msra.mxu0 0.0
    %3962 = vmatprep.subr.mxu0 0.0
    %3963 = vmatpush1.msra.mxu0 0.0
    %3964 = vmatprep.subr.mxu0 0.0
    %3965 = vmatpush1.msra.mxu0 0.0
    %3966 = vmatprep.subr.mxu0 0.0
    %3967 = vmatpush1.msra.mxu0 0.0
    %3968 = vmatprep.subr.mxu0 0.0
    %3969 = vmatpush1.msra.mxu0 0.0
    %3970 = vmatprep.subr.mxu0 0.0
    %3971 = vmatpush1.msra.mxu0 0.0
    %3972 = vmatprep.subr.mxu0 0.0
    %3973 = vmatpush1.msra.mxu0 0.0
    %3974 = vmatprep.subr.mxu0 0.0
    %3975 = vmatpush1.msra.mxu0 %v2927
    %3976 = vmatprep.subr.mxu0 0.0
    %3977 = vmatpush1.msra.mxu0 %v2926
    %3978 = vmatprep.subr.mxu0 0.0
    %3979 = vmatpush1.msra.mxu0 %v2925
    %3980 = vmatprep.subr.mxu0 0.0
    %3981 = vmatpush1.msra.mxu0 %v2924
    %3982 = vmatprep.subr.mxu0 0.0
    %3983 = vmatpush2.msra.mxu0 0.0
    %3984 = vmatprep.subr.mxu0 0.0
    %3985 = vmatpush2.msra.mxu0 0.0
    %3986 = vmatprep.subr.mxu0 0.0
    %3987 = vmatpush2.msra.mxu0 0.0
    %3988 = vmatprep.subr.mxu0 0.0
    %3989 = vmatpush2.msra.mxu0 0.0
    %3990 = vmatprep.subr.mxu0 0.0
    %3991 = vmatpush2.msra.mxu0 0.0
    %3992 = vmatprep.subr.mxu0 0.0
    %3993 = vmatpush2.msra.mxu0 0.0
    %3994 = vmatprep.subr.mxu0 0.0
    %3995 = vmatpush2.msra.mxu0 0.0
    %3996 = vmatprep.subr.mxu0 0.0
    %3997 = vmatpush2.msra.mxu0 0.0
    %3998 = vmatprep.subr.mxu0 0.0
    %3999 = vmatpush2.msra.mxu0 0.0
    %4000 = vmatprep.subr.mxu0 0.0
    %4001 = vmatpush2.msra.mxu0 0.0
    %4002 = vmatprep.subr.mxu0 0.0
    %4003 = vmatpush2.msra.mxu0 0.0
    %4004 = vmatprep.subr.mxu0 0.0
    %4005 = vmatpush2.msra.mxu0 0.0
    %4006 = vmatprep.subr.mxu0 0.0
    %4007 = vmatpush2.msra.mxu0 0.0
    %4008 = vmatprep.subr.mxu0 0.0
    %4009 = vmatpush2.msra.mxu0 0.0
    %4010 = vmatprep.subr.mxu0 0.0
    %4011 = vmatpush2.msra.mxu0 0.0
    %4012 = vmatprep.subr.mxu0 0.0
    %4013 = vmatpush2.msra.mxu0 0.0
    %4014 = vmatprep.mubr.f32.mxu0 0.0
    %4015 = vmatmul.mubr.f32.gmra.mxu0 %v3878
    %v4016 = vpop.f32.mrf.mxu0
    %v4017 = vadd.f32 0.0, %v4016
    %v4018 = vpop.f32.mrf.mxu0
    %4019 = vdwg.mxu0
    %4020 = vmatprep.subr.mxu0 0.0
    %4021 = vmatpush1.msra.mxu0 0.0
    %4022 = vmatprep.subr.mxu0 0.0
    %4023 = vmatpush1.msra.mxu0 0.0
    %4024 = vmatprep.subr.mxu0 0.0
    %4025 = vmatpush1.msra.mxu0 0.0
    %4026 = vmatprep.subr.mxu0 0.0
    %4027 = vmatpush1.msra.mxu0 0.0
    %4028 = vmatprep.subr.mxu0 0.0
    %4029 = vmatpush1.msra.mxu0 0.0
    %4030 = vmatprep.subr.mxu0 0.0
    %4031 = vmatpush1.msra.mxu0 0.0
    %4032 = vmatprep.subr.mxu0 0.0
    %4033 = vmatpush1.msra.mxu0 0.0
    %4034 = vmatprep.subr.mxu0 0.0
    %4035 = vmatpush1.msra.mxu0 0.0
    %4036 = vmatprep.subr.mxu0 0.0
    %4037 = vmatpush1.msra.mxu0 0.0
    %4038 = vmatprep.subr.mxu0 0.0
    %4039 = vmatpush1.msra.mxu0 0.0
    %4040 = vmatprep.subr.mxu0 0.0
    %4041 = vmatpush1.msra.mxu0 0.0
    %4042 = vmatprep.subr.mxu0 0.0
    %4043 = vmatpush1.msra.mxu0 0.0
    %4044 = vmatprep.subr.mxu0 0.0
    %4045 = vmatpush1.msra.mxu0 %v2931
    %4046 = vmatprep.subr.mxu0 0.0
    %4047 = vmatpush1.msra.mxu0 %v2930
    %4048 = vmatprep.subr.mxu0 0.0
    %4049 = vmatpush1.msra.mxu0 %v2929
    %4050 = vmatprep.subr.mxu0 0.0
    %4051 = vmatpush1.msra.mxu0 %v2928
    %4052 = vmatprep.subr.mxu0 0.0
    %4053 = vmatpush2.msra.mxu0 0.0
    %4054 = vmatprep.subr.mxu0 0.0
    %4055 = vmatpush2.msra.mxu0 0.0
    %4056 = vmatprep.subr.mxu0 0.0
    %4057 = vmatpush2.msra.mxu0 0.0
    %4058 = vmatprep.subr.mxu0 0.0
    %4059 = vmatpush2.msra.mxu0 0.0
    %4060 = vmatprep.subr.mxu0 0.0
    %4061 = vmatpush2.msra.mxu0 0.0
    %4062 = vmatprep.subr.mxu0 0.0
    %4063 = vmatpush2.msra.mxu0 0.0
    %4064 = vmatprep.subr.mxu0 0.0
    %4065 = vmatpush2.msra.mxu0 0.0
    %4066 = vmatprep.subr.mxu0 0.0
    %4067 = vmatpush2.msra.mxu0 0.0
    %4068 = vmatprep.subr.mxu0 0.0
    %4069 = vmatpush2.msra.mxu0 0.0
    %4070 = vmatprep.subr.mxu0 0.0
    %4071 = vmatpush2.msra.mxu0 0.0
    %4072 = vmatprep.subr.mxu0 0.0
    %4073 = vmatpush2.msra.mxu0 0.0
    %4074 = vmatprep.subr.mxu0 0.0
    %4075 = vmatpush2.msra.mxu0 0.0
    %4076 = vmatprep.subr.mxu0 0.0
    %4077 = vmatpush2.msra.mxu0 0.0
    %4078 = vmatprep.subr.mxu0 0.0
    %4079 = vmatpush2.msra.mxu0 0.0
    %4080 = vmatprep.subr.mxu0 0.0
    %4081 = vmatpush2.msra.mxu0 0.0
    %4082 = vmatprep.subr.mxu0 0.0
    %4083 = vmatpush2.msra.mxu0 0.0
    %4084 = vmatprep.mubr.f32.mxu0 0.0
    %4085 = vmatmul.mubr.f32.gmra.mxu0 %v3878
    %v4086 = vpop.f32.mrf.mxu0
    %v4087 = vadd.f32 %v3082, %v4086
    %v4088 = vpop.f32.mrf.mxu0
    %4089 = vdwg.mxu0
    %v4090 = vadd.f32 %v2670, %v3947
    %v4091 = vxor.u32 %v4090, 2147483648
    %v4092 = vmul.f32 %v4091, 1.442695
    %v4093 = vpow.pop %v4092
    %v4094 = vadd.f32 %v4093, 1.0
    %v4095 = vrcp.pop %v4094
    %v4096 = vmul.f32 1.0, %v4095
    %v4097 = vadd.f32 %v2786, %v4017
    %v4098 = vxor.u32 %v4097, 2147483648
    %v4099 = vmul.f32 %v4098, 1.442695
    %v4100 = vpow.pop %v4099
    %v4101 = vadd.f32 %v4100, 1.0
    %v4102 = vrcp.pop %v4101
    %v4103 = vmul.f32 1.0, %v4102
    %v4104 = vmul.f32 %v4096, %v4087
    %v4105 = vadd.f32 %v2902, %v4104
    %v4106 = vtanh.pop %v4105
    %v4107 = vsub.f32 1.0, %v4103
    %v4108 = vmul.f32 %v4107, %v4106
    %v4109 = vmul.f32 %v4103, %v3876
    %v4110 = vadd.f32 %v4108, %v4109
    %v4112 = vsel %vm689, %v4110, 0
    %4114 = vmatprep.subr.mxu0 0.0
    %4115 = vmatpush1.msra.mxu0 0.0
    %4116 = vmatprep.subr.mxu0 0.0
    %4117 = vmatpush1.msra.mxu0 0.0
    %4118 = vmatprep.subr.mxu0 0.0
    %4119 = vmatpush1.msra.mxu0 0.0
    %4120 = vmatprep.subr.mxu0 0.0
    %4121 = vmatpush1.msra.mxu0 0.0
    %4122 = vmatprep.subr.mxu0 0.0
    %4123 = vmatpush1.msra.mxu0 0.0
    %4124 = vmatprep.subr.mxu0 0.0
    %4125 = vmatpush1.msra.mxu0 0.0
    %4126 = vmatprep.subr.mxu0 0.0
    %4127 = vmatpush1.msra.mxu0 0.0
    %4128 = vmatprep.subr.mxu0 0.0
    %4129 = vmatpush1.msra.mxu0 0.0
    %4130 = vmatprep.subr.mxu0 0.0
    %4131 = vmatpush1.msra.mxu0 0.0
    %4132 = vmatprep.subr.mxu0 0.0
    %4133 = vmatpush1.msra.mxu0 0.0
    %4134 = vmatprep.subr.mxu0 0.0
    %4135 = vmatpush1.msra.mxu0 0.0
    %4136 = vmatprep.subr.mxu0 0.0
    %4137 = vmatpush1.msra.mxu0 0.0
    %4138 = vmatprep.subr.mxu0 0.0
    %4139 = vmatpush1.msra.mxu0 %v2923
    %4140 = vmatprep.subr.mxu0 0.0
    %4141 = vmatpush1.msra.mxu0 %v2922
    %4142 = vmatprep.subr.mxu0 0.0
    %4143 = vmatpush1.msra.mxu0 %v2921
    %4144 = vmatprep.subr.mxu0 0.0
    %4145 = vmatpush1.msra.mxu0 %v2920
    %4146 = vmatprep.subr.mxu0 0.0
    %4147 = vmatpush2.msra.mxu0 0.0
    %4148 = vmatprep.subr.mxu0 0.0
    %4149 = vmatpush2.msra.mxu0 0.0
    %4150 = vmatprep.subr.mxu0 0.0
    %4151 = vmatpush2.msra.mxu0 0.0
    %4152 = vmatprep.subr.mxu0 0.0
    %4153 = vmatpush2.msra.mxu0 0.0
    %4154 = vmatprep.subr.mxu0 0.0
    %4155 = vmatpush2.msra.mxu0 0.0
    %4156 = vmatprep.subr.mxu0 0.0
    %4157 = vmatpush2.msra.mxu0 0.0
    %4158 = vmatprep.subr.mxu0 0.0
    %4159 = vmatpush2.msra.mxu0 0.0
    %4160 = vmatprep.subr.mxu0 0.0
    %4161 = vmatpush2.msra.mxu0 0.0
    %4162 = vmatprep.subr.mxu0 0.0
    %4163 = vmatpush2.msra.mxu0 0.0
    %4164 = vmatprep.subr.mxu0 0.0
    %4165 = vmatpush2.msra.mxu0 0.0
    %4166 = vmatprep.subr.mxu0 0.0
    %4167 = vmatpush2.msra.mxu0 0.0
    %4168 = vmatprep.subr.mxu0 0.0
    %4169 = vmatpush2.msra.mxu0 0.0
    %4170 = vmatprep.subr.mxu0 0.0
    %4171 = vmatpush2.msra.mxu0 0.0
    %4172 = vmatprep.subr.mxu0 0.0
    %4173 = vmatpush2.msra.mxu0 0.0
    %4174 = vmatprep.subr.mxu0 0.0
    %4175 = vmatpush2.msra.mxu0 0.0
    %4176 = vmatprep.subr.mxu0 0.0
    %4177 = vmatpush2.msra.mxu0 0.0
    %4178 = vmatprep.mubr.f32.mxu0 0.0
    %4179 = vmatmul.mubr.f32.gmra.mxu0 %v4112
    %v4180 = vpop.f32.mrf.mxu0
    %v4181 = vadd.f32 0.0, %v4180
    %v4182 = vpop.f32.mrf.mxu0
    %4183 = vdwg.mxu0
    %4184 = vmatprep.subr.mxu0 0.0
    %4185 = vmatpush1.msra.mxu0 0.0
    %4186 = vmatprep.subr.mxu0 0.0
    %4187 = vmatpush1.msra.mxu0 0.0
    %4188 = vmatprep.subr.mxu0 0.0
    %4189 = vmatpush1.msra.mxu0 0.0
    %4190 = vmatprep.subr.mxu0 0.0
    %4191 = vmatpush1.msra.mxu0 0.0
    %4192 = vmatprep.subr.mxu0 0.0
    %4193 = vmatpush1.msra.mxu0 0.0
    %4194 = vmatprep.subr.mxu0 0.0
    %4195 = vmatpush1.msra.mxu0 0.0
    %4196 = vmatprep.subr.mxu0 0.0
    %4197 = vmatpush1.msra.mxu0 0.0
    %4198 = vmatprep.subr.mxu0 0.0
    %4199 = vmatpush1.msra.mxu0 0.0
    %4200 = vmatprep.subr.mxu0 0.0
    %4201 = vmatpush1.msra.mxu0 0.0
    %4202 = vmatprep.subr.mxu0 0.0
    %4203 = vmatpush1.msra.mxu0 0.0
    %4204 = vmatprep.subr.mxu0 0.0
    %4205 = vmatpush1.msra.mxu0 0.0
    %4206 = vmatprep.subr.mxu0 0.0
    %4207 = vmatpush1.msra.mxu0 0.0
    %4208 = vmatprep.subr.mxu0 0.0
    %4209 = vmatpush1.msra.mxu0 %v2927
    %4210 = vmatprep.subr.mxu0 0.0
    %4211 = vmatpush1.msra.mxu0 %v2926
    %4212 = vmatprep.subr.mxu0 0.0
    %4213 = vmatpush1.msra.mxu0 %v2925
    %4214 = vmatprep.subr.mxu0 0.0
    %4215 = vmatpush1.msra.mxu0 %v2924
    %4216 = vmatprep.subr.mxu0 0.0
    %4217 = vmatpush2.msra.mxu0 0.0
    %4218 = vmatprep.subr.mxu0 0.0
    %4219 = vmatpush2.msra.mxu0 0.0
    %4220 = vmatprep.subr.mxu0 0.0
    %4221 = vmatpush2.msra.mxu0 0.0
    %4222 = vmatprep.subr.mxu0 0.0
    %4223 = vmatpush2.msra.mxu0 0.0
    %4224 = vmatprep.subr.mxu0 0.0
    %4225 = vmatpush2.msra.mxu0 0.0
    %4226 = vmatprep.subr.mxu0 0.0
    %4227 = vmatpush2.msra.mxu0 0.0
    %4228 = vmatprep.subr.mxu0 0.0
    %4229 = vmatpush2.msra.mxu0 0.0
    %4230 = vmatprep.subr.mxu0 0.0
    %4231 = vmatpush2.msra.mxu0 0.0
    %4232 = vmatprep.subr.mxu0 0.0
    %4233 = vmatpush2.msra.mxu0 0.0
    %4234 = vmatprep.subr.mxu0 0.0
    %4235 = vmatpush2.msra.mxu0 0.0
    %4236 = vmatprep.subr.mxu0 0.0
    %4237 = vmatpush2.msra.mxu0 0.0
    %4238 = vmatprep.subr.mxu0 0.0
    %4239 = vmatpush2.msra.mxu0 0.0
    %4240 = vmatprep.subr.mxu0 0.0
    %4241 = vmatpush2.msra.mxu0 0.0
    %4242 = vmatprep.subr.mxu0 0.0
    %4243 = vmatpush2.msra.mxu0 0.0
    %4244 = vmatprep.subr.mxu0 0.0
    %4245 = vmatpush2.msra.mxu0 0.0
    %4246 = vmatprep.subr.mxu0 0.0
    %4247 = vmatpush2.msra.mxu0 0.0
    %4248 = vmatprep.mubr.f32.mxu0 0.0
    %4249 = vmatmul.mubr.f32.gmra.mxu0 %v4112
    %v4250 = vpop.f32.mrf.mxu0
    %v4251 = vadd.f32 0.0, %v4250
    %v4252 = vpop.f32.mrf.mxu0
    %4253 = vdwg.mxu0
    %4254 = vmatprep.subr.mxu0 0.0
    %4255 = vmatpush1.msra.mxu0 0.0
    %4256 = vmatprep.subr.mxu0 0.0
    %4257 = vmatpush1.msra.mxu0 0.0
    %4258 = vmatprep.subr.mxu0 0.0
    %4259 = vmatpush1.msra.mxu0 0.0
    %4260 = vmatprep.subr.mxu0 0.0
    %4261 = vmatpush1.msra.mxu0 0.0
    %4262 = vmatprep.subr.mxu0 0.0
    %4263 = vmatpush1.msra.mxu0 0.0
    %4264 = vmatprep.subr.mxu0 0.0
    %4265 = vmatpush1.msra.mxu0 0.0
    %4266 = vmatprep.subr.mxu0 0.0
    %4267 = vmatpush1.msra.mxu0 0.0
    %4268 = vmatprep.subr.mxu0 0.0
    %4269 = vmatpush1.msra.mxu0 0.0
    %4270 = vmatprep.subr.mxu0 0.0
    %4271 = vmatpush1.msra.mxu0 0.0
    %4272 = vmatprep.subr.mxu0 0.0
    %4273 = vmatpush1.msra.mxu0 0.0
    %4274 = vmatprep.subr.mxu0 0.0
    %4275 = vmatpush1.msra.mxu0 0.0
    %4276 = vmatprep.subr.mxu0 0.0
    %4277 = vmatpush1.msra.mxu0 0.0
    %4278 = vmatprep.subr.mxu0 0.0
    %4279 = vmatpush1.msra.mxu0 %v2931
    %4280 = vmatprep.subr.mxu0 0.0
    %4281 = vmatpush1.msra.mxu0 %v2930
    %4282 = vmatprep.subr.mxu0 0.0
    %4283 = vmatpush1.msra.mxu0 %v2929
    %4284 = vmatprep.subr.mxu0 0.0
    %4285 = vmatpush1.msra.mxu0 %v2928
    %4286 = vmatprep.subr.mxu0 0.0
    %4287 = vmatpush2.msra.mxu0 0.0
    %4288 = vmatprep.subr.mxu0 0.0
    %4289 = vmatpush2.msra.mxu0 0.0
    %4290 = vmatprep.subr.mxu0 0.0
    %4291 = vmatpush2.msra.mxu0 0.0
    %4292 = vmatprep.subr.mxu0 0.0
    %4293 = vmatpush2.msra.mxu0 0.0
    %4294 = vmatprep.subr.mxu0 0.0
    %4295 = vmatpush2.msra.mxu0 0.0
    %4296 = vmatprep.subr.mxu0 0.0
    %4297 = vmatpush2.msra.mxu0 0.0
    %4298 = vmatprep.subr.mxu0 0.0
    %4299 = vmatpush2.msra.mxu0 0.0
    %4300 = vmatprep.subr.mxu0 0.0
    %4301 = vmatpush2.msra.mxu0 0.0
    %4302 = vmatprep.subr.mxu0 0.0
    %4303 = vmatpush2.msra.mxu0 0.0
    %4304 = vmatprep.subr.mxu0 0.0
    %4305 = vmatpush2.msra.mxu0 0.0
    %4306 = vmatprep.subr.mxu0 0.0
    %4307 = vmatpush2.msra.mxu0 0.0
    %4308 = vmatprep.subr.mxu0 0.0
    %4309 = vmatpush2.msra.mxu0 0.0
    %4310 = vmatprep.subr.mxu0 0.0
    %4311 = vmatpush2.msra.mxu0 0.0
    %4312 = vmatprep.subr.mxu0 0.0
    %4313 = vmatpush2.msra.mxu0 0.0
    %4314 = vmatprep.subr.mxu0 0.0
    %4315 = vmatpush2.msra.mxu0 0.0
    %4316 = vmatprep.subr.mxu0 0.0
    %4317 = vmatpush2.msra.mxu0 0.0
    %4318 = vmatprep.mubr.f32.mxu0 0.0
    %4319 = vmatmul.mubr.f32.gmra.mxu0 %v4112
    %v4320 = vpop.f32.mrf.mxu0
    %v4321 = vadd.f32 %v3082, %v4320
    %v4322 = vpop.f32.mrf.mxu0
    %4323 = vdwg.mxu0
    %v4324 = vadd.f32 %v2675, %v4181
    %v4325 = vxor.u32 %v4324, 2147483648
    %v4326 = vmul.f32 %v4325, 1.442695
    %v4327 = vpow.pop %v4326
    %v4328 = vadd.f32 %v4327, 1.0
    %v4329 = vrcp.pop %v4328
    %v4330 = vmul.f32 1.0, %v4329
    %v4331 = vadd.f32 %v2791, %v4251
    %v4332 = vxor.u32 %v4331, 2147483648
    %v4333 = vmul.f32 %v4332, 1.442695
    %v4334 = vpow.pop %v4333
    %v4335 = vadd.f32 %v4334, 1.0
    %v4336 = vrcp.pop %v4335
    %v4337 = vmul.f32 1.0, %v4336
    %v4338 = vmul.f32 %v4330, %v4321
    %v4339 = vadd.f32 %v2907, %v4338
    %v4340 = vtanh.pop %v4339
    %v4341 = vsub.f32 1.0, %v4337
    %v4342 = vmul.f32 %v4341, %v4340
    %v4343 = vmul.f32 %v4337, %v4110
    %v4344 = vadd.f32 %v4342, %v4343
    %v4346 = vsel %vm689, %v4344, 0
    %4348 = vmatprep.subr.mxu0 0.0
    %4349 = vmatpush1.msra.mxu0 0.0
    %4350 = vmatprep.subr.mxu0 0.0
    %4351 = vmatpush1.msra.mxu0 0.0
    %4352 = vmatprep.subr.mxu0 0.0
    %4353 = vmatpush1.msra.mxu0 0.0
    %4354 = vmatprep.subr.mxu0 0.0
    %4355 = vmatpush1.msra.mxu0 0.0
    %4356 = vmatprep.subr.mxu0 0.0
    %4357 = vmatpush1.msra.mxu0 0.0
    %4358 = vmatprep.subr.mxu0 0.0
    %4359 = vmatpush1.msra.mxu0 0.0
    %4360 = vmatprep.subr.mxu0 0.0
    %4361 = vmatpush1.msra.mxu0 0.0
    %4362 = vmatprep.subr.mxu0 0.0
    %4363 = vmatpush1.msra.mxu0 0.0
    %4364 = vmatprep.subr.mxu0 0.0
    %4365 = vmatpush1.msra.mxu0 0.0
    %4366 = vmatprep.subr.mxu0 0.0
    %4367 = vmatpush1.msra.mxu0 0.0
    %4368 = vmatprep.subr.mxu0 0.0
    %4369 = vmatpush1.msra.mxu0 0.0
    %4370 = vmatprep.subr.mxu0 0.0
    %4371 = vmatpush1.msra.mxu0 0.0
    %4372 = vmatprep.subr.mxu0 0.0
    %4373 = vmatpush1.msra.mxu0 %v2923
    %4374 = vmatprep.subr.mxu0 0.0
    %4375 = vmatpush1.msra.mxu0 %v2922
    %4376 = vmatprep.subr.mxu0 0.0
    %4377 = vmatpush1.msra.mxu0 %v2921
    %4378 = vmatprep.subr.mxu0 0.0
    %4379 = vmatpush1.msra.mxu0 %v2920
    %4380 = vmatprep.subr.mxu0 0.0
    %4381 = vmatpush2.msra.mxu0 0.0
    %4382 = vmatprep.subr.mxu0 0.0
    %4383 = vmatpush2.msra.mxu0 0.0
    %4384 = vmatprep.subr.mxu0 0.0
    %4385 = vmatpush2.msra.mxu0 0.0
    %4386 = vmatprep.subr.mxu0 0.0
    %4387 = vmatpush2.msra.mxu0 0.0
    %4388 = vmatprep.subr.mxu0 0.0
    %4389 = vmatpush2.msra.mxu0 0.0
    %4390 = vmatprep.subr.mxu0 0.0
    %4391 = vmatpush2.msra.mxu0 0.0
    %4392 = vmatprep.subr.mxu0 0.0
    %4393 = vmatpush2.msra.mxu0 0.0
    %4394 = vmatprep.subr.mxu0 0.0
    %4395 = vmatpush2.msra.mxu0 0.0
    %4396 = vmatprep.subr.mxu0 0.0
    %4397 = vmatpush2.msra.mxu0 0.0
    %4398 = vmatprep.subr.mxu0 0.0
    %4399 = vmatpush2.msra.mxu0 0.0
    %4400 = vmatprep.subr.mxu0 0.0
    %4401 = vmatpush2.msra.mxu0 0.0
    %4402 = vmatprep.subr.mxu0 0.0
    %4403 = vmatpush2.msra.mxu0 0.0
    %4404 = vmatprep.subr.mxu0 0.0
    %4405 = vmatpush2.msra.mxu0 0.0
    %4406 = vmatprep.subr.mxu0 0.0
    %4407 = vmatpush2.msra.mxu0 0.0
    %4408 = vmatprep.subr.mxu0 0.0
    %4409 = vmatpush2.msra.mxu0 0.0
    %4410 = vmatprep.subr.mxu0 0.0
    %4411 = vmatpush2.msra.mxu0 0.0
    %4412 = vmatprep.mubr.f32.mxu0 0.0
    %4413 = vmatmul.mubr.f32.gmra.mxu0 %v4346
    %v4414 = vpop.f32.mrf.mxu0
    %v4415 = vadd.f32 0.0, %v4414
    %v4416 = vpop.f32.mrf.mxu0
    %4417 = vdwg.mxu0
    %4418 = vmatprep.subr.mxu0 0.0
    %4419 = vmatpush1.msra.mxu0 0.0
    %4420 = vmatprep.subr.mxu0 0.0
    %4421 = vmatpush1.msra.mxu0 0.0
    %4422 = vmatprep.subr.mxu0 0.0
    %4423 = vmatpush1.msra.mxu0 0.0
    %4424 = vmatprep.subr.mxu0 0.0
    %4425 = vmatpush1.msra.mxu0 0.0
    %4426 = vmatprep.subr.mxu0 0.0
    %4427 = vmatpush1.msra.mxu0 0.0
    %4428 = vmatprep.subr.mxu0 0.0
    %4429 = vmatpush1.msra.mxu0 0.0
    %4430 = vmatprep.subr.mxu0 0.0
    %4431 = vmatpush1.msra.mxu0 0.0
    %4432 = vmatprep.subr.mxu0 0.0
    %4433 = vmatpush1.msra.mxu0 0.0
    %4434 = vmatprep.subr.mxu0 0.0
    %4435 = vmatpush1.msra.mxu0 0.0
    %4436 = vmatprep.subr.mxu0 0.0
    %4437 = vmatpush1.msra.mxu0 0.0
    %4438 = vmatprep.subr.mxu0 0.0
    %4439 = vmatpush1.msra.mxu0 0.0
    %4440 = vmatprep.subr.mxu0 0.0
    %4441 = vmatpush1.msra.mxu0 0.0
    %4442 = vmatprep.subr.mxu0 0.0
    %4443 = vmatpush1.msra.mxu0 %v2927
    %4444 = vmatprep.subr.mxu0 0.0
    %4445 = vmatpush1.msra.mxu0 %v2926
    %4446 = vmatprep.subr.mxu0 0.0
    %4447 = vmatpush1.msra.mxu0 %v2925
    %4448 = vmatprep.subr.mxu0 0.0
    %4449 = vmatpush1.msra.mxu0 %v2924
    %4450 = vmatprep.subr.mxu0 0.0
    %4451 = vmatpush2.msra.mxu0 0.0
    %4452 = vmatprep.subr.mxu0 0.0
    %4453 = vmatpush2.msra.mxu0 0.0
    %4454 = vmatprep.subr.mxu0 0.0
    %4455 = vmatpush2.msra.mxu0 0.0
    %4456 = vmatprep.subr.mxu0 0.0
    %4457 = vmatpush2.msra.mxu0 0.0
    %4458 = vmatprep.subr.mxu0 0.0
    %4459 = vmatpush2.msra.mxu0 0.0
    %4460 = vmatprep.subr.mxu0 0.0
    %4461 = vmatpush2.msra.mxu0 0.0
    %4462 = vmatprep.subr.mxu0 0.0
    %4463 = vmatpush2.msra.mxu0 0.0
    %4464 = vmatprep.subr.mxu0 0.0
    %4465 = vmatpush2.msra.mxu0 0.0
    %4466 = vmatprep.subr.mxu0 0.0
    %4467 = vmatpush2.msra.mxu0 0.0
    %4468 = vmatprep.subr.mxu0 0.0
    %4469 = vmatpush2.msra.mxu0 0.0
    %4470 = vmatprep.subr.mxu0 0.0
    %4471 = vmatpush2.msra.mxu0 0.0
    %4472 = vmatprep.subr.mxu0 0.0
    %4473 = vmatpush2.msra.mxu0 0.0
    %4474 = vmatprep.subr.mxu0 0.0
    %4475 = vmatpush2.msra.mxu0 0.0
    %4476 = vmatprep.subr.mxu0 0.0
    %4477 = vmatpush2.msra.mxu0 0.0
    %4478 = vmatprep.subr.mxu0 0.0
    %4479 = vmatpush2.msra.mxu0 0.0
    %4480 = vmatprep.subr.mxu0 0.0
    %4481 = vmatpush2.msra.mxu0 0.0
    %4482 = vmatprep.mubr.f32.mxu0 0.0
    %4483 = vmatmul.mubr.f32.gmra.mxu0 %v4346
    %v4484 = vpop.f32.mrf.mxu0
    %v4485 = vadd.f32 0.0, %v4484
    %v4486 = vpop.f32.mrf.mxu0
    %4487 = vdwg.mxu0
    %4488 = vmatprep.subr.mxu0 0.0
    %4489 = vmatpush1.msra.mxu0 0.0
    %4490 = vmatprep.subr.mxu0 0.0
    %4491 = vmatpush1.msra.mxu0 0.0
    %4492 = vmatprep.subr.mxu0 0.0
    %4493 = vmatpush1.msra.mxu0 0.0
    %4494 = vmatprep.subr.mxu0 0.0
    %4495 = vmatpush1.msra.mxu0 0.0
    %4496 = vmatprep.subr.mxu0 0.0
    %4497 = vmatpush1.msra.mxu0 0.0
    %4498 = vmatprep.subr.mxu0 0.0
    %4499 = vmatpush1.msra.mxu0 0.0
    %4500 = vmatprep.subr.mxu0 0.0
    %4501 = vmatpush1.msra.mxu0 0.0
    %4502 = vmatprep.subr.mxu0 0.0
    %4503 = vmatpush1.msra.mxu0 0.0
    %4504 = vmatprep.subr.mxu0 0.0
    %4505 = vmatpush1.msra.mxu0 0.0
    %4506 = vmatprep.subr.mxu0 0.0
    %4507 = vmatpush1.msra.mxu0 0.0
    %4508 = vmatprep.subr.mxu0 0.0
    %4509 = vmatpush1.msra.mxu0 0.0
    %4510 = vmatprep.subr.mxu0 0.0
    %4511 = vmatpush1.msra.mxu0 0.0
    %4512 = vmatprep.subr.mxu0 0.0
    %4513 = vmatpush1.msra.mxu0 %v2931
    %4514 = vmatprep.subr.mxu0 0.0
    %4515 = vmatpush1.msra.mxu0 %v2930
    %4516 = vmatprep.subr.mxu0 0.0
    %4517 = vmatpush1.msra.mxu0 %v2929
    %4518 = vmatprep.subr.mxu0 0.0
    %4519 = vmatpush1.msra.mxu0 %v2928
    %4520 = vmatprep.subr.mxu0 0.0
    %4521 = vmatpush2.msra.mxu0 0.0
    %4522 = vmatprep.subr.mxu0 0.0
    %4523 = vmatpush2.msra.mxu0 0.0
    %4524 = vmatprep.subr.mxu0 0.0
    %4525 = vmatpush2.msra.mxu0 0.0
    %4526 = vmatprep.subr.mxu0 0.0
    %4527 = vmatpush2.msra.mxu0 0.0
    %4528 = vmatprep.subr.mxu0 0.0
    %4529 = vmatpush2.msra.mxu0 0.0
    %4530 = vmatprep.subr.mxu0 0.0
    %4531 = vmatpush2.msra.mxu0 0.0
    %4532 = vmatprep.subr.mxu0 0.0
    %4533 = vmatpush2.msra.mxu0 0.0
    %4534 = vmatprep.subr.mxu0 0.0
    %4535 = vmatpush2.msra.mxu0 0.0
    %4536 = vmatprep.subr.mxu0 0.0
    %4537 = vmatpush2.msra.mxu0 0.0
    %4538 = vmatprep.subr.mxu0 0.0
    %4539 = vmatpush2.msra.mxu0 0.0
    %4540 = vmatprep.subr.mxu0 0.0
    %4541 = vmatpush2.msra.mxu0 0.0
    %4542 = vmatprep.subr.mxu0 0.0
    %4543 = vmatpush2.msra.mxu0 0.0
    %4544 = vmatprep.subr.mxu0 0.0
    %4545 = vmatpush2.msra.mxu0 0.0
    %4546 = vmatprep.subr.mxu0 0.0
    %4547 = vmatpush2.msra.mxu0 0.0
    %4548 = vmatprep.subr.mxu0 0.0
    %4549 = vmatpush2.msra.mxu0 0.0
    %4550 = vmatprep.subr.mxu0 0.0
    %4551 = vmatpush2.msra.mxu0 0.0
    %4552 = vmatprep.mubr.f32.mxu0 0.0
    %4553 = vmatmul.mubr.f32.gmra.mxu0 %v4346
    %v4554 = vpop.f32.mrf.mxu0
    %v4555 = vadd.f32 %v3082, %v4554
    %v4556 = vpop.f32.mrf.mxu0
    %4557 = vdwg.mxu0
    %v4558 = vadd.f32 %v2680, %v4415
    %v4559 = vxor.u32 %v4558, 2147483648
    %v4560 = vmul.f32 %v4559, 1.442695
    %v4561 = vpow.pop %v4560
    %v4562 = vadd.f32 %v4561, 1.0
    %v4563 = vrcp.pop %v4562
    %v4564 = vmul.f32 1.0, %v4563
    %v4565 = vadd.f32 %v2796, %v4485
    %v4566 = vxor.u32 %v4565, 2147483648
    %v4567 = vmul.f32 %v4566, 1.442695
    %v4568 = vpow.pop %v4567
    %v4569 = vadd.f32 %v4568, 1.0
    %v4570 = vrcp.pop %v4569
    %v4571 = vmul.f32 1.0, %v4570
    %v4572 = vmul.f32 %v4564, %v4555
    %v4573 = vadd.f32 %v2912, %v4572
    %v4574 = vtanh.pop %v4573
    %v4575 = vsub.f32 1.0, %v4571
    %v4576 = vmul.f32 %v4575, %v4574
    %v4577 = vmul.f32 %v4571, %v4344
    %v4578 = vadd.f32 %v4576, %v4577
    %v4580 = vsel %vm689, %v4578, 0
    %4582 = vmatprep.subr.mxu0 0.0
    %4583 = vmatpush1.msra.mxu0 0.0
    %4584 = vmatprep.subr.mxu0 0.0
    %4585 = vmatpush1.msra.mxu0 0.0
    %4586 = vmatprep.subr.mxu0 0.0
    %4587 = vmatpush1.msra.mxu0 0.0
    %4588 = vmatprep.subr.mxu0 0.0
    %4589 = vmatpush1.msra.mxu0 0.0
    %4590 = vmatprep.subr.mxu0 0.0
    %4591 = vmatpush1.msra.mxu0 0.0
    %4592 = vmatprep.subr.mxu0 0.0
    %4593 = vmatpush1.msra.mxu0 0.0
    %4594 = vmatprep.subr.mxu0 0.0
    %4595 = vmatpush1.msra.mxu0 0.0
    %4596 = vmatprep.subr.mxu0 0.0
    %4597 = vmatpush1.msra.mxu0 0.0
    %4598 = vmatprep.subr.mxu0 0.0
    %4599 = vmatpush1.msra.mxu0 0.0
    %4600 = vmatprep.subr.mxu0 0.0
    %4601 = vmatpush1.msra.mxu0 0.0
    %4602 = vmatprep.subr.mxu0 0.0
    %4603 = vmatpush1.msra.mxu0 0.0
    %4604 = vmatprep.subr.mxu0 0.0
    %4605 = vmatpush1.msra.mxu0 0.0
    %4606 = vmatprep.subr.mxu0 0.0
    %4607 = vmatpush1.msra.mxu0 %v2923
    %4608 = vmatprep.subr.mxu0 0.0
    %4609 = vmatpush1.msra.mxu0 %v2922
    %4610 = vmatprep.subr.mxu0 0.0
    %4611 = vmatpush1.msra.mxu0 %v2921
    %4612 = vmatprep.subr.mxu0 0.0
    %4613 = vmatpush1.msra.mxu0 %v2920
    %4614 = vmatprep.subr.mxu0 0.0
    %4615 = vmatpush2.msra.mxu0 0.0
    %4616 = vmatprep.subr.mxu0 0.0
    %4617 = vmatpush2.msra.mxu0 0.0
    %4618 = vmatprep.subr.mxu0 0.0
    %4619 = vmatpush2.msra.mxu0 0.0
    %4620 = vmatprep.subr.mxu0 0.0
    %4621 = vmatpush2.msra.mxu0 0.0
    %4622 = vmatprep.subr.mxu0 0.0
    %4623 = vmatpush2.msra.mxu0 0.0
    %4624 = vmatprep.subr.mxu0 0.0
    %4625 = vmatpush2.msra.mxu0 0.0
    %4626 = vmatprep.subr.mxu0 0.0
    %4627 = vmatpush2.msra.mxu0 0.0
    %4628 = vmatprep.subr.mxu0 0.0
    %4629 = vmatpush2.msra.mxu0 0.0
    %4630 = vmatprep.subr.mxu0 0.0
    %4631 = vmatpush2.msra.mxu0 0.0
    %4632 = vmatprep.subr.mxu0 0.0
    %4633 = vmatpush2.msra.mxu0 0.0
    %4634 = vmatprep.subr.mxu0 0.0
    %4635 = vmatpush2.msra.mxu0 0.0
    %4636 = vmatprep.subr.mxu0 0.0
    %4637 = vmatpush2.msra.mxu0 0.0
    %4638 = vmatprep.subr.mxu0 0.0
    %4639 = vmatpush2.msra.mxu0 0.0
    %4640 = vmatprep.subr.mxu0 0.0
    %4641 = vmatpush2.msra.mxu0 0.0
    %4642 = vmatprep.subr.mxu0 0.0
    %4643 = vmatpush2.msra.mxu0 0.0
    %4644 = vmatprep.subr.mxu0 0.0
    %4645 = vmatpush2.msra.mxu0 0.0
    %4646 = vmatprep.mubr.f32.mxu0 0.0
    %4647 = vmatmul.mubr.f32.gmra.mxu0 %v4580
    %v4648 = vpop.f32.mrf.mxu0
    %v4649 = vadd.f32 0.0, %v4648
    %v4650 = vpop.f32.mrf.mxu0
    %4651 = vdwg.mxu0
    %4652 = vmatprep.subr.mxu0 0.0
    %4653 = vmatpush1.msra.mxu0 0.0
    %4654 = vmatprep.subr.mxu0 0.0
    %4655 = vmatpush1.msra.mxu0 0.0
    %4656 = vmatprep.subr.mxu0 0.0
    %4657 = vmatpush1.msra.mxu0 0.0
    %4658 = vmatprep.subr.mxu0 0.0
    %4659 = vmatpush1.msra.mxu0 0.0
    %4660 = vmatprep.subr.mxu0 0.0
    %4661 = vmatpush1.msra.mxu0 0.0
    %4662 = vmatprep.subr.mxu0 0.0
    %4663 = vmatpush1.msra.mxu0 0.0
    %4664 = vmatprep.subr.mxu0 0.0
    %4665 = vmatpush1.msra.mxu0 0.0
    %4666 = vmatprep.subr.mxu0 0.0
    %4667 = vmatpush1.msra.mxu0 0.0
    %4668 = vmatprep.subr.mxu0 0.0
    %4669 = vmatpush1.msra.mxu0 0.0
    %4670 = vmatprep.subr.mxu0 0.0
    %4671 = vmatpush1.msra.mxu0 0.0
    %4672 = vmatprep.subr.mxu0 0.0
    %4673 = vmatpush1.msra.mxu0 0.0
    %4674 = vmatprep.subr.mxu0 0.0
    %4675 = vmatpush1.msra.mxu0 0.0
    %4676 = vmatprep.subr.mxu0 0.0
    %4677 = vmatpush1.msra.mxu0 %v2927
    %4678 = vmatprep.subr.mxu0 0.0
    %4679 = vmatpush1.msra.mxu0 %v2926
    %4680 = vmatprep.subr.mxu0 0.0
    %4681 = vmatpush1.msra.mxu0 %v2925
    %4682 = vmatprep.subr.mxu0 0.0
    %4683 = vmatpush1.msra.mxu0 %v2924
    %4684 = vmatprep.subr.mxu0 0.0
    %4685 = vmatpush2.msra.mxu0 0.0
    %4686 = vmatprep.subr.mxu0 0.0
    %4687 = vmatpush2.msra.mxu0 0.0
    %4688 = vmatprep.subr.mxu0 0.0
    %4689 = vmatpush2.msra.mxu0 0.0
    %4690 = vmatprep.subr.mxu0 0.0
    %4691 = vmatpush2.msra.mxu0 0.0
    %4692 = vmatprep.subr.mxu0 0.0
    %4693 = vmatpush2.msra.mxu0 0.0
    %4694 = vmatprep.subr.mxu0 0.0
    %4695 = vmatpush2.msra.mxu0 0.0
    %4696 = vmatprep.subr.mxu0 0.0
    %4697 = vmatpush2.msra.mxu0 0.0
    %4698 = vmatprep.subr.mxu0 0.0
    %4699 = vmatpush2.msra.mxu0 0.0
    %4700 = vmatprep.subr.mxu0 0.0
    %4701 = vmatpush2.msra.mxu0 0.0
    %4702 = vmatprep.subr.mxu0 0.0
    %4703 = vmatpush2.msra.mxu0 0.0
    %4704 = vmatprep.subr.mxu0 0.0
    %4705 = vmatpush2.msra.mxu0 0.0
    %4706 = vmatprep.subr.mxu0 0.0
    %4707 = vmatpush2.msra.mxu0 0.0
    %4708 = vmatprep.subr.mxu0 0.0
    %4709 = vmatpush2.msra.mxu0 0.0
    %4710 = vmatprep.subr.mxu0 0.0
    %4711 = vmatpush2.msra.mxu0 0.0
    %4712 = vmatprep.subr.mxu0 0.0
    %4713 = vmatpush2.msra.mxu0 0.0
    %4714 = vmatprep.subr.mxu0 0.0
    %4715 = vmatpush2.msra.mxu0 0.0
    %4716 = vmatprep.mubr.f32.mxu0 0.0
    %4717 = vmatmul.mubr.f32.gmra.mxu0 %v4580
    %v4718 = vpop.f32.mrf.mxu0
    %v4719 = vadd.f32 0.0, %v4718
    %v4720 = vpop.f32.mrf.mxu0
    %4721 = vdwg.mxu0
    %4722 = vmatprep.subr.mxu0 0.0
    %4723 = vmatpush1.msra.mxu0 0.0
    %4724 = vmatprep.subr.mxu0 0.0
    %4725 = vmatpush1.msra.mxu0 0.0
    %4726 = vmatprep.subr.mxu0 0.0
    %4727 = vmatpush1.msra.mxu0 0.0
    %4728 = vmatprep.subr.mxu0 0.0
    %4729 = vmatpush1.msra.mxu0 0.0
    %4730 = vmatprep.subr.mxu0 0.0
    %4731 = vmatpush1.msra.mxu0 0.0
    %4732 = vmatprep.subr.mxu0 0.0
    %4733 = vmatpush1.msra.mxu0 0.0
    %4734 = vmatprep.subr.mxu0 0.0
    %4735 = vmatpush1.msra.mxu0 0.0
    %4736 = vmatprep.subr.mxu0 0.0
    %4737 = vmatpush1.msra.mxu0 0.0
    %4738 = vmatprep.subr.mxu0 0.0
    %4739 = vmatpush1.msra.mxu0 0.0
    %4740 = vmatprep.subr.mxu0 0.0
    %4741 = vmatpush1.msra.mxu0 0.0
    %4742 = vmatprep.subr.mxu0 0.0
    %4743 = vmatpush1.msra.mxu0 0.0
    %4744 = vmatprep.subr.mxu0 0.0
    %4745 = vmatpush1.msra.mxu0 0.0
    %4746 = vmatprep.subr.mxu0 0.0
    %4747 = vmatpush1.msra.mxu0 %v2931
    %4748 = vmatprep.subr.mxu0 0.0
    %4749 = vmatpush1.msra.mxu0 %v2930
    %4750 = vmatprep.subr.mxu0 0.0
    %4751 = vmatpush1.msra.mxu0 %v2929
    %4752 = vmatprep.subr.mxu0 0.0
    %4753 = vmatpush1.msra.mxu0 %v2928
    %4754 = vmatprep.subr.mxu0 0.0
    %4755 = vmatpush2.msra.mxu0 0.0
    %4756 = vmatprep.subr.mxu0 0.0
    %4757 = vmatpush2.msra.mxu0 0.0
    %4758 = vmatprep.subr.mxu0 0.0
    %4759 = vmatpush2.msra.mxu0 0.0
    %4760 = vmatprep.subr.mxu0 0.0
    %4761 = vmatpush2.msra.mxu0 0.0
    %4762 = vmatprep.subr.mxu0 0.0
    %4763 = vmatpush2.msra.mxu0 0.0
    %4764 = vmatprep.subr.mxu0 0.0
    %4765 = vmatpush2.msra.mxu0 0.0
    %4766 = vmatprep.subr.mxu0 0.0
    %4767 = vmatpush2.msra.mxu0 0.0
    %4768 = vmatprep.subr.mxu0 0.0
    %4769 = vmatpush2.msra.mxu0 0.0
    %4770 = vmatprep.subr.mxu0 0.0
    %4771 = vmatpush2.msra.mxu0 0.0
    %4772 = vmatprep.subr.mxu0 0.0
    %4773 = vmatpush2.msra.mxu0 0.0
    %4774 = vmatprep.subr.mxu0 0.0
    %4775 = vmatpush2.msra.mxu0 0.0
    %4776 = vmatprep.subr.mxu0 0.0
    %4777 = vmatpush2.msra.mxu0 0.0
    %4778 = vmatprep.subr.mxu0 0.0
    %4779 = vmatpush2.msra.mxu0 0.0
    %4780 = vmatprep.subr.mxu0 0.0
    %4781 = vmatpush2.msra.mxu0 0.0
    %4782 = vmatprep.subr.mxu0 0.0
    %4783 = vmatpush2.msra.mxu0 0.0
    %4784 = vmatprep.subr.mxu0 0.0
    %4785 = vmatpush2.msra.mxu0 0.0
    %4786 = vmatprep.mubr.f32.mxu0 0.0
    %4787 = vmatmul.mubr.f32.gmra.mxu0 %v4580
    %v4788 = vpop.f32.mrf.mxu0
    %v4789 = vadd.f32 %v3082, %v4788
    %v4790 = vpop.f32.mrf.mxu0
    %4791 = vdwg.mxu0
    %v4792 = vadd.f32 %v2685, %v4649
    %v4793 = vxor.u32 %v4792, 2147483648
    %v4794 = vmul.f32 %v4793, 1.442695
    %v4795 = vpow.pop %v4794
    %v4796 = vadd.f32 %v4795, 1.0
    %v4797 = vrcp.pop %v4796
    %v4798 = vmul.f32 1.0, %v4797
    %v4799 = vadd.f32 %v2801, %v4719
    %v4800 = vxor.u32 %v4799, 2147483648
    %v4801 = vmul.f32 %v4800, 1.442695
    %v4802 = vpow.pop %v4801
    %v4803 = vadd.f32 %v4802, 1.0
    %v4804 = vrcp.pop %v4803
    %v4805 = vmul.f32 1.0, %v4804
    %v4806 = vmul.f32 %v4798, %v4789
    %v4807 = vadd.f32 %v2917, %v4806
    %v4808 = vtanh.pop %v4807
    %v4809 = vsub.f32 1.0, %v4805
    %v4810 = vmul.f32 %v4809, %v4808
    %v4811 = vmul.f32 %v4805, %v4578
    %v4812 = vadd.f32 %v4810, %v4811
    %s4813 = scalar_lea.vmem [#allocation29], 8
    %4814 = vst.msk [vmem:[%s4813] sm:$0xff] %vm689, %v4812
    %v4815 = vmax.f32 %v4812, 0.0
    %v4816 = vld [vmem:[%s22] sm:$0xff]
    %v4817 = vld [vmem:[%s22 + $0x8] sm:$0xff]
    %v4818 = vld [vmem:[%s22 + $0x10] sm:$0xff]
    %v4819 = vld [vmem:[%s22 + $0x18] sm:$0xff]
    %v4820 = vld [vmem:[%s23] sm:$0x1]
    %v4822 = vlaneseq
    %v4823 = vshrl.u32 %v4822, 7
    %v4824 = vsub.s32 0, %v4823
    %v4825 = vrot.slane %v4820, %v4824
    %v4828 = vsel %vm689, %v4815, 0
    %4830 = vmatprep.subr.mxu0 0.0
    %4831 = vmatpush1.msra.mxu0 0.0
    %4832 = vmatprep.subr.mxu0 0.0
    %4833 = vmatpush1.msra.mxu0 0.0
    %4834 = vmatprep.subr.mxu0 0.0
    %4835 = vmatpush1.msra.mxu0 0.0
    %4836 = vmatprep.subr.mxu0 0.0
    %4837 = vmatpush1.msra.mxu0 0.0
    %4838 = vmatprep.subr.mxu0 0.0
    %4839 = vmatpush1.msra.mxu0 0.0
    %4840 = vmatprep.subr.mxu0 0.0
    %4841 = vmatpush1.msra.mxu0 0.0
    %4842 = vmatprep.subr.mxu0 0.0
    %4843 = vmatpush1.msra.mxu0 0.0
    %4844 = vmatprep.subr.mxu0 0.0
    %4845 = vmatpush1.msra.mxu0 0.0
    %4846 = vmatprep.subr.mxu0 0.0
    %4847 = vmatpush1.msra.mxu0 0.0
    %4848 = vmatprep.subr.mxu0 0.0
    %4849 = vmatpush1.msra.mxu0 0.0
    %4850 = vmatprep.subr.mxu0 0.0
    %4851 = vmatpush1.msra.mxu0 0.0
    %4852 = vmatprep.subr.mxu0 0.0
    %4853 = vmatpush1.msra.mxu0 0.0
    %4854 = vmatprep.subr.mxu0 0.0
    %4855 = vmatpush1.msra.mxu0 %v4819
    %4856 = vmatprep.subr.mxu0 0.0
    %4857 = vmatpush1.msra.mxu0 %v4818
    %4858 = vmatprep.subr.mxu0 0.0
    %4859 = vmatpush1.msra.mxu0 %v4817
    %4860 = vmatprep.subr.mxu0 0.0
    %4861 = vmatpush1.msra.mxu0 %v4816
    %4862 = vmatprep.subr.mxu0 0.0
    %4863 = vmatpush2.msra.mxu0 0.0
    %4864 = vmatprep.subr.mxu0 0.0
    %4865 = vmatpush2.msra.mxu0 0.0
    %4866 = vmatprep.subr.mxu0 0.0
    %4867 = vmatpush2.msra.mxu0 0.0
    %4868 = vmatprep.subr.mxu0 0.0
    %4869 = vmatpush2.msra.mxu0 0.0
    %4870 = vmatprep.subr.mxu0 0.0
    %4871 = vmatpush2.msra.mxu0 0.0
    %4872 = vmatprep.subr.mxu0 0.0
    %4873 = vmatpush2.msra.mxu0 0.0
    %4874 = vmatprep.subr.mxu0 0.0
    %4875 = vmatpush2.msra.mxu0 0.0
    %4876 = vmatprep.subr.mxu0 0.0
    %4877 = vmatpush2.msra.mxu0 0.0
    %4878 = vmatprep.subr.mxu0 0.0
    %4879 = vmatpush2.msra.mxu0 0.0
    %4880 = vmatprep.subr.mxu0 0.0
    %4881 = vmatpush2.msra.mxu0 0.0
    %4882 = vmatprep.subr.mxu0 0.0
    %4883 = vmatpush2.msra.mxu0 0.0
    %4884 = vmatprep.subr.mxu0 0.0
    %4885 = vmatpush2.msra.mxu0 0.0
    %4886 = vmatprep.subr.mxu0 0.0
    %4887 = vmatpush2.msra.mxu0 0.0
    %4888 = vmatprep.subr.mxu0 0.0
    %4889 = vmatpush2.msra.mxu0 0.0
    %4890 = vmatprep.subr.mxu0 0.0
    %4891 = vmatpush2.msra.mxu0 0.0
    %4892 = vmatprep.subr.mxu0 0.0
    %4893 = vmatpush2.msra.mxu0 0.0
    %4894 = vmatprep.mubr.f32.mxu0 0.0
    %4895 = vmatmul.mubr.f32.gmra.mxu0 %v4828
    %v4896 = vpop.f32.mrf.mxu0
    %v4897 = vadd.f32 %v4825, %v4896
    %v4898 = vpop.f32.mrf.mxu0
    %4899 = vdwg.mxu0
    %vm4900 = vcmask 15360
    %v4901 = vsel %vm4900, %v4897, -inf
    %4902 = vmax.xlane.f32.xlu0 %v4901
    %v4903 = vpop.xlane.xlu0 %4902
    %v4904 = vsub.f32 %v4897, %v4903
    %v4905 = vmul.f32 %v4904, 1.442695
    %v4906 = vpow.pop %v4905
    %v4907 = vsel %vm4900, %v4906, 0.0
    %4908 = vadd.xlane.f32.xlu0 %v4907
    %v4909 = vpop.xlane.xlu0 %4908
    %v4910 = vlog2.pop %v4909
    %v4911 = vmul.f32 %v4910, 0.6931472
    %v4912 = vsub.f32 %v4904, %v4911
    %4913 = vst.msk [vmem:[%s24] sm:$0xff] %vm4900, %v4912
    // Predicated region
    $region166: #{tpu_custom_call.1} parent=1 // pred_check
      _
    $region167: #{tpu_custom_call.1} parent=1 // pred_check_branch
      %4915 = sbr.rel (0) target = $region169
    $region168: #{tpu_custom_call.1} parent=1 // pred_region
      _
    $region169: #{tpu_custom_call.1} parent=1 // pred_fallthru
      _
    // Predicated region
    $region170: #{tpu_custom_call.1} parent=1 // pred_check
      _
    $region171: #{tpu_custom_call.1} parent=1 // pred_check_branch
      %4917 = sbr.rel (0) target = $region173
    $region172: #{tpu_custom_call.1} parent=1 // pred_region
      %s4919 = ssub.s32 256, 256
      %4920 = vsyncadd [#allocation4], %s4919
      %s4921 = sshll.u32 [#allocation29], 4
      %s4922 = int_to_ptr.vmem [resolvable:$true] %s4921
      %4927 = dma.vmem_to_hbm [thread:$0]  %s4922, 256, %s25, [#allocation4], 128, 128, 8
    $region173: #{tpu_custom_call.1} parent=1 // pred_fallthru
      _
    // Predicated region
    $region174: #{tpu_custom_call.1} parent=1 // pred_check
      _
    $region175: #{tpu_custom_call.1} parent=1 // pred_check_branch
      %4929 = sbr.rel (0) target = $region177
    $region176: #{tpu_custom_call.1} parent=1 // pred_region
      _
    $region177: #{tpu_custom_call.1} parent=1 // pred_fallthru
      _
    // Predicated region
    $region178: #{tpu_custom_call.1} parent=1 // pred_check
      _
    $region179: #{tpu_custom_call.1} parent=1 // pred_check_branch
      %4931 = sbr.rel (0) target = $region181
    $region180: #{tpu_custom_call.1} parent=1 // pred_region
      %4932 = dma.done [#allocation4], 256
    $region181: #{tpu_custom_call.1} parent=1 // pred_fallthru
      _
    %4933 = vsyncpa [#allocation3], 1
    %4934 = vsyncpa [#allocation6], 1
    %4935 = vsyncpa [#allocation9], 1
    %4936 = vsyncpa [#allocation12], 1
    %4937 = vsyncpa [#allocation15], 1
    %4938 = vsyncpa [#allocation18], 1
    %4939 = vsyncpa [#allocation21], 1
    %4940 = vsyncpa [#allocation24], 1
    %4941 = vsyncpa [#allocation27], 1
    %4942 = vsyncpa [#allocation4], 1

</llo_original>
